<compile_context>
chip_gen: v5e
topology: v5e:2x2
jax: 0.10.0
libtpu: 0.0.40
codegen_flags: <defaults>
</compile_context>

<pallas_src>
import functools

import jax
import jax.numpy as jnp
from jax.experimental import pallas as pl
from jax.experimental.pallas import tpu as pltpu


def _lstm_kernel(x_ref, h_in_ref, c_in_ref,
                 wx0_ref, b0_ref,
                 wh0_hbm, wx1_hbm, wh1_hbm,
                 b1_ref, wfc_ref, bfc_ref,
                 sig_ref, h_out_ref, c_out_ref,
                 xg0_ref, wh0_vmem, wx1_vmem, wh1_vmem, dma_sem,
                 *, seq_len, batch_pad, hidden_dim):
    T, Bp, H = seq_len, batch_pad, hidden_dim
    bf16 = jnp.bfloat16

    # ---- Start the one-shot recurrent-weight DMAs (HBM -> VMEM) ------------
    # They are hidden under the hoisted projection below.
    wh0_cp = pltpu.make_async_copy(wh0_hbm, wh0_vmem, dma_sem.at[0])
    wx1_cp = pltpu.make_async_copy(wx1_hbm, wx1_vmem, dma_sem.at[1])
    wh1_cp = pltpu.make_async_copy(wh1_hbm, wh1_vmem, dma_sem.at[2])
    wh0_cp.start()
    wx1_cp.start()
    wh1_cp.start()

    # ---- Hoisted layer-0 input projection -----------------------------------
    # One (T*Bp, E) @ (E, 4H) bf16 MXU matmul (f32 accumulation), bias folded
    # in once.  Written to VMEM scratch so it is never live across the loop.
    xg0_ref[...] = (jnp.dot(x_ref[...], wx0_ref[...],
                            preferred_element_type=jnp.float32)
                    + b0_ref[...])                              # (T*Bp, 4H) f32

    # Loop-invariant broadcast hoisted (JAX does not CSE broadcast_in_dim).
    b1 = jnp.broadcast_to(b1_ref[...], (Bp, 4 * H))

    # Recurrent weights must be resident before the serial chain starts.
    wh0_cp.wait()
    wx1_cp.wait()
    wh1_cp.wait()
    wh0 = wh0_vmem[...]                                         # (H, 4H) bf16
    wx1 = wx1_vmem[...]                                         # (H, 4H) bf16
    wh1 = wh1_vmem[...]                                         # (H, 4H) bf16

    # State carried as plain values (f32); bf16 shadow copies feed the MXU.
    h0 = h_in_ref[0]
    c0 = c_in_ref[0]
    h1 = h_in_ref[1]
    c1 = c_in_ref[1]
    h0b = h0.astype(bf16)
    h1b = h1.astype(bf16)

    def gates_to_hc(gates, c):
        # PyTorch gate order i, f, g, o; H is a multiple of 128 so the slices
        # are lane-aligned (no relayout on the hot path).  All f32.
        i_g = jax.nn.sigmoid(gates[:, 0:H])
        f_g = jax.nn.sigmoid(gates[:, H:2 * H])
        g_g = jnp.tanh(gates[:, 2 * H:3 * H])
        o_g = jax.nn.sigmoid(gates[:, 3 * H:4 * H])
        c_new = f_g * c + i_g * g_g
        h_new = o_g * jnp.tanh(c_new)
        return h_new, c_new

    # Fully unrolled recurrence (T static & small); all slices are static.
    for t in range(T):
        # Layer 0: only the recurrent h @ Wh0 dot is on the serial path; the
        # pre-projected input gates come from VMEM scratch (ref-backed slice,
        # ~2 vregs live per step).
        g0 = xg0_ref[t * Bp:(t + 1) * Bp, :] + jnp.dot(
            h0b, wh0, preferred_element_type=jnp.float32)
        h0, c0 = gates_to_hc(g0, c0)
        h0b = h0.astype(bf16)

        # TODO(synk): nn.LSTM inter-layer dropout and nn.Dropout(0.3) are
        # training-only; eval-mode forward is identity, so they are omitted.

        # Layer 1: two bf16 dots accumulate into one f32 result (no concat).
        g1 = (jnp.dot(h0b, wx1, preferred_element_type=jnp.float32)
              + jnp.dot(h1b, wh1, preferred_element_type=jnp.float32)
              + b1)
        h1, c1 = gates_to_hc(g1, c1)
        h1b = h1.astype(bf16)

    # fc + sigmoid on the last timestep (== torch sig_out[:, -1]).  wfc/bfc
    # are padded to 128 output lanes so the store is a full unmasked vst;
    # the wrapper reads lane 0.  (Tiny one-shot matmul, kept in f32.)
    logit = (jnp.dot(h1, wfc_ref[...], preferred_element_type=jnp.float32)
             + bfc_ref[...])
    sig_ref[...] = jax.nn.sigmoid(logit)
    h_out_ref[0] = h0
    h_out_ref[1] = h1
    c_out_ref[0] = c0
    c_out_ref[1] = c1


def sentiment_lstm_forward(tokens, hidden, params):
    """tokens: (B, T) int32; hidden: (h, c) each (n_layers=2, B, H) float32."""
    h_in, c_in = hidden
    B, T = tokens.shape
    emb_table = params["embedding"]
    E = emb_table.shape[1]
    H = params["w_hh_l0"].shape[1]
    O = params["w_fc"].shape[0]

    # Pad batch to a multiple of 8 sublanes (free; removes masked ld/st) and
    # the contraction dim E to a multiple of 128 (dense MXU tiles; prod 400->512).
    Bp = ((B + 7) // 8) * 8
    pad_b = Bp - B
    Ep = ((E + 127) // 128) * 128
    Op = ((O + 127) // 128) * 128   # lane-dense fc output

    # Embedding gather is wrapper glue in plain JAX.
    embeds = emb_table[tokens]                       # (B, T, E) f32
    embeds_tm = jnp.transpose(embeds, (1, 0, 2))     # (T, B, E) time-major
    if pad_b:
        embeds_tm = jnp.pad(embeds_tm, ((0, 0), (0, pad_b), (0, 0)))
        h_in = jnp.pad(h_in, ((0, 0), (0, pad_b), (0, 0)))
        c_in = jnp.pad(c_in, ((0, 0), (0, pad_b), (0, 0)))
    if Ep != E:
        embeds_tm = jnp.pad(embeds_tm, ((0, 0), (0, 0), (0, Ep - E)))
    x2d = embeds_tm.reshape(T * Bp, Ep).astype(jnp.bfloat16)

    # Pre-transpose weights so the kernel does x @ W; bf16 matmul operands,
    # f32 biases (folded ih+hh).
    wx0 = params["w_ih_l0"].T                        # (E, 4H)
    if Ep != E:
        wx0 = jnp.pad(wx0, ((0, Ep - E), (0, 0)))
    wx0 = wx0.astype(jnp.bfloat16)
    wh0 = params["w_hh_l0"].T.astype(jnp.bfloat16)   # (H, 4H)
    wx1 = params["w_ih_l1"].T.astype(jnp.bfloat16)   # (H, 4H)
    wh1 = params["w_hh_l1"].T.astype(jnp.bfloat16)   # (H, 4H)
    b0 = (params["b_ih_l0"] + params["b_hh_l0"]).reshape(1, 4 * H)
    b1 = (params["b_ih_l1"] + params["b_hh_l1"]).reshape(1, 4 * H)
    wfc = jnp.pad(params["w_fc"].T, ((0, 0), (0, Op - O)))       # (H, Op) f32
    bfc = jnp.pad(params["b_fc"].reshape(1, O), ((0, 0), (0, Op - O)))

    kernel = functools.partial(_lstm_kernel, seq_len=T, batch_pad=Bp,
                               hidden_dim=H)

    sig, h_out, c_out = pl.pallas_call(
        kernel,
        out_shape=(
            jax.ShapeDtypeStruct((Bp, Op), jnp.float32),
            jax.ShapeDtypeStruct((2, Bp, H), jnp.float32),
            jax.ShapeDtypeStruct((2, Bp, H), jnp.float32),
        ),
        grid_spec=pltpu.PrefetchScalarGridSpec(
            num_scalar_prefetch=0,
            grid=(1,),  # single invocation: whole recurrence lives in VMEM
            in_specs=[
                pl.BlockSpec((T * Bp, Ep), lambda i: (0, 0)),     # x2d (bf16)
                pl.BlockSpec((2, Bp, H), lambda i: (0, 0, 0)),    # h_in
                pl.BlockSpec((2, Bp, H), lambda i: (0, 0, 0)),    # c_in
                pl.BlockSpec((Ep, 4 * H), lambda i: (0, 0)),      # wx0 (bf16)
                pl.BlockSpec((1, 4 * H), lambda i: (0, 0)),       # b0
                pl.BlockSpec(memory_space=pl.ANY),                # wh0 (HBM, manual DMA)
                pl.BlockSpec(memory_space=pl.ANY),                # wx1 (HBM, manual DMA)
                pl.BlockSpec(memory_space=pl.ANY),                # wh1 (HBM, manual DMA)
                pl.BlockSpec((1, 4 * H), lambda i: (0, 0)),       # b1
                pl.BlockSpec((H, Op), lambda i: (0, 0)),          # wfc (lane-dense)
                pl.BlockSpec((1, Op), lambda i: (0, 0)),          # bfc
            ],
            out_specs=[
                pl.BlockSpec((Bp, Op), lambda i: (0, 0)),
                pl.BlockSpec((2, Bp, H), lambda i: (0, 0, 0)),
                pl.BlockSpec((2, Bp, H), lambda i: (0, 0, 0)),
            ],
            scratch_shapes=[
                pltpu.VMEM((T * Bp, 4 * H), jnp.float32),  # xg0 (pre-projected gates)
                pltpu.VMEM((H, 4 * H), jnp.bfloat16),      # wh0 resident copy
                pltpu.VMEM((H, 4 * H), jnp.bfloat16),      # wx1 resident copy
                pltpu.VMEM((H, 4 * H), jnp.bfloat16),      # wh1 resident copy
                pltpu.SemaphoreType.DMA((3,)),
            ]),
        compiler_params=pltpu.CompilerParams(
            dimension_semantics=("arbitrary",)),
    )(x2d, h_in, c_in, wx0, b0, wh0, wx1, wh1, b1, wfc, bfc)

    sig_out = sig[:B, 0]                             # (B,) == torch sig_out[:, -1]
    return sig_out, (h_out[:, :B, :], c_out[:, :B, :])


def reference_forward(tokens, hidden, params):
    """Pure-JAX f32 reference of the PyTorch forward (eval mode)."""
    emb = params["embedding"][tokens]                # (B, T, E)
    h = [hidden[0][l] for l in range(2)]
    c = [hidden[1][l] for l in range(2)]
    for t in range(tokens.shape[1]):
        x = emb[:, t, :]
        for l in range(2):
            wih = params[f"w_ih_l{l}"]
            whh = params[f"w_hh_l{l}"]
            b = params[f"b_ih_l{l}"] + params[f"b_hh_l{l}"]
            gates = x @ wih.T + h[l] @ whh.T + b
            i_, f_, g_, o_ = jnp.split(gates, 4, axis=-1)
            c[l] = jax.nn.sigmoid(f_) * c[l] + jax.nn.sigmoid(i_) * jnp.tanh(g_)
            h[l] = jax.nn.sigmoid(o_) * jnp.tanh(c[l])
            x = h[l]
    sig = jax.nn.sigmoid(h[1] @ params["w_fc"].T + params["b_fc"])
    return sig[:, 0], (jnp.stack(h), jnp.stack(c))


def init_params(key, vocab_size, embedding_dim, hidden_dim, output_size):
    keys = jax.random.split(key, 12)
    s = 0.1
    H, E = hidden_dim, embedding_dim
    return {
        "embedding": s * jax.random.normal(keys[0], (vocab_size, E), jnp.float32),
        "w_ih_l0": s * jax.random.normal(keys[1], (4 * H, E), jnp.float32),
        "w_hh_l0": s * jax.random.normal(keys[2], (4 * H, H), jnp.float32),
        "b_ih_l0": s * jax.random.normal(keys[3], (4 * H,), jnp.float32),
        "b_hh_l0": s * jax.random.normal(keys[4], (4 * H,), jnp.float32),
        "w_ih_l1": s * jax.random.normal(keys[5], (4 * H, H), jnp.float32),
        "w_hh_l1": s * jax.random.normal(keys[6], (4 * H, H), jnp.float32),
        "b_ih_l1": s * jax.random.normal(keys[7], (4 * H,), jnp.float32),
        "b_hh_l1": s * jax.random.normal(keys[8], (4 * H,), jnp.float32),
        "w_fc": s * jax.random.normal(keys[9], (output_size, H), jnp.float32),
        "b_fc": s * jax.random.normal(keys[10], (output_size,), jnp.float32),
    }


if __name__ == "__main__":
    # Small shapes consistent with the module's forward (E/H multiples of 128
    # so gate slices are lane-aligned; production is E=400 (padded to 512), H=256).
    batch, seq = 2, 8
    vocab_size, embedding_dim, hidden_dim, n_layers, output_size = 64, 128, 128, 2, 1

    root = jax.random.PRNGKey(0)
    k_params, k_tokens = jax.random.split(root)
    params = init_params(k_params, vocab_size, embedding_dim, hidden_dim, output_size)

    tokens = jax.random.randint(k_tokens, (batch, seq), 0, vocab_size, dtype=jnp.int32)
    # init_hidden: zeros of shape (n_layers, batch, hidden_dim)
    hidden = (jnp.zeros((n_layers, batch, hidden_dim), jnp.float32),
              jnp.zeros((n_layers, batch, hidden_dim), jnp.float32))

    sig_out, (h_n, c_n) = sentiment_lstm_forward(tokens, hidden, params)
    jax.block_until_ready((sig_out, h_n, c_n))

    ref_sig, (ref_h, ref_c) = reference_forward(tokens, hidden, params)
    # Tolerance loosened vs the f32 reference: matmul operands are bf16 in the
    # kernel (f32 accumulation / f32 cell state), so per-gate error ~1e-3.
    assert jnp.allclose(sig_out, ref_sig, atol=2e-2, rtol=2e-2), (sig_out, ref_sig)
    assert jnp.allclose(h_n, ref_h, atol=2e-2, rtol=2e-2)
    assert jnp.allclose(c_n, ref_c, atol=2e-2, rtol=2e-2)

    print("KERNEL_OK")
</pallas_src>

<mosaic_0001>
module attributes {stable_mosaic.version = 11 : i64} {
  func.func @_lstm_kernel(%arg0: i32, %arg1: memref<64x128xbf16, #tpu.memory_space<vmem>>, %arg2: memref<2x8x128xf32, #tpu.memory_space<vmem>>, %arg3: memref<2x8x128xf32, #tpu.memory_space<vmem>>, %arg4: memref<128x512xbf16, #tpu.memory_space<vmem>>, %arg5: memref<1x512xf32, #tpu.memory_space<vmem>>, %arg6: memref<128x512xbf16, #tpu.memory_space<any>>, %arg7: memref<128x512xbf16, #tpu.memory_space<any>>, %arg8: memref<128x512xbf16, #tpu.memory_space<any>>, %arg9: memref<1x512xf32, #tpu.memory_space<vmem>>, %arg10: memref<128x128xf32, #tpu.memory_space<vmem>>, %arg11: memref<1x128xf32, #tpu.memory_space<vmem>>, %arg12: memref<8x128xf32, #tpu.memory_space<vmem>>, %arg13: memref<2x8x128xf32, #tpu.memory_space<vmem>>, %arg14: memref<2x8x128xf32, #tpu.memory_space<vmem>>, %arg15: memref<64x512xf32, #tpu.memory_space<vmem>>, %arg16: memref<128x512xbf16, #tpu.memory_space<vmem>>, %arg17: memref<128x512xbf16, #tpu.memory_space<vmem>>, %arg18: memref<128x512xbf16, #tpu.memory_space<vmem>>, %arg19: memref<3x!tpu.dma_semaphore, #tpu.memory_space<semaphore_mem>>) attributes {dimension_semantics = [#tpu.dimension_semantics<arbitrary>], iteration_bounds = array<i64: 1>, scalar_prefetch = 0 : i64, scratch_operands = 5 : i64, tpu.core_type = #tpu.core_type<tc>, window_params = [{pipeline_mode = #tpu.pipeline_mode<synchronous>, transform_indices = @transform_0, window_bounds = array<i64: 64, 128>}, {pipeline_mode = #tpu.pipeline_mode<synchronous>, transform_indices = @transform_1, window_bounds = array<i64: 2, 8, 128>}, {pipeline_mode = #tpu.pipeline_mode<synchronous>, transform_indices = @transform_2, window_bounds = array<i64: 2, 8, 128>}, {pipeline_mode = #tpu.pipeline_mode<synchronous>, transform_indices = @transform_3, window_bounds = array<i64: 128, 512>}, {pipeline_mode = #tpu.pipeline_mode<synchronous>, transform_indices = @transform_4, window_bounds = array<i64: 1, 512>}, {}, {}, {}, {pipeline_mode = #tpu.pipeline_mode<synchronous>, transform_indices = @transform_8, window_bounds = array<i64: 1, 512>}, {pipeline_mode = #tpu.pipeline_mode<synchronous>, transform_indices = @transform_9, window_bounds = array<i64: 128, 128>}, {pipeline_mode = #tpu.pipeline_mode<synchronous>, transform_indices = @transform_10, window_bounds = array<i64: 1, 128>}, {pipeline_mode = #tpu.pipeline_mode<synchronous>, transform_indices = @transform_11, window_bounds = array<i64: 8, 128>}, {pipeline_mode = #tpu.pipeline_mode<synchronous>, transform_indices = @transform_12, window_bounds = array<i64: 2, 8, 128>}, {pipeline_mode = #tpu.pipeline_mode<synchronous>, transform_indices = @transform_13, window_bounds = array<i64: 2, 8, 128>}]} {
    %c0_i32 = arith.constant 0 : i32
    %0 = tpu.memref_slice %arg19[%c0_i32] : memref<3x!tpu.dma_semaphore, #tpu.memory_space<semaphore_mem>> -> memref<1x!tpu.dma_semaphore, #tpu.memory_space<semaphore_mem>>
    %1 = tpu.memref_squeeze %0 : memref<1x!tpu.dma_semaphore, #tpu.memory_space<semaphore_mem>> -> memref<!tpu.dma_semaphore, #tpu.memory_space<semaphore_mem>>
    tpu.enqueue_dma source(%arg6 : memref<128x512xbf16, #tpu.memory_space<any>>) target(%arg16 : memref<128x512xbf16, #tpu.memory_space<vmem>>) target_semaphore(%1 : memref<!tpu.dma_semaphore, #tpu.memory_space<semaphore_mem>>)
    %c1_i32 = arith.constant 1 : i32
    %2 = tpu.memref_slice %arg19[%c1_i32] : memref<3x!tpu.dma_semaphore, #tpu.memory_space<semaphore_mem>> -> memref<1x!tpu.dma_semaphore, #tpu.memory_space<semaphore_mem>>
    %3 = tpu.memref_squeeze %2 : memref<1x!tpu.dma_semaphore, #tpu.memory_space<semaphore_mem>> -> memref<!tpu.dma_semaphore, #tpu.memory_space<semaphore_mem>>
    tpu.enqueue_dma source(%arg7 : memref<128x512xbf16, #tpu.memory_space<any>>) target(%arg17 : memref<128x512xbf16, #tpu.memory_space<vmem>>) target_semaphore(%3 : memref<!tpu.dma_semaphore, #tpu.memory_space<semaphore_mem>>)
    %c2_i32 = arith.constant 2 : i32
    %4 = tpu.memref_slice %arg19[%c2_i32] : memref<3x!tpu.dma_semaphore, #tpu.memory_space<semaphore_mem>> -> memref<1x!tpu.dma_semaphore, #tpu.memory_space<semaphore_mem>>
    %5 = tpu.memref_squeeze %4 : memref<1x!tpu.dma_semaphore, #tpu.memory_space<semaphore_mem>> -> memref<!tpu.dma_semaphore, #tpu.memory_space<semaphore_mem>>
    tpu.enqueue_dma source(%arg8 : memref<128x512xbf16, #tpu.memory_space<any>>) target(%arg18 : memref<128x512xbf16, #tpu.memory_space<vmem>>) target_semaphore(%5 : memref<!tpu.dma_semaphore, #tpu.memory_space<semaphore_mem>>)
    %c0 = arith.constant 0 : index
    %c0_0 = arith.constant 0 : index
    %6 = vector.load %arg1[%c0, %c0_0] : memref<64x128xbf16, #tpu.memory_space<vmem>>, vector<64x128xbf16>
    %c0_1 = arith.constant 0 : index
    %c0_2 = arith.constant 0 : index
    %7 = vector.load %arg4[%c0_1, %c0_2] : memref<128x512xbf16, #tpu.memory_space<vmem>>, vector<128x512xbf16>
    %cst = arith.constant dense<0.000000e+00> : vector<64x512xf32>
    %8 = tpu.matmul %6, %7, %cst {dimension_numbers = #tpu.dot_dimension_numbers<[1], [0], [0], [1], [0, 0, 1, 1], [], []>} : vector<64x128xbf16>, vector<128x512xbf16>, vector<64x512xf32> -> vector<64x512xf32>
    %c0_3 = arith.constant 0 : index
    %c0_4 = arith.constant 0 : index
    %9 = vector.load %arg5[%c0_3, %c0_4] : memref<1x512xf32, #tpu.memory_space<vmem>>, vector<1x512xf32>
    %10 = vector.broadcast %9 : vector<1x512xf32> to vector<64x512xf32>
    %11 = arith.addf %8, %10 : vector<64x512xf32>
    %c0_5 = arith.constant 0 : index
    %c0_6 = arith.constant 0 : index
    %12 = vector.load %arg15[%c0_5, %c0_6] : memref<64x512xf32, #tpu.memory_space<vmem>>, vector<64x512xf32>
    tpu.vector_store %arg15[%c0_5, %c0_6], %11 {strides = array<i32>} : memref<64x512xf32, #tpu.memory_space<vmem>>, vector<64x512xf32>,
    %c0_7 = arith.constant 0 : index
    %c0_8 = arith.constant 0 : index
    %13 = vector.load %arg9[%c0_7, %c0_8] : memref<1x512xf32, #tpu.memory_space<vmem>>, vector<1x512xf32>
    %14 = vector.shape_cast %13 : vector<1x512xf32> to vector<1x512xf32>
    %15 = vector.broadcast %14 : vector<1x512xf32> to vector<8x512xf32>
    %c0_i32_9 = arith.constant 0 : i32
    %16 = tpu.memref_slice %arg19[%c0_i32_9] : memref<3x!tpu.dma_semaphore, #tpu.memory_space<semaphore_mem>> -> memref<1x!tpu.dma_semaphore, #tpu.memory_space<semaphore_mem>>
    %17 = tpu.memref_squeeze %16 : memref<1x!tpu.dma_semaphore, #tpu.memory_space<semaphore_mem>> -> memref<!tpu.dma_semaphore, #tpu.memory_space<semaphore_mem>>
    tpu.wait_dma2 semaphore(%17 : memref<!tpu.dma_semaphore, #tpu.memory_space<semaphore_mem>>) src(%arg6 : memref<128x512xbf16, #tpu.memory_space<any>>) dst(%arg16 : memref<128x512xbf16, #tpu.memory_space<vmem>>)
    %c1_i32_10 = arith.constant 1 : i32
    %18 = tpu.memref_slice %arg19[%c1_i32_10] : memref<3x!tpu.dma_semaphore, #tpu.memory_space<semaphore_mem>> -> memref<1x!tpu.dma_semaphore, #tpu.memory_space<semaphore_mem>>
    %19 = tpu.memref_squeeze %18 : memref<1x!tpu.dma_semaphore, #tpu.memory_space<semaphore_mem>> -> memref<!tpu.dma_semaphore, #tpu.memory_space<semaphore_mem>>
    tpu.wait_dma2 semaphore(%19 : memref<!tpu.dma_semaphore, #tpu.memory_space<semaphore_mem>>) src(%arg7 : memref<128x512xbf16, #tpu.memory_space<any>>) dst(%arg17 : memref<128x512xbf16, #tpu.memory_space<vmem>>)
    %c2_i32_11 = arith.constant 2 : i32
    %20 = tpu.memref_slice %arg19[%c2_i32_11] : memref<3x!tpu.dma_semaphore, #tpu.memory_space<semaphore_mem>> -> memref<1x!tpu.dma_semaphore, #tpu.memory_space<semaphore_mem>>
    %21 = tpu.memref_squeeze %20 : memref<1x!tpu.dma_semaphore, #tpu.memory_space<semaphore_mem>> -> memref<!tpu.dma_semaphore, #tpu.memory_space<semaphore_mem>>
    tpu.wait_dma2 semaphore(%21 : memref<!tpu.dma_semaphore, #tpu.memory_space<semaphore_mem>>) src(%arg8 : memref<128x512xbf16, #tpu.memory_space<any>>) dst(%arg18 : memref<128x512xbf16, #tpu.memory_space<vmem>>)
    %c0_12 = arith.constant 0 : index
    %c0_13 = arith.constant 0 : index
    %22 = vector.load %arg16[%c0_12, %c0_13] : memref<128x512xbf16, #tpu.memory_space<vmem>>, vector<128x512xbf16>
    %c0_14 = arith.constant 0 : index
    %c0_15 = arith.constant 0 : index
    %23 = vector.load %arg17[%c0_14, %c0_15] : memref<128x512xbf16, #tpu.memory_space<vmem>>, vector<128x512xbf16>
    %c0_16 = arith.constant 0 : index
    %c0_17 = arith.constant 0 : index
    %24 = vector.load %arg18[%c0_16, %c0_17] : memref<128x512xbf16, #tpu.memory_space<vmem>>, vector<128x512xbf16>
    %c0_18 = arith.constant 0 : index
    %c0_19 = arith.constant 0 : index
    %c0_20 = arith.constant 0 : index
    %25 = vector.load %arg2[%c0_18, %c0_19, %c0_20] : memref<2x8x128xf32, #tpu.memory_space<vmem>>, vector<1x8x128xf32>
    %26 = vector.shape_cast %25 : vector<1x8x128xf32> to vector<8x128xf32>
    %c0_21 = arith.constant 0 : index
    %c0_22 = arith.constant 0 : index
    %c0_23 = arith.constant 0 : index
    %27 = vector.load %arg3[%c0_21, %c0_22, %c0_23] : memref<2x8x128xf32, #tpu.memory_space<vmem>>, vector<1x8x128xf32>
    %28 = vector.shape_cast %27 : vector<1x8x128xf32> to vector<8x128xf32>
    %c1 = arith.constant 1 : index
    %c0_24 = arith.constant 0 : index
    %c0_25 = arith.constant 0 : index
    %29 = vector.load %arg2[%c1, %c0_24, %c0_25] : memref<2x8x128xf32, #tpu.memory_space<vmem>>, vector<1x8x128xf32>
    %30 = vector.shape_cast %29 : vector<1x8x128xf32> to vector<8x128xf32>
    %c1_26 = arith.constant 1 : index
    %c0_27 = arith.constant 0 : index
    %c0_28 = arith.constant 0 : index
    %31 = vector.load %arg3[%c1_26, %c0_27, %c0_28] : memref<2x8x128xf32, #tpu.memory_space<vmem>>, vector<1x8x128xf32>
    %32 = vector.shape_cast %31 : vector<1x8x128xf32> to vector<8x128xf32>
    %33 = arith.truncf %26 : vector<8x128xf32> to vector<8x128xbf16>
    %34 = arith.truncf %30 : vector<8x128xf32> to vector<8x128xbf16>
    %c0_29 = arith.constant 0 : index
    %c0_30 = arith.constant 0 : index
    %35 = vector.load %arg15[%c0_29, %c0_30] : memref<64x512xf32, #tpu.memory_space<vmem>>, vector<8x512xf32>
    %cst_31 = arith.constant dense<0.000000e+00> : vector<8x512xf32>
    %36 = tpu.matmul %33, %22, %cst_31 {dimension_numbers = #tpu.dot_dimension_numbers<[1], [0], [0], [1], [0, 0, 1, 1], [], []>} : vector<8x128xbf16>, vector<128x512xbf16>, vector<8x512xf32> -> vector<8x512xf32>
    %37 = arith.addf %35, %36 : vector<8x512xf32>
    %38 = vector.extract_strided_slice %37 {offsets = [0, 0], sizes = [8, 128], strides = [1, 1]} : vector<8x512xf32> to vector<8x128xf32>
    %39 = arith.negf %38 : vector<8x128xf32>
    %40 = math.exp %39 : vector<8x128xf32>
    %cst_32 = arith.constant 1.000000e+00 : f32
    %41 = vector.broadcast %cst_32 : f32 to vector<8x128xf32>
    %42 = arith.addf %41, %40 : vector<8x128xf32>
    %43 = arith.divf %41, %42 : vector<8x128xf32>
    %44 = vector.extract_strided_slice %37 {offsets = [0, 128], sizes = [8, 128], strides = [1, 1]} : vector<8x512xf32> to vector<8x128xf32>
    %45 = arith.negf %44 : vector<8x128xf32>
    %46 = math.exp %45 : vector<8x128xf32>
    %cst_33 = arith.constant 1.000000e+00 : f32
    %47 = vector.broadcast %cst_33 : f32 to vector<8x128xf32>
    %48 = arith.addf %47, %46 : vector<8x128xf32>
    %49 = arith.divf %47, %48 : vector<8x128xf32>
    %50 = vector.extract_strided_slice %37 {offsets = [0, 256], sizes = [8, 128], strides = [1, 1]} : vector<8x512xf32> to vector<8x128xf32>
    %51 = math.tanh %50 : vector<8x128xf32>
    %52 = vector.extract_strided_slice %37 {offsets = [0, 384], sizes = [8, 128], strides = [1, 1]} : vector<8x512xf32> to vector<8x128xf32>
    %53 = arith.negf %52 : vector<8x128xf32>
    %54 = math.exp %53 : vector<8x128xf32>
    %cst_34 = arith.constant 1.000000e+00 : f32
    %55 = vector.broadcast %cst_34 : f32 to vector<8x128xf32>
    %56 = arith.addf %55, %54 : vector<8x128xf32>
    %57 = arith.divf %55, %56 : vector<8x128xf32>
    %58 = arith.mulf %49, %28 : vector<8x128xf32>
    %59 = arith.mulf %43, %51 : vector<8x128xf32>
    %60 = arith.addf %58, %59 : vector<8x128xf32>
    %61 = math.tanh %60 : vector<8x128xf32>
    %62 = arith.mulf %57, %61 : vector<8x128xf32>
    %63 = arith.truncf %62 : vector<8x128xf32> to vector<8x128xbf16>
    %cst_35 = arith.constant dense<0.000000e+00> : vector<8x512xf32>
    %64 = tpu.matmul %63, %23, %cst_35 {dimension_numbers = #tpu.dot_dimension_numbers<[1], [0], [0], [1], [0, 0, 1, 1], [], []>} : vector<8x128xbf16>, vector<128x512xbf16>, vector<8x512xf32> -> vector<8x512xf32>
    %cst_36 = arith.constant dense<0.000000e+00> : vector<8x512xf32>
    %65 = tpu.matmul %34, %24, %cst_36 {dimension_numbers = #tpu.dot_dimension_numbers<[1], [0], [0], [1], [0, 0, 1, 1], [], []>} : vector<8x128xbf16>, vector<128x512xbf16>, vector<8x512xf32> -> vector<8x512xf32>
    %66 = arith.addf %64, %65 : vector<8x512xf32>
    %67 = arith.addf %66, %15 : vector<8x512xf32>
    %68 = vector.extract_strided_slice %67 {offsets = [0, 0], sizes = [8, 128], strides = [1, 1]} : vector<8x512xf32> to vector<8x128xf32>
    %69 = arith.negf %68 : vector<8x128xf32>
    %70 = math.exp %69 : vector<8x128xf32>
    %cst_37 = arith.constant 1.000000e+00 : f32
    %71 = vector.broadcast %cst_37 : f32 to vector<8x128xf32>
    %72 = arith.addf %71, %70 : vector<8x128xf32>
    %73 = arith.divf %71, %72 : vector<8x128xf32>
    %74 = vector.extract_strided_slice %67 {offsets = [0, 128], sizes = [8, 128], strides = [1, 1]} : vector<8x512xf32> to vector<8x128xf32>
    %75 = arith.negf %74 : vector<8x128xf32>
    %76 = math.exp %75 : vector<8x128xf32>
    %cst_38 = arith.constant 1.000000e+00 : f32
    %77 = vector.broadcast %cst_38 : f32 to vector<8x128xf32>
    %78 = arith.addf %77, %76 : vector<8x128xf32>
    %79 = arith.divf %77, %78 : vector<8x128xf32>
    %80 = vector.extract_strided_slice %67 {offsets = [0, 256], sizes = [8, 128], strides = [1, 1]} : vector<8x512xf32> to vector<8x128xf32>
    %81 = math.tanh %80 : vector<8x128xf32>
    %82 = vector.extract_strided_slice %67 {offsets = [0, 384], sizes = [8, 128], strides = [1, 1]} : vector<8x512xf32> to vector<8x128xf32>
    %83 = arith.negf %82 : vector<8x128xf32>
    %84 = math.exp %83 : vector<8x128xf32>
    %cst_39 = arith.constant 1.000000e+00 : f32
    %85 = vector.broadcast %cst_39 : f32 to vector<8x128xf32>
    %86 = arith.addf %85, %84 : vector<8x128xf32>
    %87 = arith.divf %85, %86 : vector<8x128xf32>
    %88 = arith.mulf %79, %32 : vector<8x128xf32>
    %89 = arith.mulf %73, %81 : vector<8x128xf32>
    %90 = arith.addf %88, %89 : vector<8x128xf32>
    %91 = math.tanh %90 : vector<8x128xf32>
    %92 = arith.mulf %87, %91 : vector<8x128xf32>
    %93 = arith.truncf %92 : vector<8x128xf32> to vector<8x128xbf16>
    %c8 = arith.constant 8 : index
    %c0_40 = arith.constant 0 : index
    %94 = vector.load %arg15[%c8, %c0_40] : memref<64x512xf32, #tpu.memory_space<vmem>>, vector<8x512xf32>
    %cst_41 = arith.constant dense<0.000000e+00> : vector<8x512xf32>
    %95 = tpu.matmul %63, %22, %cst_41 {dimension_numbers = #tpu.dot_dimension_numbers<[1], [0], [0], [1], [0, 0, 1, 1], [], []>} : vector<8x128xbf16>, vector<128x512xbf16>, vector<8x512xf32> -> vector<8x512xf32>
    %96 = arith.addf %94, %95 : vector<8x512xf32>
    %97 = vector.extract_strided_slice %96 {offsets = [0, 0], sizes = [8, 128], strides = [1, 1]} : vector<8x512xf32> to vector<8x128xf32>
    %98 = arith.negf %97 : vector<8x128xf32>
    %99 = math.exp %98 : vector<8x128xf32>
    %cst_42 = arith.constant 1.000000e+00 : f32
    %100 = vector.broadcast %cst_42 : f32 to vector<8x128xf32>
    %101 = arith.addf %100, %99 : vector<8x128xf32>
    %102 = arith.divf %100, %101 : vector<8x128xf32>
    %103 = vector.extract_strided_slice %96 {offsets = [0, 128], sizes = [8, 128], strides = [1, 1]} : vector<8x512xf32> to vector<8x128xf32>
    %104 = arith.negf %103 : vector<8x128xf32>
    %105 = math.exp %104 : vector<8x128xf32>
    %cst_43 = arith.constant 1.000000e+00 : f32
    %106 = vector.broadcast %cst_43 : f32 to vector<8x128xf32>
    %107 = arith.addf %106, %105 : vector<8x128xf32>
    %108 = arith.divf %106, %107 : vector<8x128xf32>
    %109 = vector.extract_strided_slice %96 {offsets = [0, 256], sizes = [8, 128], strides = [1, 1]} : vector<8x512xf32> to vector<8x128xf32>
    %110 = math.tanh %109 : vector<8x128xf32>
    %111 = vector.extract_strided_slice %96 {offsets = [0, 384], sizes = [8, 128], strides = [1, 1]} : vector<8x512xf32> to vector<8x128xf32>
    %112 = arith.negf %111 : vector<8x128xf32>
    %113 = math.exp %112 : vector<8x128xf32>
    %cst_44 = arith.constant 1.000000e+00 : f32
    %114 = vector.broadcast %cst_44 : f32 to vector<8x128xf32>
    %115 = arith.addf %114, %113 : vector<8x128xf32>
    %116 = arith.divf %114, %115 : vector<8x128xf32>
    %117 = arith.mulf %108, %60 : vector<8x128xf32>
    %118 = arith.mulf %102, %110 : vector<8x128xf32>
    %119 = arith.addf %117, %118 : vector<8x128xf32>
    %120 = math.tanh %119 : vector<8x128xf32>
    %121 = arith.mulf %116, %120 : vector<8x128xf32>
    %122 = arith.truncf %121 : vector<8x128xf32> to vector<8x128xbf16>
    %cst_45 = arith.constant dense<0.000000e+00> : vector<8x512xf32>
    %123 = tpu.matmul %122, %23, %cst_45 {dimension_numbers = #tpu.dot_dimension_numbers<[1], [0], [0], [1], [0, 0, 1, 1], [], []>} : vector<8x128xbf16>, vector<128x512xbf16>, vector<8x512xf32> -> vector<8x512xf32>
    %cst_46 = arith.constant dense<0.000000e+00> : vector<8x512xf32>
    %124 = tpu.matmul %93, %24, %cst_46 {dimension_numbers = #tpu.dot_dimension_numbers<[1], [0], [0], [1], [0, 0, 1, 1], [], []>} : vector<8x128xbf16>, vector<128x512xbf16>, vector<8x512xf32> -> vector<8x512xf32>
    %125 = arith.addf %123, %124 : vector<8x512xf32>
    %126 = arith.addf %125, %15 : vector<8x512xf32>
    %127 = vector.extract_strided_slice %126 {offsets = [0, 0], sizes = [8, 128], strides = [1, 1]} : vector<8x512xf32> to vector<8x128xf32>
    %128 = arith.negf %127 : vector<8x128xf32>
    %129 = math.exp %128 : vector<8x128xf32>
    %cst_47 = arith.constant 1.000000e+00 : f32
    %130 = vector.broadcast %cst_47 : f32 to vector<8x128xf32>
    %131 = arith.addf %130, %129 : vector<8x128xf32>
    %132 = arith.divf %130, %131 : vector<8x128xf32>
    %133 = vector.extract_strided_slice %126 {offsets = [0, 128], sizes = [8, 128], strides = [1, 1]} : vector<8x512xf32> to vector<8x128xf32>
    %134 = arith.negf %133 : vector<8x128xf32>
    %135 = math.exp %134 : vector<8x128xf32>
    %cst_48 = arith.constant 1.000000e+00 : f32
    %136 = vector.broadcast %cst_48 : f32 to vector<8x128xf32>
    %137 = arith.addf %136, %135 : vector<8x128xf32>
    %138 = arith.divf %136, %137 : vector<8x128xf32>
    %139 = vector.extract_strided_slice %126 {offsets = [0, 256], sizes = [8, 128], strides = [1, 1]} : vector<8x512xf32> to vector<8x128xf32>
    %140 = math.tanh %139 : vector<8x128xf32>
    %141 = vector.extract_strided_slice %126 {offsets = [0, 384], sizes = [8, 128], strides = [1, 1]} : vector<8x512xf32> to vector<8x128xf32>
    %142 = arith.negf %141 : vector<8x128xf32>
    %143 = math.exp %142 : vector<8x128xf32>
    %cst_49 = arith.constant 1.000000e+00 : f32
    %144 = vector.broadcast %cst_49 : f32 to vector<8x128xf32>
    %145 = arith.addf %144, %143 : vector<8x128xf32>
    %146 = arith.divf %144, %145 : vector<8x128xf32>
    %147 = arith.mulf %138, %90 : vector<8x128xf32>
    %148 = arith.mulf %132, %140 : vector<8x128xf32>
    %149 = arith.addf %147, %148 : vector<8x128xf32>
    %150 = math.tanh %149 : vector<8x128xf32>
    %151 = arith.mulf %146, %150 : vector<8x128xf32>
    %152 = arith.truncf %151 : vector<8x128xf32> to vector<8x128xbf16>
    %c16 = arith.constant 16 : index
    %c0_50 = arith.constant 0 : index
    %153 = vector.load %arg15[%c16, %c0_50] : memref<64x512xf32, #tpu.memory_space<vmem>>, vector<8x512xf32>
    %cst_51 = arith.constant dense<0.000000e+00> : vector<8x512xf32>
    %154 = tpu.matmul %122, %22, %cst_51 {dimension_numbers = #tpu.dot_dimension_numbers<[1], [0], [0], [1], [0, 0, 1, 1], [], []>} : vector<8x128xbf16>, vector<128x512xbf16>, vector<8x512xf32> -> vector<8x512xf32>
    %155 = arith.addf %153, %154 : vector<8x512xf32>
    %156 = vector.extract_strided_slice %155 {offsets = [0, 0], sizes = [8, 128], strides = [1, 1]} : vector<8x512xf32> to vector<8x128xf32>
    %157 = arith.negf %156 : vector<8x128xf32>
    %158 = math.exp %157 : vector<8x128xf32>
    %cst_52 = arith.constant 1.000000e+00 : f32
    %159 = vector.broadcast %cst_52 : f32 to vector<8x128xf32>
    %160 = arith.addf %159, %158 : vector<8x128xf32>
    %161 = arith.divf %159, %160 : vector<8x128xf32>
    %162 = vector.extract_strided_slice %155 {offsets = [0, 128], sizes = [8, 128], strides = [1, 1]} : vector<8x512xf32> to vector<8x128xf32>
    %163 = arith.negf %162 : vector<8x128xf32>
    %164 = math.exp %163 : vector<8x128xf32>
    %cst_53 = arith.constant 1.000000e+00 : f32
    %165 = vector.broadcast %cst_53 : f32 to vector<8x128xf32>
    %166 = arith.addf %165, %164 : vector<8x128xf32>
    %167 = arith.divf %165, %166 : vector<8x128xf32>
    %168 = vector.extract_strided_slice %155 {offsets = [0, 256], sizes = [8, 128], strides = [1, 1]} : vector<8x512xf32> to vector<8x128xf32>
    %169 = math.tanh %168 : vector<8x128xf32>
    %170 = vector.extract_strided_slice %155 {offsets = [0, 384], sizes = [8, 128], strides = [1, 1]} : vector<8x512xf32> to vector<8x128xf32>
    %171 = arith.negf %170 : vector<8x128xf32>
    %172 = math.exp %171 : vector<8x128xf32>
    %cst_54 = arith.constant 1.000000e+00 : f32
    %173 = vector.broadcast %cst_54 : f32 to vector<8x128xf32>
    %174 = arith.addf %173, %172 : vector<8x128xf32>
    %175 = arith.divf %173, %174 : vector<8x128xf32>
    %176 = arith.mulf %167, %119 : vector<8x128xf32>
    %177 = arith.mulf %161, %169 : vector<8x128xf32>
    %178 = arith.addf %176, %177 : vector<8x128xf32>
    %179 = math.tanh %178 : vector<8x128xf32>
    %180 = arith.mulf %175, %179 : vector<8x128xf32>
    %181 = arith.truncf %180 : vector<8x128xf32> to vector<8x128xbf16>
    %cst_55 = arith.constant dense<0.000000e+00> : vector<8x512xf32>
    %182 = tpu.matmul %181, %23, %cst_55 {dimension_numbers = #tpu.dot_dimension_numbers<[1], [0], [0], [1], [0, 0, 1, 1], [], []>} : vector<8x128xbf16>, vector<128x512xbf16>, vector<8x512xf32> -> vector<8x512xf32>
    %cst_56 = arith.constant dense<0.000000e+00> : vector<8x512xf32>
    %183 = tpu.matmul %152, %24, %cst_56 {dimension_numbers = #tpu.dot_dimension_numbers<[1], [0], [0], [1], [0, 0, 1, 1], [], []>} : vector<8x128xbf16>, vector<128x512xbf16>, vector<8x512xf32> -> vector<8x512xf32>
    %184 = arith.addf %182, %183 : vector<8x512xf32>
    %185 = arith.addf %184, %15 : vector<8x512xf32>
    %186 = vector.extract_strided_slice %185 {offsets = [0, 0], sizes = [8, 128], strides = [1, 1]} : vector<8x512xf32> to vector<8x128xf32>
    %187 = arith.negf %186 : vector<8x128xf32>
    %188 = math.exp %187 : vector<8x128xf32>
    %cst_57 = arith.constant 1.000000e+00 : f32
    %189 = vector.broadcast %cst_57 : f32 to vector<8x128xf32>
    %190 = arith.addf %189, %188 : vector<8x128xf32>
    %191 = arith.divf %189, %190 : vector<8x128xf32>
    %192 = vector.extract_strided_slice %185 {offsets = [0, 128], sizes = [8, 128], strides = [1, 1]} : vector<8x512xf32> to vector<8x128xf32>
    %193 = arith.negf %192 : vector<8x128xf32>
    %194 = math.exp %193 : vector<8x128xf32>
    %cst_58 = arith.constant 1.000000e+00 : f32
    %195 = vector.broadcast %cst_58 : f32 to vector<8x128xf32>
    %196 = arith.addf %195, %194 : vector<8x128xf32>
    %197 = arith.divf %195, %196 : vector<8x128xf32>
    %198 = vector.extract_strided_slice %185 {offsets = [0, 256], sizes = [8, 128], strides = [1, 1]} : vector<8x512xf32> to vector<8x128xf32>
    %199 = math.tanh %198 : vector<8x128xf32>
    %200 = vector.extract_strided_slice %185 {offsets = [0, 384], sizes = [8, 128], strides = [1, 1]} : vector<8x512xf32> to vector<8x128xf32>
    %201 = arith.negf %200 : vector<8x128xf32>
    %202 = math.exp %201 : vector<8x128xf32>
    %cst_59 = arith.constant 1.000000e+00 : f32
    %203 = vector.broadcast %cst_59 : f32 to vector<8x128xf32>
    %204 = arith.addf %203, %202 : vector<8x128xf32>
    %205 = arith.divf %203, %204 : vector<8x128xf32>
    %206 = arith.mulf %197, %149 : vector<8x128xf32>
    %207 = arith.mulf %191, %199 : vector<8x128xf32>
    %208 = arith.addf %206, %207 : vector<8x128xf32>
    %209 = math.tanh %208 : vector<8x128xf32>
    %210 = arith.mulf %205, %209 : vector<8x128xf32>
    %211 = arith.truncf %210 : vector<8x128xf32> to vector<8x128xbf16>
    %c24 = arith.constant 24 : index
    %c0_60 = arith.constant 0 : index
    %212 = vector.load %arg15[%c24, %c0_60] : memref<64x512xf32, #tpu.memory_space<vmem>>, vector<8x512xf32>
    %cst_61 = arith.constant dense<0.000000e+00> : vector<8x512xf32>
    %213 = tpu.matmul %181, %22, %cst_61 {dimension_numbers = #tpu.dot_dimension_numbers<[1], [0], [0], [1], [0, 0, 1, 1], [], []>} : vector<8x128xbf16>, vector<128x512xbf16>, vector<8x512xf32> -> vector<8x512xf32>
    %214 = arith.addf %212, %213 : vector<8x512xf32>
    %215 = vector.extract_strided_slice %214 {offsets = [0, 0], sizes = [8, 128], strides = [1, 1]} : vector<8x512xf32> to vector<8x128xf32>
    %216 = arith.negf %215 : vector<8x128xf32>
    %217 = math.exp %216 : vector<8x128xf32>
    %cst_62 = arith.constant 1.000000e+00 : f32
    %218 = vector.broadcast %cst_62 : f32 to vector<8x128xf32>
    %219 = arith.addf %218, %217 : vector<8x128xf32>
    %220 = arith.divf %218, %219 : vector<8x128xf32>
    %221 = vector.extract_strided_slice %214 {offsets = [0, 128], sizes = [8, 128], strides = [1, 1]} : vector<8x512xf32> to vector<8x128xf32>
    %222 = arith.negf %221 : vector<8x128xf32>
    %223 = math.exp %222 : vector<8x128xf32>
    %cst_63 = arith.constant 1.000000e+00 : f32
    %224 = vector.broadcast %cst_63 : f32 to vector<8x128xf32>
    %225 = arith.addf %224, %223 : vector<8x128xf32>
    %226 = arith.divf %224, %225 : vector<8x128xf32>
    %227 = vector.extract_strided_slice %214 {offsets = [0, 256], sizes = [8, 128], strides = [1, 1]} : vector<8x512xf32> to vector<8x128xf32>
    %228 = math.tanh %227 : vector<8x128xf32>
    %229 = vector.extract_strided_slice %214 {offsets = [0, 384], sizes = [8, 128], strides = [1, 1]} : vector<8x512xf32> to vector<8x128xf32>
    %230 = arith.negf %229 : vector<8x128xf32>
    %231 = math.exp %230 : vector<8x128xf32>
    %cst_64 = arith.constant 1.000000e+00 : f32
    %232 = vector.broadcast %cst_64 : f32 to vector<8x128xf32>
    %233 = arith.addf %232, %231 : vector<8x128xf32>
    %234 = arith.divf %232, %233 : vector<8x128xf32>
    %235 = arith.mulf %226, %178 : vector<8x128xf32>
    %236 = arith.mulf %220, %228 : vector<8x128xf32>
    %237 = arith.addf %235, %236 : vector<8x128xf32>
    %238 = math.tanh %237 : vector<8x128xf32>
    %239 = arith.mulf %234, %238 : vector<8x128xf32>
    %240 = arith.truncf %239 : vector<8x128xf32> to vector<8x128xbf16>
    %cst_65 = arith.constant dense<0.000000e+00> : vector<8x512xf32>
    %241 = tpu.matmul %240, %23, %cst_65 {dimension_numbers = #tpu.dot_dimension_numbers<[1], [0], [0], [1], [0, 0, 1, 1], [], []>} : vector<8x128xbf16>, vector<128x512xbf16>, vector<8x512xf32> -> vector<8x512xf32>
    %cst_66 = arith.constant dense<0.000000e+00> : vector<8x512xf32>
    %242 = tpu.matmul %211, %24, %cst_66 {dimension_numbers = #tpu.dot_dimension_numbers<[1], [0], [0], [1], [0, 0, 1, 1], [], []>} : vector<8x128xbf16>, vector<128x512xbf16>, vector<8x512xf32> -> vector<8x512xf32>
    %243 = arith.addf %241, %242 : vector<8x512xf32>
    %244 = arith.addf %243, %15 : vector<8x512xf32>
    %245 = vector.extract_strided_slice %244 {offsets = [0, 0], sizes = [8, 128], strides = [1, 1]} : vector<8x512xf32> to vector<8x128xf32>
    %246 = arith.negf %245 : vector<8x128xf32>
    %247 = math.exp %246 : vector<8x128xf32>
    %cst_67 = arith.constant 1.000000e+00 : f32
    %248 = vector.broadcast %cst_67 : f32 to vector<8x128xf32>
    %249 = arith.addf %248, %247 : vector<8x128xf32>
    %250 = arith.divf %248, %249 : vector<8x128xf32>
    %251 = vector.extract_strided_slice %244 {offsets = [0, 128], sizes = [8, 128], strides = [1, 1]} : vector<8x512xf32> to vector<8x128xf32>
    %252 = arith.negf %251 : vector<8x128xf32>
    %253 = math.exp %252 : vector<8x128xf32>
    %cst_68 = arith.constant 1.000000e+00 : f32
    %254 = vector.broadcast %cst_68 : f32 to vector<8x128xf32>
    %255 = arith.addf %254, %253 : vector<8x128xf32>
    %256 = arith.divf %254, %255 : vector<8x128xf32>
    %257 = vector.extract_strided_slice %244 {offsets = [0, 256], sizes = [8, 128], strides = [1, 1]} : vector<8x512xf32> to vector<8x128xf32>
    %258 = math.tanh %257 : vector<8x128xf32>
    %259 = vector.extract_strided_slice %244 {offsets = [0, 384], sizes = [8, 128], strides = [1, 1]} : vector<8x512xf32> to vector<8x128xf32>
    %260 = arith.negf %259 : vector<8x128xf32>
    %261 = math.exp %260 : vector<8x128xf32>
    %cst_69 = arith.constant 1.000000e+00 : f32
    %262 = vector.broadcast %cst_69 : f32 to vector<8x128xf32>
    %263 = arith.addf %262, %261 : vector<8x128xf32>
    %264 = arith.divf %262, %263 : vector<8x128xf32>
    %265 = arith.mulf %256, %208 : vector<8x128xf32>
    %266 = arith.mulf %250, %258 : vector<8x128xf32>
    %267 = arith.addf %265, %266 : vector<8x128xf32>
    %268 = math.tanh %267 : vector<8x128xf32>
    %269 = arith.mulf %264, %268 : vector<8x128xf32>
    %270 = arith.truncf %269 : vector<8x128xf32> to vector<8x128xbf16>
    %c32 = arith.constant 32 : index
    %c0_70 = arith.constant 0 : index
    %271 = vector.load %arg15[%c32, %c0_70] : memref<64x512xf32, #tpu.memory_space<vmem>>, vector<8x512xf32>
    %cst_71 = arith.constant dense<0.000000e+00> : vector<8x512xf32>
    %272 = tpu.matmul %240, %22, %cst_71 {dimension_numbers = #tpu.dot_dimension_numbers<[1], [0], [0], [1], [0, 0, 1, 1], [], []>} : vector<8x128xbf16>, vector<128x512xbf16>, vector<8x512xf32> -> vector<8x512xf32>
    %273 = arith.addf %271, %272 : vector<8x512xf32>
    %274 = vector.extract_strided_slice %273 {offsets = [0, 0], sizes = [8, 128], strides = [1, 1]} : vector<8x512xf32> to vector<8x128xf32>
    %275 = arith.negf %274 : vector<8x128xf32>
    %276 = math.exp %275 : vector<8x128xf32>
    %cst_72 = arith.constant 1.000000e+00 : f32
    %277 = vector.broadcast %cst_72 : f32 to vector<8x128xf32>
    %278 = arith.addf %277, %276 : vector<8x128xf32>
    %279 = arith.divf %277, %278 : vector<8x128xf32>
    %280 = vector.extract_strided_slice %273 {offsets = [0, 128], sizes = [8, 128], strides = [1, 1]} : vector<8x512xf32> to vector<8x128xf32>
    %281 = arith.negf %280 : vector<8x128xf32>
    %282 = math.exp %281 : vector<8x128xf32>
    %cst_73 = arith.constant 1.000000e+00 : f32
    %283 = vector.broadcast %cst_73 : f32 to vector<8x128xf32>
    %284 = arith.addf %283, %282 : vector<8x128xf32>
    %285 = arith.divf %283, %284 : vector<8x128xf32>
    %286 = vector.extract_strided_slice %273 {offsets = [0, 256], sizes = [8, 128], strides = [1, 1]} : vector<8x512xf32> to vector<8x128xf32>
    %287 = math.tanh %286 : vector<8x128xf32>
    %288 = vector.extract_strided_slice %273 {offsets = [0, 384], sizes = [8, 128], strides = [1, 1]} : vector<8x512xf32> to vector<8x128xf32>
    %289 = arith.negf %288 : vector<8x128xf32>
    %290 = math.exp %289 : vector<8x128xf32>
    %cst_74 = arith.constant 1.000000e+00 : f32
    %291 = vector.broadcast %cst_74 : f32 to vector<8x128xf32>
    %292 = arith.addf %291, %290 : vector<8x128xf32>
    %293 = arith.divf %291, %292 : vector<8x128xf32>
    %294 = arith.mulf %285, %237 : vector<8x128xf32>
    %295 = arith.mulf %279, %287 : vector<8x128xf32>
    %296 = arith.addf %294, %295 : vector<8x128xf32>
    %297 = math.tanh %296 : vector<8x128xf32>
    %298 = arith.mulf %293, %297 : vector<8x128xf32>
    %299 = arith.truncf %298 : vector<8x128xf32> to vector<8x128xbf16>
    %cst_75 = arith.constant dense<0.000000e+00> : vector<8x512xf32>
    %300 = tpu.matmul %299, %23, %cst_75 {dimension_numbers = #tpu.dot_dimension_numbers<[1], [0], [0], [1], [0, 0, 1, 1], [], []>} : vector<8x128xbf16>, vector<128x512xbf16>, vector<8x512xf32> -> vector<8x512xf32>
    %cst_76 = arith.constant dense<0.000000e+00> : vector<8x512xf32>
    %301 = tpu.matmul %270, %24, %cst_76 {dimension_numbers = #tpu.dot_dimension_numbers<[1], [0], [0], [1], [0, 0, 1, 1], [], []>} : vector<8x128xbf16>, vector<128x512xbf16>, vector<8x512xf32> -> vector<8x512xf32>
    %302 = arith.addf %300, %301 : vector<8x512xf32>
    %303 = arith.addf %302, %15 : vector<8x512xf32>
    %304 = vector.extract_strided_slice %303 {offsets = [0, 0], sizes = [8, 128], strides = [1, 1]} : vector<8x512xf32> to vector<8x128xf32>
    %305 = arith.negf %304 : vector<8x128xf32>
    %306 = math.exp %305 : vector<8x128xf32>
    %cst_77 = arith.constant 1.000000e+00 : f32
    %307 = vector.broadcast %cst_77 : f32 to vector<8x128xf32>
    %308 = arith.addf %307, %306 : vector<8x128xf32>
    %309 = arith.divf %307, %308 : vector<8x128xf32>
    %310 = vector.extract_strided_slice %303 {offsets = [0, 128], sizes = [8, 128], strides = [1, 1]} : vector<8x512xf32> to vector<8x128xf32>
    %311 = arith.negf %310 : vector<8x128xf32>
    %312 = math.exp %311 : vector<8x128xf32>
    %cst_78 = arith.constant 1.000000e+00 : f32
    %313 = vector.broadcast %cst_78 : f32 to vector<8x128xf32>
    %314 = arith.addf %313, %312 : vector<8x128xf32>
    %315 = arith.divf %313, %314 : vector<8x128xf32>
    %316 = vector.extract_strided_slice %303 {offsets = [0, 256], sizes = [8, 128], strides = [1, 1]} : vector<8x512xf32> to vector<8x128xf32>
    %317 = math.tanh %316 : vector<8x128xf32>
    %318 = vector.extract_strided_slice %303 {offsets = [0, 384], sizes = [8, 128], strides = [1, 1]} : vector<8x512xf32> to vector<8x128xf32>
    %319 = arith.negf %318 : vector<8x128xf32>
    %320 = math.exp %319 : vector<8x128xf32>
    %cst_79 = arith.constant 1.000000e+00 : f32
    %321 = vector.broadcast %cst_79 : f32 to vector<8x128xf32>
    %322 = arith.addf %321, %320 : vector<8x128xf32>
    %323 = arith.divf %321, %322 : vector<8x128xf32>
    %324 = arith.mulf %315, %267 : vector<8x128xf32>
    %325 = arith.mulf %309, %317 : vector<8x128xf32>
    %326 = arith.addf %324, %325 : vector<8x128xf32>
    %327 = math.tanh %326 : vector<8x128xf32>
    %328 = arith.mulf %323, %327 : vector<8x128xf32>
    %329 = arith.truncf %328 : vector<8x128xf32> to vector<8x128xbf16>
    %c40 = arith.constant 40 : index
    %c0_80 = arith.constant 0 : index
    %330 = vector.load %arg15[%c40, %c0_80] : memref<64x512xf32, #tpu.memory_space<vmem>>, vector<8x512xf32>
    %cst_81 = arith.constant dense<0.000000e+00> : vector<8x512xf32>
    %331 = tpu.matmul %299, %22, %cst_81 {dimension_numbers = #tpu.dot_dimension_numbers<[1], [0], [0], [1], [0, 0, 1, 1], [], []>} : vector<8x128xbf16>, vector<128x512xbf16>, vector<8x512xf32> -> vector<8x512xf32>
    %332 = arith.addf %330, %331 : vector<8x512xf32>
    %333 = vector.extract_strided_slice %332 {offsets = [0, 0], sizes = [8, 128], strides = [1, 1]} : vector<8x512xf32> to vector<8x128xf32>
    %334 = arith.negf %333 : vector<8x128xf32>
    %335 = math.exp %334 : vector<8x128xf32>
    %cst_82 = arith.constant 1.000000e+00 : f32
    %336 = vector.broadcast %cst_82 : f32 to vector<8x128xf32>
    %337 = arith.addf %336, %335 : vector<8x128xf32>
    %338 = arith.divf %336, %337 : vector<8x128xf32>
    %339 = vector.extract_strided_slice %332 {offsets = [0, 128], sizes = [8, 128], strides = [1, 1]} : vector<8x512xf32> to vector<8x128xf32>
    %340 = arith.negf %339 : vector<8x128xf32>
    %341 = math.exp %340 : vector<8x128xf32>
    %cst_83 = arith.constant 1.000000e+00 : f32
    %342 = vector.broadcast %cst_83 : f32 to vector<8x128xf32>
    %343 = arith.addf %342, %341 : vector<8x128xf32>
    %344 = arith.divf %342, %343 : vector<8x128xf32>
    %345 = vector.extract_strided_slice %332 {offsets = [0, 256], sizes = [8, 128], strides = [1, 1]} : vector<8x512xf32> to vector<8x128xf32>
    %346 = math.tanh %345 : vector<8x128xf32>
    %347 = vector.extract_strided_slice %332 {offsets = [0, 384], sizes = [8, 128], strides = [1, 1]} : vector<8x512xf32> to vector<8x128xf32>
    %348 = arith.negf %347 : vector<8x128xf32>
    %349 = math.exp %348 : vector<8x128xf32>
    %cst_84 = arith.constant 1.000000e+00 : f32
    %350 = vector.broadcast %cst_84 : f32 to vector<8x128xf32>
    %351 = arith.addf %350, %349 : vector<8x128xf32>
    %352 = arith.divf %350, %351 : vector<8x128xf32>
    %353 = arith.mulf %344, %296 : vector<8x128xf32>
    %354 = arith.mulf %338, %346 : vector<8x128xf32>
    %355 = arith.addf %353, %354 : vector<8x128xf32>
    %356 = math.tanh %355 : vector<8x128xf32>
    %357 = arith.mulf %352, %356 : vector<8x128xf32>
    %358 = arith.truncf %357 : vector<8x128xf32> to vector<8x128xbf16>
    %cst_85 = arith.constant dense<0.000000e+00> : vector<8x512xf32>
    %359 = tpu.matmul %358, %23, %cst_85 {dimension_numbers = #tpu.dot_dimension_numbers<[1], [0], [0], [1], [0, 0, 1, 1], [], []>} : vector<8x128xbf16>, vector<128x512xbf16>, vector<8x512xf32> -> vector<8x512xf32>
    %cst_86 = arith.constant dense<0.000000e+00> : vector<8x512xf32>
    %360 = tpu.matmul %329, %24, %cst_86 {dimension_numbers = #tpu.dot_dimension_numbers<[1], [0], [0], [1], [0, 0, 1, 1], [], []>} : vector<8x128xbf16>, vector<128x512xbf16>, vector<8x512xf32> -> vector<8x512xf32>
    %361 = arith.addf %359, %360 : vector<8x512xf32>
    %362 = arith.addf %361, %15 : vector<8x512xf32>
    %363 = vector.extract_strided_slice %362 {offsets = [0, 0], sizes = [8, 128], strides = [1, 1]} : vector<8x512xf32> to vector<8x128xf32>
    %364 = arith.negf %363 : vector<8x128xf32>
    %365 = math.exp %364 : vector<8x128xf32>
    %cst_87 = arith.constant 1.000000e+00 : f32
    %366 = vector.broadcast %cst_87 : f32 to vector<8x128xf32>
    %367 = arith.addf %366, %365 : vector<8x128xf32>
    %368 = arith.divf %366, %367 : vector<8x128xf32>
    %369 = vector.extract_strided_slice %362 {offsets = [0, 128], sizes = [8, 128], strides = [1, 1]} : vector<8x512xf32> to vector<8x128xf32>
    %370 = arith.negf %369 : vector<8x128xf32>
    %371 = math.exp %370 : vector<8x128xf32>
    %cst_88 = arith.constant 1.000000e+00 : f32
    %372 = vector.broadcast %cst_88 : f32 to vector<8x128xf32>
    %373 = arith.addf %372, %371 : vector<8x128xf32>
    %374 = arith.divf %372, %373 : vector<8x128xf32>
    %375 = vector.extract_strided_slice %362 {offsets = [0, 256], sizes = [8, 128], strides = [1, 1]} : vector<8x512xf32> to vector<8x128xf32>
    %376 = math.tanh %375 : vector<8x128xf32>
    %377 = vector.extract_strided_slice %362 {offsets = [0, 384], sizes = [8, 128], strides = [1, 1]} : vector<8x512xf32> to vector<8x128xf32>
    %378 = arith.negf %377 : vector<8x128xf32>
    %379 = math.exp %378 : vector<8x128xf32>
    %cst_89 = arith.constant 1.000000e+00 : f32
    %380 = vector.broadcast %cst_89 : f32 to vector<8x128xf32>
    %381 = arith.addf %380, %379 : vector<8x128xf32>
    %382 = arith.divf %380, %381 : vector<8x128xf32>
    %383 = arith.mulf %374, %326 : vector<8x128xf32>
    %384 = arith.mulf %368, %376 : vector<8x128xf32>
    %385 = arith.addf %383, %384 : vector<8x128xf32>
    %386 = math.tanh %385 : vector<8x128xf32>
    %387 = arith.mulf %382, %386 : vector<8x128xf32>
    %388 = arith.truncf %387 : vector<8x128xf32> to vector<8x128xbf16>
    %c48 = arith.constant 48 : index
    %c0_90 = arith.constant 0 : index
    %389 = vector.load %arg15[%c48, %c0_90] : memref<64x512xf32, #tpu.memory_space<vmem>>, vector<8x512xf32>
    %cst_91 = arith.constant dense<0.000000e+00> : vector<8x512xf32>
    %390 = tpu.matmul %358, %22, %cst_91 {dimension_numbers = #tpu.dot_dimension_numbers<[1], [0], [0], [1], [0, 0, 1, 1], [], []>} : vector<8x128xbf16>, vector<128x512xbf16>, vector<8x512xf32> -> vector<8x512xf32>
    %391 = arith.addf %389, %390 : vector<8x512xf32>
    %392 = vector.extract_strided_slice %391 {offsets = [0, 0], sizes = [8, 128], strides = [1, 1]} : vector<8x512xf32> to vector<8x128xf32>
    %393 = arith.negf %392 : vector<8x128xf32>
    %394 = math.exp %393 : vector<8x128xf32>
    %cst_92 = arith.constant 1.000000e+00 : f32
    %395 = vector.broadcast %cst_92 : f32 to vector<8x128xf32>
    %396 = arith.addf %395, %394 : vector<8x128xf32>
    %397 = arith.divf %395, %396 : vector<8x128xf32>
    %398 = vector.extract_strided_slice %391 {offsets = [0, 128], sizes = [8, 128], strides = [1, 1]} : vector<8x512xf32> to vector<8x128xf32>
    %399 = arith.negf %398 : vector<8x128xf32>
    %400 = math.exp %399 : vector<8x128xf32>
    %cst_93 = arith.constant 1.000000e+00 : f32
    %401 = vector.broadcast %cst_93 : f32 to vector<8x128xf32>
    %402 = arith.addf %401, %400 : vector<8x128xf32>
    %403 = arith.divf %401, %402 : vector<8x128xf32>
    %404 = vector.extract_strided_slice %391 {offsets = [0, 256], sizes = [8, 128], strides = [1, 1]} : vector<8x512xf32> to vector<8x128xf32>
    %405 = math.tanh %404 : vector<8x128xf32>
    %406 = vector.extract_strided_slice %391 {offsets = [0, 384], sizes = [8, 128], strides = [1, 1]} : vector<8x512xf32> to vector<8x128xf32>
    %407 = arith.negf %406 : vector<8x128xf32>
    %408 = math.exp %407 : vector<8x128xf32>
    %cst_94 = arith.constant 1.000000e+00 : f32
    %409 = vector.broadcast %cst_94 : f32 to vector<8x128xf32>
    %410 = arith.addf %409, %408 : vector<8x128xf32>
    %411 = arith.divf %409, %410 : vector<8x128xf32>
    %412 = arith.mulf %403, %355 : vector<8x128xf32>
    %413 = arith.mulf %397, %405 : vector<8x128xf32>
    %414 = arith.addf %412, %413 : vector<8x128xf32>
    %415 = math.tanh %414 : vector<8x128xf32>
    %416 = arith.mulf %411, %415 : vector<8x128xf32>
    %417 = arith.truncf %416 : vector<8x128xf32> to vector<8x128xbf16>
    %cst_95 = arith.constant dense<0.000000e+00> : vector<8x512xf32>
    %418 = tpu.matmul %417, %23, %cst_95 {dimension_numbers = #tpu.dot_dimension_numbers<[1], [0], [0], [1], [0, 0, 1, 1], [], []>} : vector<8x128xbf16>, vector<128x512xbf16>, vector<8x512xf32> -> vector<8x512xf32>
    %cst_96 = arith.constant dense<0.000000e+00> : vector<8x512xf32>
    %419 = tpu.matmul %388, %24, %cst_96 {dimension_numbers = #tpu.dot_dimension_numbers<[1], [0], [0], [1], [0, 0, 1, 1], [], []>} : vector<8x128xbf16>, vector<128x512xbf16>, vector<8x512xf32> -> vector<8x512xf32>
    %420 = arith.addf %418, %419 : vector<8x512xf32>
    %421 = arith.addf %420, %15 : vector<8x512xf32>
    %422 = vector.extract_strided_slice %421 {offsets = [0, 0], sizes = [8, 128], strides = [1, 1]} : vector<8x512xf32> to vector<8x128xf32>
    %423 = arith.negf %422 : vector<8x128xf32>
    %424 = math.exp %423 : vector<8x128xf32>
    %cst_97 = arith.constant 1.000000e+00 : f32
    %425 = vector.broadcast %cst_97 : f32 to vector<8x128xf32>
    %426 = arith.addf %425, %424 : vector<8x128xf32>
    %427 = arith.divf %425, %426 : vector<8x128xf32>
    %428 = vector.extract_strided_slice %421 {offsets = [0, 128], sizes = [8, 128], strides = [1, 1]} : vector<8x512xf32> to vector<8x128xf32>
    %429 = arith.negf %428 : vector<8x128xf32>
    %430 = math.exp %429 : vector<8x128xf32>
    %cst_98 = arith.constant 1.000000e+00 : f32
    %431 = vector.broadcast %cst_98 : f32 to vector<8x128xf32>
    %432 = arith.addf %431, %430 : vector<8x128xf32>
    %433 = arith.divf %431, %432 : vector<8x128xf32>
    %434 = vector.extract_strided_slice %421 {offsets = [0, 256], sizes = [8, 128], strides = [1, 1]} : vector<8x512xf32> to vector<8x128xf32>
    %435 = math.tanh %434 : vector<8x128xf32>
    %436 = vector.extract_strided_slice %421 {offsets = [0, 384], sizes = [8, 128], strides = [1, 1]} : vector<8x512xf32> to vector<8x128xf32>
    %437 = arith.negf %436 : vector<8x128xf32>
    %438 = math.exp %437 : vector<8x128xf32>
    %cst_99 = arith.constant 1.000000e+00 : f32
    %439 = vector.broadcast %cst_99 : f32 to vector<8x128xf32>
    %440 = arith.addf %439, %438 : vector<8x128xf32>
    %441 = arith.divf %439, %440 : vector<8x128xf32>
    %442 = arith.mulf %433, %385 : vector<8x128xf32>
    %443 = arith.mulf %427, %435 : vector<8x128xf32>
    %444 = arith.addf %442, %443 : vector<8x128xf32>
    %445 = math.tanh %444 : vector<8x128xf32>
    %446 = arith.mulf %441, %445 : vector<8x128xf32>
    %447 = arith.truncf %446 : vector<8x128xf32> to vector<8x128xbf16>
    %c56 = arith.constant 56 : index
    %c0_100 = arith.constant 0 : index
    %448 = vector.load %arg15[%c56, %c0_100] : memref<64x512xf32, #tpu.memory_space<vmem>>, vector<8x512xf32>
    %cst_101 = arith.constant dense<0.000000e+00> : vector<8x512xf32>
    %449 = tpu.matmul %417, %22, %cst_101 {dimension_numbers = #tpu.dot_dimension_numbers<[1], [0], [0], [1], [0, 0, 1, 1], [], []>} : vector<8x128xbf16>, vector<128x512xbf16>, vector<8x512xf32> -> vector<8x512xf32>
    %450 = arith.addf %448, %449 : vector<8x512xf32>
    %451 = vector.extract_strided_slice %450 {offsets = [0, 0], sizes = [8, 128], strides = [1, 1]} : vector<8x512xf32> to vector<8x128xf32>
    %452 = arith.negf %451 : vector<8x128xf32>
    %453 = math.exp %452 : vector<8x128xf32>
    %cst_102 = arith.constant 1.000000e+00 : f32
    %454 = vector.broadcast %cst_102 : f32 to vector<8x128xf32>
    %455 = arith.addf %454, %453 : vector<8x128xf32>
    %456 = arith.divf %454, %455 : vector<8x128xf32>
    %457 = vector.extract_strided_slice %450 {offsets = [0, 128], sizes = [8, 128], strides = [1, 1]} : vector<8x512xf32> to vector<8x128xf32>
    %458 = arith.negf %457 : vector<8x128xf32>
    %459 = math.exp %458 : vector<8x128xf32>
    %cst_103 = arith.constant 1.000000e+00 : f32
    %460 = vector.broadcast %cst_103 : f32 to vector<8x128xf32>
    %461 = arith.addf %460, %459 : vector<8x128xf32>
    %462 = arith.divf %460, %461 : vector<8x128xf32>
    %463 = vector.extract_strided_slice %450 {offsets = [0, 256], sizes = [8, 128], strides = [1, 1]} : vector<8x512xf32> to vector<8x128xf32>
    %464 = math.tanh %463 : vector<8x128xf32>
    %465 = vector.extract_strided_slice %450 {offsets = [0, 384], sizes = [8, 128], strides = [1, 1]} : vector<8x512xf32> to vector<8x128xf32>
    %466 = arith.negf %465 : vector<8x128xf32>
    %467 = math.exp %466 : vector<8x128xf32>
    %cst_104 = arith.constant 1.000000e+00 : f32
    %468 = vector.broadcast %cst_104 : f32 to vector<8x128xf32>
    %469 = arith.addf %468, %467 : vector<8x128xf32>
    %470 = arith.divf %468, %469 : vector<8x128xf32>
    %471 = arith.mulf %462, %414 : vector<8x128xf32>
    %472 = arith.mulf %456, %464 : vector<8x128xf32>
    %473 = arith.addf %471, %472 : vector<8x128xf32>
    %474 = math.tanh %473 : vector<8x128xf32>
    %475 = arith.mulf %470, %474 : vector<8x128xf32>
    %476 = arith.truncf %475 : vector<8x128xf32> to vector<8x128xbf16>
    %cst_105 = arith.constant dense<0.000000e+00> : vector<8x512xf32>
    %477 = tpu.matmul %476, %23, %cst_105 {dimension_numbers = #tpu.dot_dimension_numbers<[1], [0], [0], [1], [0, 0, 1, 1], [], []>} : vector<8x128xbf16>, vector<128x512xbf16>, vector<8x512xf32> -> vector<8x512xf32>
    %cst_106 = arith.constant dense<0.000000e+00> : vector<8x512xf32>
    %478 = tpu.matmul %447, %24, %cst_106 {dimension_numbers = #tpu.dot_dimension_numbers<[1], [0], [0], [1], [0, 0, 1, 1], [], []>} : vector<8x128xbf16>, vector<128x512xbf16>, vector<8x512xf32> -> vector<8x512xf32>
    %479 = arith.addf %477, %478 : vector<8x512xf32>
    %480 = arith.addf %479, %15 : vector<8x512xf32>
    %481 = vector.extract_strided_slice %480 {offsets = [0, 0], sizes = [8, 128], strides = [1, 1]} : vector<8x512xf32> to vector<8x128xf32>
    %482 = arith.negf %481 : vector<8x128xf32>
    %483 = math.exp %482 : vector<8x128xf32>
    %cst_107 = arith.constant 1.000000e+00 : f32
    %484 = vector.broadcast %cst_107 : f32 to vector<8x128xf32>
    %485 = arith.addf %484, %483 : vector<8x128xf32>
    %486 = arith.divf %484, %485 : vector<8x128xf32>
    %487 = vector.extract_strided_slice %480 {offsets = [0, 128], sizes = [8, 128], strides = [1, 1]} : vector<8x512xf32> to vector<8x128xf32>
    %488 = arith.negf %487 : vector<8x128xf32>
    %489 = math.exp %488 : vector<8x128xf32>
    %cst_108 = arith.constant 1.000000e+00 : f32
    %490 = vector.broadcast %cst_108 : f32 to vector<8x128xf32>
    %491 = arith.addf %490, %489 : vector<8x128xf32>
    %492 = arith.divf %490, %491 : vector<8x128xf32>
    %493 = vector.extract_strided_slice %480 {offsets = [0, 256], sizes = [8, 128], strides = [1, 1]} : vector<8x512xf32> to vector<8x128xf32>
    %494 = math.tanh %493 : vector<8x128xf32>
    %495 = vector.extract_strided_slice %480 {offsets = [0, 384], sizes = [8, 128], strides = [1, 1]} : vector<8x512xf32> to vector<8x128xf32>
    %496 = arith.negf %495 : vector<8x128xf32>
    %497 = math.exp %496 : vector<8x128xf32>
    %cst_109 = arith.constant 1.000000e+00 : f32
    %498 = vector.broadcast %cst_109 : f32 to vector<8x128xf32>
    %499 = arith.addf %498, %497 : vector<8x128xf32>
    %500 = arith.divf %498, %499 : vector<8x128xf32>
    %501 = arith.mulf %492, %444 : vector<8x128xf32>
    %502 = arith.mulf %486, %494 : vector<8x128xf32>
    %503 = arith.addf %501, %502 : vector<8x128xf32>
    %504 = math.tanh %503 : vector<8x128xf32>
    %505 = arith.mulf %500, %504 : vector<8x128xf32>
    %c0_110 = arith.constant 0 : index
    %c0_111 = arith.constant 0 : index
    %506 = vector.load %arg10[%c0_110, %c0_111] : memref<128x128xf32, #tpu.memory_space<vmem>>, vector<128x128xf32>
    %cst_112 = arith.constant dense<0.000000e+00> : vector<8x128xf32>
    %507 = tpu.matmul %505, %506, %cst_112 {dimension_numbers = #tpu.dot_dimension_numbers<[1], [0], [0], [1], [0, 0, 1, 1], [], []>} : vector<8x128xf32>, vector<128x128xf32>, vector<8x128xf32> -> vector<8x128xf32>
    %c0_113 = arith.constant 0 : index
    %c0_114 = arith.constant 0 : index
    %508 = vector.load %arg11[%c0_113, %c0_114] : memref<1x128xf32, #tpu.memory_space<vmem>>, vector<1x128xf32>
    %509 = vector.broadcast %508 : vector<1x128xf32> to vector<8x128xf32>
    %510 = arith.addf %507, %509 : vector<8x128xf32>
    %511 = arith.negf %510 : vector<8x128xf32>
    %512 = math.exp %511 : vector<8x128xf32>
    %cst_115 = arith.constant 1.000000e+00 : f32
    %513 = vector.broadcast %cst_115 : f32 to vector<8x128xf32>
    %514 = arith.addf %513, %512 : vector<8x128xf32>
    %515 = arith.divf %513, %514 : vector<8x128xf32>
    %c0_116 = arith.constant 0 : index
    %c0_117 = arith.constant 0 : index
    %516 = vector.load %arg12[%c0_116, %c0_117] : memref<8x128xf32, #tpu.memory_space<vmem>>, vector<8x128xf32>
    tpu.vector_store %arg12[%c0_116, %c0_117], %515 {strides = array<i32>} : memref<8x128xf32, #tpu.memory_space<vmem>>, vector<8x128xf32>,
    %c0_118 = arith.constant 0 : index
    %c0_119 = arith.constant 0 : index
    %c0_120 = arith.constant 0 : index
    %517 = vector.load %arg13[%c0_118, %c0_119, %c0_120] : memref<2x8x128xf32, #tpu.memory_space<vmem>>, vector<1x8x128xf32>
    %518 = vector.shape_cast %517 : vector<1x8x128xf32> to vector<8x128xf32>
    %519 = vector.shape_cast %475 : vector<8x128xf32> to vector<1x8x128xf32>
    tpu.vector_store %arg13[%c0_118, %c0_119, %c0_120], %519 {strides = array<i32>} : memref<2x8x128xf32, #tpu.memory_space<vmem>>, vector<1x8x128xf32>,
    %c1_121 = arith.constant 1 : index
    %c0_122 = arith.constant 0 : index
    %c0_123 = arith.constant 0 : index
    %520 = vector.load %arg13[%c1_121, %c0_122, %c0_123] : memref<2x8x128xf32, #tpu.memory_space<vmem>>, vector<1x8x128xf32>
    %521 = vector.shape_cast %520 : vector<1x8x128xf32> to vector<8x128xf32>
    %522 = vector.shape_cast %505 : vector<8x128xf32> to vector<1x8x128xf32>
    tpu.vector_store %arg13[%c1_121, %c0_122, %c0_123], %522 {strides = array<i32>} : memref<2x8x128xf32, #tpu.memory_space<vmem>>, vector<1x8x128xf32>,
    %c0_124 = arith.constant 0 : index
    %c0_125 = arith.constant 0 : index
    %c0_126 = arith.constant 0 : index
    %523 = vector.load %arg14[%c0_124, %c0_125, %c0_126] : memref<2x8x128xf32, #tpu.memory_space<vmem>>, vector<1x8x128xf32>
    %524 = vector.shape_cast %523 : vector<1x8x128xf32> to vector<8x128xf32>
    %525 = vector.shape_cast %473 : vector<8x128xf32> to vector<1x8x128xf32>
    tpu.vector_store %arg14[%c0_124, %c0_125, %c0_126], %525 {strides = array<i32>} : memref<2x8x128xf32, #tpu.memory_space<vmem>>, vector<1x8x128xf32>,
    %c1_127 = arith.constant 1 : index
    %c0_128 = arith.constant 0 : index
    %c0_129 = arith.constant 0 : index
    %526 = vector.load %arg14[%c1_127, %c0_128, %c0_129] : memref<2x8x128xf32, #tpu.memory_space<vmem>>, vector<1x8x128xf32>
    %527 = vector.shape_cast %526 : vector<1x8x128xf32> to vector<8x128xf32>
    %528 = vector.shape_cast %503 : vector<8x128xf32> to vector<1x8x128xf32>
    tpu.vector_store %arg14[%c1_127, %c0_128, %c0_129], %528 {strides = array<i32>} : memref<2x8x128xf32, #tpu.memory_space<vmem>>, vector<1x8x128xf32>,
    return
  }
  func.func @transform_0(%arg0: i32) -> (i32, i32) {
    %c0_i32 = arith.constant 0 : i32
    %c0_i32_0 = arith.constant 0 : i32
    %c0_i32_1 = arith.constant 0 : i32
    return %c0_i32, %c0_i32_0 : i32, i32
  }
  func.func @transform_1(%arg0: i32) -> (i32, i32, i32) {
    %c0_i32 = arith.constant 0 : i32
    %c0_i32_0 = arith.constant 0 : i32
    %c0_i32_1 = arith.constant 0 : i32
    %c0_i32_2 = arith.constant 0 : i32
    return %c0_i32, %c0_i32_0, %c0_i32_1 : i32, i32, i32
  }
  func.func @transform_2(%arg0: i32) -> (i32, i32, i32) {
    %c0_i32 = arith.constant 0 : i32
    %c0_i32_0 = arith.constant 0 : i32
    %c0_i32_1 = arith.constant 0 : i32
    %c0_i32_2 = arith.constant 0 : i32
    return %c0_i32, %c0_i32_0, %c0_i32_1 : i32, i32, i32
  }
  func.func @transform_3(%arg0: i32) -> (i32, i32) {
    %c0_i32 = arith.constant 0 : i32
    %c0_i32_0 = arith.constant 0 : i32
    %c0_i32_1 = arith.constant 0 : i32
    return %c0_i32, %c0_i32_0 : i32, i32
  }
  func.func @transform_4(%arg0: i32) -> (i32, i32) {
    %c0_i32 = arith.constant 0 : i32
    %c0_i32_0 = arith.constant 0 : i32
    %c0_i32_1 = arith.constant 0 : i32
    return %c0_i32, %c0_i32_0 : i32, i32
  }
  func.func @transform_8(%arg0: i32) -> (i32, i32) {
    %c0_i32 = arith.constant 0 : i32
    %c0_i32_0 = arith.constant 0 : i32
    %c0_i32_1 = arith.constant 0 : i32
    return %c0_i32, %c0_i32_0 : i32, i32
  }
  func.func @transform_9(%arg0: i32) -> (i32, i32) {
    %c0_i32 = arith.constant 0 : i32
    %c0_i32_0 = arith.constant 0 : i32
    %c0_i32_1 = arith.constant 0 : i32
    return %c0_i32, %c0_i32_0 : i32, i32
  }
  func.func @transform_10(%arg0: i32) -> (i32, i32) {
    %c0_i32 = arith.constant 0 : i32
    %c0_i32_0 = arith.constant 0 : i32
    %c0_i32_1 = arith.constant 0 : i32
    return %c0_i32, %c0_i32_0 : i32, i32
  }
  func.func @transform_11(%arg0: i32) -> (i32, i32) {
    %c0_i32 = arith.constant 0 : i32
    %c0_i32_0 = arith.constant 0 : i32
    %c0_i32_1 = arith.constant 0 : i32
    return %c0_i32, %c0_i32_0 : i32, i32
  }
  func.func @transform_12(%arg0: i32) -> (i32, i32, i32) {
    %c0_i32 = arith.constant 0 : i32
    %c0_i32_0 = arith.constant 0 : i32
    %c0_i32_1 = arith.constant 0 : i32
    %c0_i32_2 = arith.constant 0 : i32
    return %c0_i32, %c0_i32_0, %c0_i32_1 : i32, i32, i32
  }
  func.func @transform_13(%arg0: i32) -> (i32, i32, i32) {
    %c0_i32 = arith.constant 0 : i32
    %c0_i32_0 = arith.constant 0 : i32
    %c0_i32_1 = arith.constant 0 : i32
    %c0_i32_2 = arith.constant 0 : i32
    return %c0_i32, %c0_i32_0, %c0_i32_1 : i32, i32, i32
  }
}

</mosaic_0001>

<llo_original>
// kernel: tpu_custom_call.1
$region0: #{tpu_custom_call.1}
  #allocation0 [shape = 'u32[]', space=smem, size = 0x4, offset = 0x4, fixed_abs, tag = 'smem constant byte address 0x4 - core index']
  #allocation1 [shape = 'u32[72,128]{1,0:T(1,128)}', space=vmem, size = 0x9000, scoped, tag = 'internal scratch']
  #allocation2 [shape = 'f32[64,512]{1,0:T(8,128)}', space=vmem, size = 0x20000, scoped, tag = 'scratch operand']
  #allocation3 [shape = 'bf16[128,512]{1,0:T(8,128)(2,1)}', space=vmem, size = 0x20000, scoped, tag = 'scratch operand']
  #allocation4 [shape = 'bf16[128,512]{1,0:T(8,128)(2,1)}', space=vmem, size = 0x20000, scoped, tag = 'scratch operand']
  #allocation5 [shape = 'bf16[128,512]{1,0:T(8,128)(2,1)}', space=vmem, size = 0x20000, scoped, tag = 'scratch operand']
  #allocation6 [shape = 's32[3]{0}', space=sflag, size = 0xc, scoped, tag = 'scratch operand']
  #allocation22 [shape = 's32[]', space=sflag, size = 0x4, offset = 0, fixed_abs, tag = 'sflag constant byte address 0x0 - dummy sync flag']
  #allocation23 [shape = 's32[]', space=sflag, size = 0x4, offset = 0, fixed_abs, tag = 'sflag constant byte address 0x0 - dummy sync flag']
  #allocation24 [shape = 'u32[]', space=smem, size = 0x4, offset = 0x44, fixed_abs, tag = 'smem constant byte address 0x44 - assertion arg 0']
  #allocation25 [shape = 'u32[]', space=smem, size = 0x4, offset = 0x48, fixed_abs, tag = 'smem constant byte address 0x48 - assertion arg 1']
  #allocation26 [shape = 's32[]', space=sflag, size = 0x4, offset = 0, fixed_abs, tag = 'sflag constant byte address 0x0 - dummy sync flag']
  #allocation27 [shape = 's32[]', space=sflag, size = 0x4, offset = 0, fixed_abs, tag = 'sflag constant byte address 0x0 - dummy sync flag']
  #allocation28 [shape = 's32[]', space=sflag, size = 0x4, offset = 0, fixed_abs, tag = 'sflag constant byte address 0x0 - dummy sync flag']
  #allocation29 [shape = 's32[]', space=sflag, size = 0x4, offset = 0, fixed_abs, tag = 'sflag constant byte address 0x0 - dummy sync flag']
  %s0 = inlined_call_operand.hbm [shape: bf16[64,128], index: 0, kind: input, shape index: {}]
  %s1 = inlined_call_operand.hbm [shape: f32[2,8,128], index: 1, kind: input, shape index: {}]
  %s2 = inlined_call_operand.hbm [shape: f32[2,8,128], index: 2, kind: input, shape index: {}]
  %s3 = inlined_call_operand.hbm [shape: bf16[128,512], index: 3, kind: input, shape index: {}]
  %s4 = inlined_call_operand.hbm [shape: f32[1,512], index: 4, kind: input, shape index: {}]
  %s5 = inlined_call_operand.hbm [shape: bf16[128,512], index: 5, kind: input, shape index: {}]
  %s6 = inlined_call_operand.hbm [shape: bf16[128,512], index: 6, kind: input, shape index: {}]
  %s7 = inlined_call_operand.hbm [shape: bf16[128,512], index: 7, kind: input, shape index: {}]
  %s8 = inlined_call_operand.vmem [shape: f32[1,512], index: 8, kind: input, shape index: {}]
  %s9 = inlined_call_operand.hbm [shape: f32[128,128], index: 9, kind: input, shape index: {}]
  %s10 = inlined_call_operand.vmem [shape: f32[1,128], index: 10, kind: input, shape index: {}]
  %s11 = inlined_call_operand.hbm [shape: f32[8,128], index: 11, kind: output, shape index: {0}]
  %s12 = inlined_call_operand.hbm [shape: f32[2,8,128], index: 12, kind: output, shape index: {1}]
  %s13 = inlined_call_operand.hbm [shape: f32[2,8,128], index: 13, kind: output, shape index: {2}]
  %14 = xla_tuple %s11, %s12, %s13
  %s15 = sld [smem:[#allocation0]]
  $region94: #{tpu_custom_call.1} parent=0
    _
  %s17 = ssub.s32 1, %s15
  %s18 = scalar_select 0, %s17, %s15
  $region1: #{tpu_custom_call.1} parent=0
    #allocation7 [shape = 'u8[16384]{0}', space=vmem, size = 0x4000, scoped, tag = 'input window, operand 0, single buffered']
    #allocation8 [shape = 's32[1]{0}', space=sflag, size = 0x4, scoped, tag = 'scoped memory for tpu_custom_call.1']
    #allocation9 [shape = 's32[1]{0}', space=sflag, size = 0x4, scoped, tag = 'scoped memory for tpu_custom_call.1']
    #allocation10 [shape = 'u8[8192]{0}', space=vmem, size = 0x2000, scoped, tag = 'input window, operand 1, single buffered']
    #allocation11 [shape = 's32[1]{0}', space=sflag, size = 0x4, scoped, tag = 'scoped memory for tpu_custom_call.1']
    #allocation12 [shape = 'u8[8192]{0}', space=vmem, size = 0x2000, scoped, tag = 'input window, operand 2, single buffered']
    #allocation13 [shape = 'u8[131072]{0}', space=vmem, size = 0x20000, scoped, tag = 'input window, operand 3, single buffered']
    #allocation14 [shape = 's32[1]{0}', space=sflag, size = 0x4, scoped, tag = 'scoped memory for tpu_custom_call.1']
    #allocation15 [shape = 'u8[2048]{0}', space=vmem, size = 0x800, scoped, tag = 'input window, operand 4, single buffered']
    #allocation16 [shape = 'u8[65536]{0}', space=vmem, size = 0x10000, scoped, tag = 'input window, operand 9, single buffered']
    #allocation17 [shape = 's32[1]{0}', space=sflag, size = 0x4, scoped, tag = 'scoped memory for tpu_custom_call.1']
    #allocation18 [shape = 'u8[4096]{0}', space=vmem, size = 0x1000, scoped, tag = 'output window, operand 0, single buffered']
    #allocation19 [shape = 'u8[8192]{0}', space=vmem, size = 0x2000, scoped, tag = 'output window, operand 1, single buffered']
    #allocation20 [shape = 's32[1]{0}', space=sflag, size = 0x4, scoped, tag = 'scoped memory for tpu_custom_call.1']
    #allocation21 [shape = 'u8[8192]{0}', space=vmem, size = 0x2000, scoped, tag = 'output window, operand 2, single buffered']
    %19 = vsyncpa [#allocation8], 0
    %20 = vsyncpa [#allocation11], 0
    %21 = vsyncpa [#allocation14], 0
    %22 = vsyncpa [#allocation17], 0
    %23 = vsyncpa [#allocation9], 0
    %24 = vsyncpa [#allocation20], 0
    // Predicated region
    $region2: #{tpu_custom_call.1} parent=1 // pred_check
      _
    $region3: #{tpu_custom_call.1} parent=1 // pred_check_branch
      %26 = sbr.rel (0) target = $region5
    $region4: #{tpu_custom_call.1} parent=1 // pred_region
      %28 = vsyncadd [#allocation8], 0
      %s29 = sshll.u32 %s0, 4
      %s30 = int_to_ptr.hbm [resolvable:$true] %s29
      %s31 = sshll.u32 [#allocation7], 4
      %s32 = int_to_ptr.vmem [resolvable:$true] %s31
      %37 = dma.hbm_to_vmem [thread:$0]  %s30, 512, %s32, [#allocation8], 64, 64, 4
    $region5: #{tpu_custom_call.1} parent=1 // pred_fallthru
      _
    // Predicated region
    $region6: #{tpu_custom_call.1} parent=1 // pred_check
      _
    $region7: #{tpu_custom_call.1} parent=1 // pred_check_branch
      %39 = sbr.rel (0) target = $region9
    $region8: #{tpu_custom_call.1} parent=1 // pred_region
      %41 = vsyncadd [#allocation11], 0
      %s42 = sshll.u32 %s1, 4
      %s43 = int_to_ptr.hbm [resolvable:$true] %s42
      %s44 = sshll.u32 [#allocation10], 4
      %s45 = int_to_ptr.vmem [resolvable:$true] %s44
      %50 = dma.hbm_to_vmem [thread:$0]  %s43, 256, %s45, [#allocation11], 128, 128, 8
    $region9: #{tpu_custom_call.1} parent=1 // pred_fallthru
      _
    // Predicated region
    $region10: #{tpu_custom_call.1} parent=1 // pred_check
      _
    $region11: #{tpu_custom_call.1} parent=1 // pred_check_branch
      %52 = sbr.rel (0) target = $region13
    $region12: #{tpu_custom_call.1} parent=1 // pred_region
      %54 = vsyncadd [#allocation11], 0
      %s55 = sshll.u32 %s2, 4
      %s56 = int_to_ptr.hbm [resolvable:$true] %s55
      %s57 = sshll.u32 [#allocation12], 4
      %s58 = int_to_ptr.vmem [resolvable:$true] %s57
      %63 = dma.hbm_to_vmem [thread:$0]  %s56, 256, %s58, [#allocation11], 128, 128, 8
    $region13: #{tpu_custom_call.1} parent=1 // pred_fallthru
      _
    // Predicated region
    $region14: #{tpu_custom_call.1} parent=1 // pred_check
      _
    $region15: #{tpu_custom_call.1} parent=1 // pred_check_branch
      %65 = sbr.rel (0) target = $region17
    $region16: #{tpu_custom_call.1} parent=1 // pred_region
      %67 = vsyncadd [#allocation14], 0
      %s68 = sshll.u32 %s3, 4
      %s69 = int_to_ptr.hbm [resolvable:$true] %s68
      %s70 = sshll.u32 [#allocation13], 4
      %s71 = int_to_ptr.vmem [resolvable:$true] %s70
      %76 = dma.hbm_to_vmem [thread:$0]  %s69, 4096, %s71, [#allocation14], 256, 256, 16
    $region17: #{tpu_custom_call.1} parent=1 // pred_fallthru
      _
    // Predicated region
    $region18: #{tpu_custom_call.1} parent=1 // pred_check
      _
    $region19: #{tpu_custom_call.1} parent=1 // pred_check_branch
      %78 = sbr.rel (0) target = $region21
    $region20: #{tpu_custom_call.1} parent=1 // pred_region
      %80 = vsyncadd [#allocation14], 0
      %s82 = sshll.u32 %s4, 4
      %s83 = int_to_ptr.hbm [resolvable:$true] %s82
      %s84 = sshll.u32 [#allocation15], 4
      %s85 = int_to_ptr.vmem [resolvable:$true] %s84
      %87 = dma.hbm_to_vmem [thread:$0]  %s83, 64, %s85, [#allocation14]
    $region21: #{tpu_custom_call.1} parent=1 // pred_fallthru
      _
    // Predicated region
    $region22: #{tpu_custom_call.1} parent=1 // pred_check
      _
    $region23: #{tpu_custom_call.1} parent=1 // pred_check_branch
      %89 = sbr.rel (0) target = $region25
    $region24: #{tpu_custom_call.1} parent=1 // pred_region
      _
    $region25: #{tpu_custom_call.1} parent=1 // pred_fallthru
      _
    // Predicated region
    $region26: #{tpu_custom_call.1} parent=1 // pred_check
      _
    $region27: #{tpu_custom_call.1} parent=1 // pred_check_branch
      %91 = sbr.rel (0) target = $region29
    $region28: #{tpu_custom_call.1} parent=1 // pred_region
      %93 = vsyncadd [#allocation17], 0
      %s94 = sshll.u32 %s9, 4
      %s95 = int_to_ptr.hbm [resolvable:$true] %s94
      %s96 = sshll.u32 [#allocation16], 4
      %s97 = int_to_ptr.vmem [resolvable:$true] %s96
      %102 = dma.hbm_to_vmem [thread:$0]  %s95, 2048, %s97, [#allocation17], 128, 128, 8
    $region29: #{tpu_custom_call.1} parent=1 // pred_fallthru
      _
    // Predicated region
    $region30: #{tpu_custom_call.1} parent=1 // pred_check
      _
    $region31: #{tpu_custom_call.1} parent=1 // pred_check_branch
      %104 = sbr.rel (0) target = $region33
    $region32: #{tpu_custom_call.1} parent=1 // pred_region
      _
    $region33: #{tpu_custom_call.1} parent=1 // pred_fallthru
      _
    // Predicated region
    $region34: #{tpu_custom_call.1} parent=1 // pred_check
      _
    $region35: #{tpu_custom_call.1} parent=1 // pred_check_branch
      %106 = sbr.rel (0) target = $region37
    $region36: #{tpu_custom_call.1} parent=1 // pred_region
      %108 = dma.done [#allocation8], 512
    $region37: #{tpu_custom_call.1} parent=1 // pred_fallthru
      _
    // Predicated region
    $region38: #{tpu_custom_call.1} parent=1 // pred_check
      _
    $region39: #{tpu_custom_call.1} parent=1 // pred_check_branch
      %110 = sbr.rel (0) target = $region41
    $region40: #{tpu_custom_call.1} parent=1 // pred_region
      %112 = dma.done [#allocation11], 256
    $region41: #{tpu_custom_call.1} parent=1 // pred_fallthru
      _
    // Predicated region
    $region42: #{tpu_custom_call.1} parent=1 // pred_check
      _
    $region43: #{tpu_custom_call.1} parent=1 // pred_check_branch
      %114 = sbr.rel (0) target = $region45
    $region44: #{tpu_custom_call.1} parent=1 // pred_region
      %116 = dma.done [#allocation11], 256
    $region45: #{tpu_custom_call.1} parent=1 // pred_fallthru
      _
    // Predicated region
    $region46: #{tpu_custom_call.1} parent=1 // pred_check
      _
    $region47: #{tpu_custom_call.1} parent=1 // pred_check_branch
      %118 = sbr.rel (0) target = $region49
    $region48: #{tpu_custom_call.1} parent=1 // pred_region
      %120 = dma.done [#allocation14], 4096
    $region49: #{tpu_custom_call.1} parent=1 // pred_fallthru
      _
    // Predicated region
    $region50: #{tpu_custom_call.1} parent=1 // pred_check
      _
    $region51: #{tpu_custom_call.1} parent=1 // pred_check_branch
      %122 = sbr.rel (0) target = $region53
    $region52: #{tpu_custom_call.1} parent=1 // pred_region
      %124 = dma.done [#allocation14], 64
    $region53: #{tpu_custom_call.1} parent=1 // pred_fallthru
      _
    // Predicated region
    $region54: #{tpu_custom_call.1} parent=1 // pred_check
      _
    $region55: #{tpu_custom_call.1} parent=1 // pred_check_branch
      %126 = sbr.rel (0) target = $region57
    $region56: #{tpu_custom_call.1} parent=1 // pred_region
      %128 = dma.done [#allocation17], 2048
    $region57: #{tpu_custom_call.1} parent=1 // pred_fallthru
      _
    // Predicated region
    $region58: #{tpu_custom_call.1} parent=1 // pred_check
      _
    $region59: #{tpu_custom_call.1} parent=1 // pred_check_branch
      %130 = sbr.rel target = $region61
    $region60: #{tpu_custom_call.1} parent=1 // pred_region
      %131 = sst [smem:[#allocation24]] [#allocation23]
      %132 = sst [smem:[#allocation25]] [#allocation22]
    $region61: #{tpu_custom_call.1} parent=1 // pred_fallthru
      _
    %134 = shalt.err (0)
    %s136 = sshll.u32 %s5, 4
    %s137 = int_to_ptr.hbm [resolvable:$true] %s136
    %s138 = sshll.u32 [#allocation3], 4
    %s139 = int_to_ptr.vmem [resolvable:$true] %s138
    %141 = dma.hbm_to_vmem [thread:$0]  %s137, 4096, %s139, [#allocation6]
    %s142 = scalar_lea.sflag [#allocation6], 1
    // Predicated region
    $region62: #{tpu_custom_call.1} parent=1 // pred_check
      _
    $region63: #{tpu_custom_call.1} parent=1 // pred_check_branch
      %144 = sbr.rel target = $region65
    $region64: #{tpu_custom_call.1} parent=1 // pred_region
      %145 = sst [smem:[#allocation24]] [#allocation27]
      %146 = sst [smem:[#allocation25]] [#allocation26]
    $region65: #{tpu_custom_call.1} parent=1 // pred_fallthru
      _
    %148 = shalt.err (0)
    %s150 = sshll.u32 %s6, 4
    %s151 = int_to_ptr.hbm [resolvable:$true] %s150
    %s152 = sshll.u32 [#allocation4], 4
    %s153 = int_to_ptr.vmem [resolvable:$true] %s152
    %155 = dma.hbm_to_vmem [thread:$0]  %s151, 4096, %s153, %s142
    %s156 = scalar_lea.sflag [#allocation6], 2
    // Predicated region
    $region66: #{tpu_custom_call.1} parent=1 // pred_check
      _
    $region67: #{tpu_custom_call.1} parent=1 // pred_check_branch
      %158 = sbr.rel target = $region69
    $region68: #{tpu_custom_call.1} parent=1 // pred_region
      %159 = sst [smem:[#allocation24]] [#allocation29]
      %160 = sst [smem:[#allocation25]] [#allocation28]
    $region69: #{tpu_custom_call.1} parent=1 // pred_fallthru
      _
    %162 = shalt.err (0)
    %s164 = sshll.u32 %s7, 4
    %s165 = int_to_ptr.hbm [resolvable:$true] %s164
    %s166 = sshll.u32 [#allocation5], 4
    %s167 = int_to_ptr.vmem [resolvable:$true] %s166
    %169 = dma.hbm_to_vmem [thread:$0]  %s165, 4096, %s167, %s156
    %v170 = vld [vmem:[#allocation7] sm:$0xf]
    %v171 = vld [vmem:[#allocation7 + $0x4] sm:$0xf]
    %v172 = vld [vmem:[#allocation7 + $0x8] sm:$0xf]
    %v173 = vld [vmem:[#allocation7 + $0xc] sm:$0xf]
    %v174 = vld [vmem:[#allocation7 + $0x10] sm:$0xf]
    %v175 = vld [vmem:[#allocation7 + $0x14] sm:$0xf]
    %v176 = vld [vmem:[#allocation7 + $0x18] sm:$0xf]
    %v177 = vld [vmem:[#allocation7 + $0x1c] sm:$0xf]
    %v178 = vld [vmem:[#allocation13] sm:$0xff]
    %v179 = vld [vmem:[#allocation13 + $0x8] sm:$0xff]
    %v180 = vld [vmem:[#allocation13 + $0x10] sm:$0xff]
    %v181 = vld [vmem:[#allocation13 + $0x18] sm:$0xff]
    %v182 = vld [vmem:[#allocation13 + $0x20] sm:$0xff]
    %v183 = vld [vmem:[#allocation13 + $0x28] sm:$0xff]
    %v184 = vld [vmem:[#allocation13 + $0x30] sm:$0xff]
    %v185 = vld [vmem:[#allocation13 + $0x38] sm:$0xff]
    %v186 = vld [vmem:[#allocation13 + $0x40] sm:$0xff]
    %v187 = vld [vmem:[#allocation13 + $0x48] sm:$0xff]
    %v188 = vld [vmem:[#allocation13 + $0x50] sm:$0xff]
    %v189 = vld [vmem:[#allocation13 + $0x58] sm:$0xff]
    %v190 = vld [vmem:[#allocation13 + $0x60] sm:$0xff]
    %v191 = vld [vmem:[#allocation13 + $0x68] sm:$0xff]
    %v192 = vld [vmem:[#allocation13 + $0x70] sm:$0xff]
    %v193 = vld [vmem:[#allocation13 + $0x78] sm:$0xff]
    %v194 = vld [vmem:[#allocation13 + $0x80] sm:$0xff]
    %v195 = vld [vmem:[#allocation13 + $0x88] sm:$0xff]
    %v196 = vld [vmem:[#allocation13 + $0x90] sm:$0xff]
    %v197 = vld [vmem:[#allocation13 + $0x98] sm:$0xff]
    %v198 = vld [vmem:[#allocation13 + $0xa0] sm:$0xff]
    %v199 = vld [vmem:[#allocation13 + $0xa8] sm:$0xff]
    %v200 = vld [vmem:[#allocation13 + $0xb0] sm:$0xff]
    %v201 = vld [vmem:[#allocation13 + $0xb8] sm:$0xff]
    %v202 = vld [vmem:[#allocation13 + $0xc0] sm:$0xff]
    %v203 = vld [vmem:[#allocation13 + $0xc8] sm:$0xff]
    %v204 = vld [vmem:[#allocation13 + $0xd0] sm:$0xff]
    %v205 = vld [vmem:[#allocation13 + $0xd8] sm:$0xff]
    %v206 = vld [vmem:[#allocation13 + $0xe0] sm:$0xff]
    %v207 = vld [vmem:[#allocation13 + $0xe8] sm:$0xff]
    %v208 = vld [vmem:[#allocation13 + $0xf0] sm:$0xff]
    %v209 = vld [vmem:[#allocation13 + $0xf8] sm:$0xff]
    %v210 = vld [vmem:[#allocation15] sm:$0xf]
    %v212 = vperm.slane %v210, 0
    %v213 = vperm.slane %v210, 1
    %v214 = vperm.slane %v210, 2
    %v215 = vperm.slane %v210, 3
    %v228 = vunpack.c.l.b16 %v170
    %v229 = vunpack.c.l.b16 %v171
    %v230 = vunpack.c.l.b16 %v172
    %v231 = vunpack.c.l.b16 %v173
    %v232 = vunpack.c.l.b16 %v174
    %v233 = vunpack.c.l.b16 %v175
    %v234 = vunpack.c.l.b16 %v176
    %v235 = vunpack.c.l.b16 %v177
    %v236 = vpack.c.b16 %v229, %v228
    %v237 = vpack.c.b16 %v231, %v230
    %v238 = vpack.c.b16 %v233, %v232
    %v239 = vpack.c.b16 %v235, %v234
    %v276 = vunpack.c.l.b16 %v178
    %v277 = vunpack.c.h.b16 %v178
    %v278 = vunpack.c.l.b16 %v179
    %v279 = vunpack.c.h.b16 %v179
    %v280 = vunpack.c.l.b16 %v180
    %v281 = vunpack.c.h.b16 %v180
    %v282 = vunpack.c.l.b16 %v181
    %v283 = vunpack.c.h.b16 %v181
    %v284 = vunpack.c.l.b16 %v182
    %v285 = vunpack.c.h.b16 %v182
    %v286 = vunpack.c.l.b16 %v183
    %v287 = vunpack.c.h.b16 %v183
    %v288 = vunpack.c.l.b16 %v184
    %v289 = vunpack.c.h.b16 %v184
    %v290 = vunpack.c.l.b16 %v185
    %v291 = vunpack.c.h.b16 %v185
    %v292 = vunpack.c.l.b16 %v186
    %v293 = vunpack.c.h.b16 %v186
    %v294 = vunpack.c.l.b16 %v187
    %v295 = vunpack.c.h.b16 %v187
    %v296 = vunpack.c.l.b16 %v188
    %v297 = vunpack.c.h.b16 %v188
    %v298 = vunpack.c.l.b16 %v189
    %v299 = vunpack.c.h.b16 %v189
    %v300 = vunpack.c.l.b16 %v190
    %v301 = vunpack.c.h.b16 %v190
    %v302 = vunpack.c.l.b16 %v191
    %v303 = vunpack.c.h.b16 %v191
    %v304 = vunpack.c.l.b16 %v192
    %v305 = vunpack.c.h.b16 %v192
    %v306 = vunpack.c.l.b16 %v193
    %v307 = vunpack.c.h.b16 %v193
    %v308 = vunpack.c.l.b16 %v194
    %v309 = vunpack.c.h.b16 %v194
    %v310 = vunpack.c.l.b16 %v195
    %v311 = vunpack.c.h.b16 %v195
    %v312 = vunpack.c.l.b16 %v196
    %v313 = vunpack.c.h.b16 %v196
    %v314 = vunpack.c.l.b16 %v197
    %v315 = vunpack.c.h.b16 %v197
    %v316 = vunpack.c.l.b16 %v198
    %v317 = vunpack.c.h.b16 %v198
    %v318 = vunpack.c.l.b16 %v199
    %v319 = vunpack.c.h.b16 %v199
    %v320 = vunpack.c.l.b16 %v200
    %v321 = vunpack.c.h.b16 %v200
    %v322 = vunpack.c.l.b16 %v201
    %v323 = vunpack.c.h.b16 %v201
    %v324 = vunpack.c.l.b16 %v202
    %v325 = vunpack.c.h.b16 %v202
    %v326 = vunpack.c.l.b16 %v203
    %v327 = vunpack.c.h.b16 %v203
    %v328 = vunpack.c.l.b16 %v204
    %v329 = vunpack.c.h.b16 %v204
    %v330 = vunpack.c.l.b16 %v205
    %v331 = vunpack.c.h.b16 %v205
    %v332 = vunpack.c.l.b16 %v206
    %v333 = vunpack.c.h.b16 %v206
    %v334 = vunpack.c.l.b16 %v207
    %v335 = vunpack.c.h.b16 %v207
    %v336 = vunpack.c.l.b16 %v208
    %v337 = vunpack.c.h.b16 %v208
    %v338 = vunpack.c.l.b16 %v209
    %v339 = vunpack.c.h.b16 %v209
    %v340 = vpack.c.b16 %v280, %v276
    %v341 = vpack.c.b16 %v281, %v277
    %v342 = vpack.c.b16 %v282, %v278
    %v343 = vpack.c.b16 %v283, %v279
    %v344 = vpack.c.b16 %v288, %v284
    %v345 = vpack.c.b16 %v289, %v285
    %v346 = vpack.c.b16 %v290, %v286
    %v347 = vpack.c.b16 %v291, %v287
    %v348 = vpack.c.b16 %v296, %v292
    %v349 = vpack.c.b16 %v297, %v293
    %v350 = vpack.c.b16 %v298, %v294
    %v351 = vpack.c.b16 %v299, %v295
    %v352 = vpack.c.b16 %v304, %v300
    %v353 = vpack.c.b16 %v305, %v301
    %v354 = vpack.c.b16 %v306, %v302
    %v355 = vpack.c.b16 %v307, %v303
    %v356 = vpack.c.b16 %v312, %v308
    %v357 = vpack.c.b16 %v313, %v309
    %v358 = vpack.c.b16 %v314, %v310
    %v359 = vpack.c.b16 %v315, %v311
    %v360 = vpack.c.b16 %v320, %v316
    %v361 = vpack.c.b16 %v321, %v317
    %v362 = vpack.c.b16 %v322, %v318
    %v363 = vpack.c.b16 %v323, %v319
    %v364 = vpack.c.b16 %v328, %v324
    %v365 = vpack.c.b16 %v329, %v325
    %v366 = vpack.c.b16 %v330, %v326
    %v367 = vpack.c.b16 %v331, %v327
    %v368 = vpack.c.b16 %v336, %v332
    %v369 = vpack.c.b16 %v337, %v333
    %v370 = vpack.c.b16 %v338, %v334
    %v371 = vpack.c.b16 %v339, %v335
    %404 = vmatpush.bf16.msra.mxu0 %v368
    %405 = vmatpush.bf16.msra.mxu0 %v364
    %406 = vmatpush.bf16.msra.mxu0 %v360
    %407 = vmatpush.bf16.msra.mxu0 %v356
    %408 = vmatpush.bf16.msra.mxu0 %v352
    %409 = vmatpush.bf16.msra.mxu0 %v348
    %410 = vmatpush.bf16.msra.mxu0 %v344
    %411 = vmatpush.bf16.msra.mxu0 %v340
    %412 = vmatmul.bf16.gmra.mxu0 %v236
    %v413 = vpop.f32.mrf.mxu0
    %v414 = vadd.f32 %v212, %v413
    %v415 = vpop.f32.mrf.mxu0
    %v416 = vadd.f32 %v212, %v415
    %417 = vmatmul.bf16.gmra.mxu0 %v237
    %v418 = vpop.f32.mrf.mxu0
    %v419 = vadd.f32 %v212, %v418
    %v420 = vpop.f32.mrf.mxu0
    %v421 = vadd.f32 %v212, %v420
    %422 = vmatmul.bf16.gmra.mxu0 %v238
    %v423 = vpop.f32.mrf.mxu0
    %v424 = vadd.f32 %v212, %v423
    %v425 = vpop.f32.mrf.mxu0
    %v426 = vadd.f32 %v212, %v425
    %427 = vmatmul.bf16.gmra.mxu0 %v239
    %v428 = vpop.f32.mrf.mxu0
    %v429 = vadd.f32 %v212, %v428
    %v430 = vpop.f32.mrf.mxu0
    %v431 = vadd.f32 %v212, %v430
    %432 = vdwg.mxu0
    %433 = vmatpush.bf16.msra.mxu0 %v369
    %434 = vmatpush.bf16.msra.mxu0 %v365
    %435 = vmatpush.bf16.msra.mxu0 %v361
    %436 = vmatpush.bf16.msra.mxu0 %v357
    %437 = vmatpush.bf16.msra.mxu0 %v353
    %438 = vmatpush.bf16.msra.mxu0 %v349
    %439 = vmatpush.bf16.msra.mxu0 %v345
    %440 = vmatpush.bf16.msra.mxu0 %v341
    %441 = vmatmul.bf16.gmra.mxu0 %v236
    %v442 = vpop.f32.mrf.mxu0
    %v443 = vadd.f32 %v213, %v442
    %v444 = vpop.f32.mrf.mxu0
    %v445 = vadd.f32 %v213, %v444
    %446 = vmatmul.bf16.gmra.mxu0 %v237
    %v447 = vpop.f32.mrf.mxu0
    %v448 = vadd.f32 %v213, %v447
    %v449 = vpop.f32.mrf.mxu0
    %v450 = vadd.f32 %v213, %v449
    %451 = vmatmul.bf16.gmra.mxu0 %v238
    %v452 = vpop.f32.mrf.mxu0
    %v453 = vadd.f32 %v213, %v452
    %v454 = vpop.f32.mrf.mxu0
    %v455 = vadd.f32 %v213, %v454
    %456 = vmatmul.bf16.gmra.mxu0 %v239
    %v457 = vpop.f32.mrf.mxu0
    %v458 = vadd.f32 %v213, %v457
    %v459 = vpop.f32.mrf.mxu0
    %v460 = vadd.f32 %v213, %v459
    %461 = vdwg.mxu0
    %462 = vmatpush.bf16.msra.mxu0 %v370
    %463 = vmatpush.bf16.msra.mxu0 %v366
    %464 = vmatpush.bf16.msra.mxu0 %v362
    %465 = vmatpush.bf16.msra.mxu0 %v358
    %466 = vmatpush.bf16.msra.mxu0 %v354
    %467 = vmatpush.bf16.msra.mxu0 %v350
    %468 = vmatpush.bf16.msra.mxu0 %v346
    %469 = vmatpush.bf16.msra.mxu0 %v342
    %470 = vmatmul.bf16.gmra.mxu0 %v236
    %v471 = vpop.f32.mrf.mxu0
    %v472 = vadd.f32 %v214, %v471
    %v473 = vpop.f32.mrf.mxu0
    %v474 = vadd.f32 %v214, %v473
    %475 = vmatmul.bf16.gmra.mxu0 %v237
    %v476 = vpop.f32.mrf.mxu0
    %v477 = vadd.f32 %v214, %v476
    %v478 = vpop.f32.mrf.mxu0
    %v479 = vadd.f32 %v214, %v478
    %480 = vmatmul.bf16.gmra.mxu0 %v238
    %v481 = vpop.f32.mrf.mxu0
    %v482 = vadd.f32 %v214, %v481
    %v483 = vpop.f32.mrf.mxu0
    %v484 = vadd.f32 %v214, %v483
    %485 = vmatmul.bf16.gmra.mxu0 %v239
    %v486 = vpop.f32.mrf.mxu0
    %v487 = vadd.f32 %v214, %v486
    %v488 = vpop.f32.mrf.mxu0
    %v489 = vadd.f32 %v214, %v488
    %490 = vdwg.mxu0
    %491 = vmatpush.bf16.msra.mxu0 %v371
    %492 = vmatpush.bf16.msra.mxu0 %v367
    %493 = vmatpush.bf16.msra.mxu0 %v363
    %494 = vmatpush.bf16.msra.mxu0 %v359
    %495 = vmatpush.bf16.msra.mxu0 %v355
    %496 = vmatpush.bf16.msra.mxu0 %v351
    %497 = vmatpush.bf16.msra.mxu0 %v347
    %498 = vmatpush.bf16.msra.mxu0 %v343
    %499 = vmatmul.bf16.gmra.mxu0 %v236
    %v500 = vpop.f32.mrf.mxu0
    %v501 = vadd.f32 %v215, %v500
    %v502 = vpop.f32.mrf.mxu0
    %v503 = vadd.f32 %v215, %v502
    %504 = vmatmul.bf16.gmra.mxu0 %v237
    %v505 = vpop.f32.mrf.mxu0
    %v506 = vadd.f32 %v215, %v505
    %v507 = vpop.f32.mrf.mxu0
    %v508 = vadd.f32 %v215, %v507
    %509 = vmatmul.bf16.gmra.mxu0 %v238
    %v510 = vpop.f32.mrf.mxu0
    %v511 = vadd.f32 %v215, %v510
    %v512 = vpop.f32.mrf.mxu0
    %v513 = vadd.f32 %v215, %v512
    %514 = vmatmul.bf16.gmra.mxu0 %v239
    %v515 = vpop.f32.mrf.mxu0
    %v516 = vadd.f32 %v215, %v515
    %v517 = vpop.f32.mrf.mxu0
    %v518 = vadd.f32 %v215, %v517
    %519 = vdwg.mxu0
    %520 = vst [vmem:[#allocation2] sm:$0xff] %v414
    %521 = vst [vmem:[#allocation2 + $0x8] sm:$0xff] %v443
    %522 = vst [vmem:[#allocation2 + $0x10] sm:$0xff] %v472
    %523 = vst [vmem:[#allocation2 + $0x18] sm:$0xff] %v501
    %524 = vst [vmem:[#allocation2 + $0x20] sm:$0xff] %v416
    %525 = vst [vmem:[#allocation2 + $0x28] sm:$0xff] %v445
    %526 = vst [vmem:[#allocation2 + $0x30] sm:$0xff] %v474
    %527 = vst [vmem:[#allocation2 + $0x38] sm:$0xff] %v503
    %528 = vst [vmem:[#allocation2 + $0x40] sm:$0xff] %v419
    %529 = vst [vmem:[#allocation2 + $0x48] sm:$0xff] %v448
    %530 = vst [vmem:[#allocation2 + $0x50] sm:$0xff] %v477
    %531 = vst [vmem:[#allocation2 + $0x58] sm:$0xff] %v506
    %532 = vst [vmem:[#allocation2 + $0x60] sm:$0xff] %v421
    %533 = vst [vmem:[#allocation2 + $0x68] sm:$0xff] %v450
    %534 = vst [vmem:[#allocation2 + $0x70] sm:$0xff] %v479
    %535 = vst [vmem:[#allocation2 + $0x78] sm:$0xff] %v508
    %536 = vst [vmem:[#allocation2 + $0x80] sm:$0xff] %v424
    %537 = vst [vmem:[#allocation2 + $0x88] sm:$0xff] %v453
    %538 = vst [vmem:[#allocation2 + $0x90] sm:$0xff] %v482
    %539 = vst [vmem:[#allocation2 + $0x98] sm:$0xff] %v511
    %540 = vst [vmem:[#allocation2 + $0xa0] sm:$0xff] %v426
    %541 = vst [vmem:[#allocation2 + $0xa8] sm:$0xff] %v455
    %542 = vst [vmem:[#allocation2 + $0xb0] sm:$0xff] %v484
    %543 = vst [vmem:[#allocation2 + $0xb8] sm:$0xff] %v513
    %544 = vst [vmem:[#allocation2 + $0xc0] sm:$0xff] %v429
    %545 = vst [vmem:[#allocation2 + $0xc8] sm:$0xff] %v458
    %546 = vst [vmem:[#allocation2 + $0xd0] sm:$0xff] %v487
    %547 = vst [vmem:[#allocation2 + $0xd8] sm:$0xff] %v516
    %548 = vst [vmem:[#allocation2 + $0xe0] sm:$0xff] %v431
    %549 = vst [vmem:[#allocation2 + $0xe8] sm:$0xff] %v460
    %550 = vst [vmem:[#allocation2 + $0xf0] sm:$0xff] %v489
    %551 = vst [vmem:[#allocation2 + $0xf8] sm:$0xff] %v518
    %v552 = vld [vmem:[%s8] sm:$0xf]
    %v554 = vperm.slane %v552, 0
    %v555 = vperm.slane %v552, 1
    %v556 = vperm.slane %v552, 2
    %v557 = vperm.slane %v552, 3
    %s562 = smul.u32 4, 16
    %s563 = smul.u32 %s562, 4
    %s564 = sshll.u32 %s563, 4
    %565 = dma.done [#allocation6], %s564
    %s566 = sshll.u32 %s563, 4
    %567 = dma.done %s142, %s566
    %s568 = sshll.u32 %s563, 4
    %569 = dma.done %s156, %s568
    %v570 = vld [vmem:[#allocation3] sm:$0xff]
    %v571 = vld [vmem:[#allocation3 + $0x8] sm:$0xff]
    %v572 = vld [vmem:[#allocation3 + $0x10] sm:$0xff]
    %v573 = vld [vmem:[#allocation3 + $0x18] sm:$0xff]
    %v574 = vld [vmem:[#allocation3 + $0x20] sm:$0xff]
    %v575 = vld [vmem:[#allocation3 + $0x28] sm:$0xff]
    %v576 = vld [vmem:[#allocation3 + $0x30] sm:$0xff]
    %v577 = vld [vmem:[#allocation3 + $0x38] sm:$0xff]
    %v578 = vld [vmem:[#allocation3 + $0x40] sm:$0xff]
    %v579 = vld [vmem:[#allocation3 + $0x48] sm:$0xff]
    %v580 = vld [vmem:[#allocation3 + $0x50] sm:$0xff]
    %v581 = vld [vmem:[#allocation3 + $0x58] sm:$0xff]
    %v582 = vld [vmem:[#allocation3 + $0x60] sm:$0xff]
    %v583 = vld [vmem:[#allocation3 + $0x68] sm:$0xff]
    %v584 = vld [vmem:[#allocation3 + $0x70] sm:$0xff]
    %v585 = vld [vmem:[#allocation3 + $0x78] sm:$0xff]
    %v586 = vld [vmem:[#allocation3 + $0x80] sm:$0xff]
    %v587 = vld [vmem:[#allocation3 + $0x88] sm:$0xff]
    %v588 = vld [vmem:[#allocation3 + $0x90] sm:$0xff]
    %v589 = vld [vmem:[#allocation3 + $0x98] sm:$0xff]
    %v590 = vld [vmem:[#allocation3 + $0xa0] sm:$0xff]
    %v591 = vld [vmem:[#allocation3 + $0xa8] sm:$0xff]
    %v592 = vld [vmem:[#allocation3 + $0xb0] sm:$0xff]
    %v593 = vld [vmem:[#allocation3 + $0xb8] sm:$0xff]
    %v594 = vld [vmem:[#allocation3 + $0xc0] sm:$0xff]
    %v595 = vld [vmem:[#allocation3 + $0xc8] sm:$0xff]
    %v596 = vld [vmem:[#allocation3 + $0xd0] sm:$0xff]
    %v597 = vld [vmem:[#allocation3 + $0xd8] sm:$0xff]
    %v598 = vld [vmem:[#allocation3 + $0xe0] sm:$0xff]
    %v599 = vld [vmem:[#allocation3 + $0xe8] sm:$0xff]
    %v600 = vld [vmem:[#allocation3 + $0xf0] sm:$0xff]
    %v601 = vld [vmem:[#allocation3 + $0xf8] sm:$0xff]
    %v602 = vld [vmem:[#allocation4] sm:$0xff]
    %v603 = vld [vmem:[#allocation4 + $0x8] sm:$0xff]
    %v604 = vld [vmem:[#allocation4 + $0x10] sm:$0xff]
    %v605 = vld [vmem:[#allocation4 + $0x18] sm:$0xff]
    %v606 = vld [vmem:[#allocation4 + $0x20] sm:$0xff]
    %v607 = vld [vmem:[#allocation4 + $0x28] sm:$0xff]
    %v608 = vld [vmem:[#allocation4 + $0x30] sm:$0xff]
    %v609 = vld [vmem:[#allocation4 + $0x38] sm:$0xff]
    %v610 = vld [vmem:[#allocation4 + $0x40] sm:$0xff]
    %v611 = vld [vmem:[#allocation4 + $0x48] sm:$0xff]
    %v612 = vld [vmem:[#allocation4 + $0x50] sm:$0xff]
    %v613 = vld [vmem:[#allocation4 + $0x58] sm:$0xff]
    %v614 = vld [vmem:[#allocation4 + $0x60] sm:$0xff]
    %v615 = vld [vmem:[#allocation4 + $0x68] sm:$0xff]
    %v616 = vld [vmem:[#allocation4 + $0x70] sm:$0xff]
    %v617 = vld [vmem:[#allocation4 + $0x78] sm:$0xff]
    %v618 = vld [vmem:[#allocation4 + $0x80] sm:$0xff]
    %v619 = vld [vmem:[#allocation4 + $0x88] sm:$0xff]
    %v620 = vld [vmem:[#allocation4 + $0x90] sm:$0xff]
    %v621 = vld [vmem:[#allocation4 + $0x98] sm:$0xff]
    %v622 = vld [vmem:[#allocation4 + $0xa0] sm:$0xff]
    %v623 = vld [vmem:[#allocation4 + $0xa8] sm:$0xff]
    %v624 = vld [vmem:[#allocation4 + $0xb0] sm:$0xff]
    %v625 = vld [vmem:[#allocation4 + $0xb8] sm:$0xff]
    %v626 = vld [vmem:[#allocation4 + $0xc0] sm:$0xff]
    %v627 = vld [vmem:[#allocation4 + $0xc8] sm:$0xff]
    %v628 = vld [vmem:[#allocation4 + $0xd0] sm:$0xff]
    %v629 = vld [vmem:[#allocation4 + $0xd8] sm:$0xff]
    %v630 = vld [vmem:[#allocation4 + $0xe0] sm:$0xff]
    %v631 = vld [vmem:[#allocation4 + $0xe8] sm:$0xff]
    %v632 = vld [vmem:[#allocation4 + $0xf0] sm:$0xff]
    %v633 = vld [vmem:[#allocation4 + $0xf8] sm:$0xff]
    %v634 = vld [vmem:[#allocation5] sm:$0xff]
    %v635 = vld [vmem:[#allocation5 + $0x8] sm:$0xff]
    %v636 = vld [vmem:[#allocation5 + $0x10] sm:$0xff]
    %v637 = vld [vmem:[#allocation5 + $0x18] sm:$0xff]
    %v638 = vld [vmem:[#allocation5 + $0x20] sm:$0xff]
    %v639 = vld [vmem:[#allocation5 + $0x28] sm:$0xff]
    %v640 = vld [vmem:[#allocation5 + $0x30] sm:$0xff]
    %v641 = vld [vmem:[#allocation5 + $0x38] sm:$0xff]
    %v642 = vld [vmem:[#allocation5 + $0x40] sm:$0xff]
    %v643 = vld [vmem:[#allocation5 + $0x48] sm:$0xff]
    %v644 = vld [vmem:[#allocation5 + $0x50] sm:$0xff]
    %v645 = vld [vmem:[#allocation5 + $0x58] sm:$0xff]
    %v646 = vld [vmem:[#allocation5 + $0x60] sm:$0xff]
    %v647 = vld [vmem:[#allocation5 + $0x68] sm:$0xff]
    %v648 = vld [vmem:[#allocation5 + $0x70] sm:$0xff]
    %v649 = vld [vmem:[#allocation5 + $0x78] sm:$0xff]
    %v650 = vld [vmem:[#allocation5 + $0x80] sm:$0xff]
    %v651 = vld [vmem:[#allocation5 + $0x88] sm:$0xff]
    %v652 = vld [vmem:[#allocation5 + $0x90] sm:$0xff]
    %v653 = vld [vmem:[#allocation5 + $0x98] sm:$0xff]
    %v654 = vld [vmem:[#allocation5 + $0xa0] sm:$0xff]
    %v655 = vld [vmem:[#allocation5 + $0xa8] sm:$0xff]
    %v656 = vld [vmem:[#allocation5 + $0xb0] sm:$0xff]
    %v657 = vld [vmem:[#allocation5 + $0xb8] sm:$0xff]
    %v658 = vld [vmem:[#allocation5 + $0xc0] sm:$0xff]
    %v659 = vld [vmem:[#allocation5 + $0xc8] sm:$0xff]
    %v660 = vld [vmem:[#allocation5 + $0xd0] sm:$0xff]
    %v661 = vld [vmem:[#allocation5 + $0xd8] sm:$0xff]
    %v662 = vld [vmem:[#allocation5 + $0xe0] sm:$0xff]
    %v663 = vld [vmem:[#allocation5 + $0xe8] sm:$0xff]
    %v664 = vld [vmem:[#allocation5 + $0xf0] sm:$0xff]
    %v665 = vld [vmem:[#allocation5 + $0xf8] sm:$0xff]
    %v666 = vld [vmem:[#allocation10] sm:$0xff]
    %v667 = vld [vmem:[#allocation12] sm:$0xff]
    %s668 = scalar_lea.vmem [#allocation10], 8
    %v669 = vld [vmem:[%s668] sm:$0xff]
    %s670 = scalar_lea.vmem [#allocation12], 8
    %v671 = vld [vmem:[%s670] sm:$0xff]
    %v672 = vpack.c.bf16 %v666, %v666
    %v673 = vpack.c.bf16 %v669, %v669
    %v674 = vld [vmem:[#allocation2] sm:$0xff]
    %v675 = vld [vmem:[#allocation2 + $0x8] sm:$0xff]
    %v676 = vld [vmem:[#allocation2 + $0x10] sm:$0xff]
    %v677 = vld [vmem:[#allocation2 + $0x18] sm:$0xff]
    %v710 = vunpack.c.l.b16 %v570
    %v711 = vunpack.c.h.b16 %v570
    %v712 = vunpack.c.l.b16 %v571
    %v713 = vunpack.c.h.b16 %v571
    %v714 = vunpack.c.l.b16 %v572
    %v715 = vunpack.c.h.b16 %v572
    %v716 = vunpack.c.l.b16 %v573
    %v717 = vunpack.c.h.b16 %v573
    %v718 = vunpack.c.l.b16 %v574
    %v719 = vunpack.c.h.b16 %v574
    %v720 = vunpack.c.l.b16 %v575
    %v721 = vunpack.c.h.b16 %v575
    %v722 = vunpack.c.l.b16 %v576
    %v723 = vunpack.c.h.b16 %v576
    %v724 = vunpack.c.l.b16 %v577
    %v725 = vunpack.c.h.b16 %v577
    %v726 = vunpack.c.l.b16 %v578
    %v727 = vunpack.c.h.b16 %v578
    %v728 = vunpack.c.l.b16 %v579
    %v729 = vunpack.c.h.b16 %v579
    %v730 = vunpack.c.l.b16 %v580
    %v731 = vunpack.c.h.b16 %v580
    %v732 = vunpack.c.l.b16 %v581
    %v733 = vunpack.c.h.b16 %v581
    %v734 = vunpack.c.l.b16 %v582
    %v735 = vunpack.c.h.b16 %v582
    %v736 = vunpack.c.l.b16 %v583
    %v737 = vunpack.c.h.b16 %v583
    %v738 = vunpack.c.l.b16 %v584
    %v739 = vunpack.c.h.b16 %v584
    %v740 = vunpack.c.l.b16 %v585
    %v741 = vunpack.c.h.b16 %v585
    %v742 = vunpack.c.l.b16 %v586
    %v743 = vunpack.c.h.b16 %v586
    %v744 = vunpack.c.l.b16 %v587
    %v745 = vunpack.c.h.b16 %v587
    %v746 = vunpack.c.l.b16 %v588
    %v747 = vunpack.c.h.b16 %v588
    %v748 = vunpack.c.l.b16 %v589
    %v749 = vunpack.c.h.b16 %v589
    %v750 = vunpack.c.l.b16 %v590
    %v751 = vunpack.c.h.b16 %v590
    %v752 = vunpack.c.l.b16 %v591
    %v753 = vunpack.c.h.b16 %v591
    %v754 = vunpack.c.l.b16 %v592
    %v755 = vunpack.c.h.b16 %v592
    %v756 = vunpack.c.l.b16 %v593
    %v757 = vunpack.c.h.b16 %v593
    %v758 = vunpack.c.l.b16 %v594
    %v759 = vunpack.c.h.b16 %v594
    %v760 = vunpack.c.l.b16 %v595
    %v761 = vunpack.c.h.b16 %v595
    %v762 = vunpack.c.l.b16 %v596
    %v763 = vunpack.c.h.b16 %v596
    %v764 = vunpack.c.l.b16 %v597
    %v765 = vunpack.c.h.b16 %v597
    %v766 = vunpack.c.l.b16 %v598
    %v767 = vunpack.c.h.b16 %v598
    %v768 = vunpack.c.l.b16 %v599
    %v769 = vunpack.c.h.b16 %v599
    %v770 = vunpack.c.l.b16 %v600
    %v771 = vunpack.c.h.b16 %v600
    %v772 = vunpack.c.l.b16 %v601
    %v773 = vunpack.c.h.b16 %v601
    %v774 = vpack.c.b16 %v714, %v710
    %v775 = vpack.c.b16 %v715, %v711
    %v776 = vpack.c.b16 %v716, %v712
    %v777 = vpack.c.b16 %v717, %v713
    %v778 = vpack.c.b16 %v722, %v718
    %v779 = vpack.c.b16 %v723, %v719
    %v780 = vpack.c.b16 %v724, %v720
    %v781 = vpack.c.b16 %v725, %v721
    %v782 = vpack.c.b16 %v730, %v726
    %v783 = vpack.c.b16 %v731, %v727
    %v784 = vpack.c.b16 %v732, %v728
    %v785 = vpack.c.b16 %v733, %v729
    %v786 = vpack.c.b16 %v738, %v734
    %v787 = vpack.c.b16 %v739, %v735
    %v788 = vpack.c.b16 %v740, %v736
    %v789 = vpack.c.b16 %v741, %v737
    %v790 = vpack.c.b16 %v746, %v742
    %v791 = vpack.c.b16 %v747, %v743
    %v792 = vpack.c.b16 %v748, %v744
    %v793 = vpack.c.b16 %v749, %v745
    %v794 = vpack.c.b16 %v754, %v750
    %v795 = vpack.c.b16 %v755, %v751
    %v796 = vpack.c.b16 %v756, %v752
    %v797 = vpack.c.b16 %v757, %v753
    %v798 = vpack.c.b16 %v762, %v758
    %v799 = vpack.c.b16 %v763, %v759
    %v800 = vpack.c.b16 %v764, %v760
    %v801 = vpack.c.b16 %v765, %v761
    %v802 = vpack.c.b16 %v770, %v766
    %v803 = vpack.c.b16 %v771, %v767
    %v804 = vpack.c.b16 %v772, %v768
    %v805 = vpack.c.b16 %v773, %v769
    %838 = vmatpush.bf16.msra.mxu0 %v802
    %839 = vmatpush.bf16.msra.mxu0 %v798
    %840 = vmatpush.bf16.msra.mxu0 %v794
    %841 = vmatpush.bf16.msra.mxu0 %v790
    %842 = vmatpush.bf16.msra.mxu0 %v786
    %843 = vmatpush.bf16.msra.mxu0 %v782
    %844 = vmatpush.bf16.msra.mxu0 %v778
    %845 = vmatpush.bf16.msra.mxu0 %v774
    %846 = vmatmul.bf16.gmra.mxu0 %v672
    %v847 = vpop.f32.mrf.mxu0
    %v848 = vadd.f32 0.0, %v847
    %v849 = vpop.f32.mrf.mxu0
    %850 = vdwg.mxu0
    %851 = vmatpush.bf16.msra.mxu0 %v803
    %852 = vmatpush.bf16.msra.mxu0 %v799
    %853 = vmatpush.bf16.msra.mxu0 %v795
    %854 = vmatpush.bf16.msra.mxu0 %v791
    %855 = vmatpush.bf16.msra.mxu0 %v787
    %856 = vmatpush.bf16.msra.mxu0 %v783
    %857 = vmatpush.bf16.msra.mxu0 %v779
    %858 = vmatpush.bf16.msra.mxu0 %v775
    %859 = vmatmul.bf16.gmra.mxu0 %v672
    %v860 = vpop.f32.mrf.mxu0
    %v861 = vadd.f32 0.0, %v860
    %v862 = vpop.f32.mrf.mxu0
    %863 = vdwg.mxu0
    %864 = vmatpush.bf16.msra.mxu0 %v804
    %865 = vmatpush.bf16.msra.mxu0 %v800
    %866 = vmatpush.bf16.msra.mxu0 %v796
    %867 = vmatpush.bf16.msra.mxu0 %v792
    %868 = vmatpush.bf16.msra.mxu0 %v788
    %869 = vmatpush.bf16.msra.mxu0 %v784
    %870 = vmatpush.bf16.msra.mxu0 %v780
    %871 = vmatpush.bf16.msra.mxu0 %v776
    %872 = vmatmul.bf16.gmra.mxu0 %v672
    %v873 = vpop.f32.mrf.mxu0
    %v874 = vadd.f32 0.0, %v873
    %v875 = vpop.f32.mrf.mxu0
    %876 = vdwg.mxu0
    %877 = vmatpush.bf16.msra.mxu0 %v805
    %878 = vmatpush.bf16.msra.mxu0 %v801
    %879 = vmatpush.bf16.msra.mxu0 %v797
    %880 = vmatpush.bf16.msra.mxu0 %v793
    %881 = vmatpush.bf16.msra.mxu0 %v789
    %882 = vmatpush.bf16.msra.mxu0 %v785
    %883 = vmatpush.bf16.msra.mxu0 %v781
    %884 = vmatpush.bf16.msra.mxu0 %v777
    %885 = vmatmul.bf16.gmra.mxu0 %v672
    %v886 = vpop.f32.mrf.mxu0
    %v887 = vadd.f32 0.0, %v886
    %v888 = vpop.f32.mrf.mxu0
    %889 = vdwg.mxu0
    %v890 = vadd.f32 %v674, %v848
    %v891 = vadd.f32 %v675, %v861
    %v892 = vadd.f32 %v676, %v874
    %v893 = vadd.f32 %v677, %v887
    %v894 = vxor.u32 %v890, 2147483648
    %v895 = vmul.f32 %v894, 1.442695
    %v896 = vpow.pop %v895
    %v897 = vadd.f32 %v896, 1.0
    %v898 = vrcp.pop %v897
    %v899 = vmul.f32 %v897, %v898
    %v900 = vsub.f32 1.0, %v899
    %v901 = vmul.f32 %v898, %v900
    %v902 = vadd.f32 %v898, %v901
    %vm903 = vweird.f32 %v897
    %vm904 = vweird.f32 %v898
    %vm905 = vmor %vm903, %vm904
    %v906 = vsel %vm905, %v898, %v902
    %v907 = vand.u32 2147483647, %v897
    %vm908 = vcmp.eq.f32.partialorder %v907, 8.507059e+37
    %v909 = vand.u32 %v897, 2147483648
    %v910 = vor.u32 1.1754944e-38, %v909
    %v911 = vsel %vm908, %v910, %v906
    %v912 = vmul.f32 1.0, %v911
    %v913 = vxor.u32 %v891, 2147483648
    %v914 = vmul.f32 %v913, 1.442695
    %v915 = vpow.pop %v914
    %v916 = vadd.f32 %v915, 1.0
    %v917 = vrcp.pop %v916
    %v918 = vmul.f32 %v916, %v917
    %v919 = vsub.f32 1.0, %v918
    %v920 = vmul.f32 %v917, %v919
    %v921 = vadd.f32 %v917, %v920
    %vm922 = vweird.f32 %v916
    %vm923 = vweird.f32 %v917
    %vm924 = vmor %vm922, %vm923
    %v925 = vsel %vm924, %v917, %v921
    %v926 = vand.u32 2147483647, %v916
    %vm927 = vcmp.eq.f32.partialorder %v926, 8.507059e+37
    %v928 = vand.u32 %v916, 2147483648
    %v929 = vor.u32 1.1754944e-38, %v928
    %v930 = vsel %vm927, %v929, %v925
    %v931 = vmul.f32 1.0, %v930
    %v932 = vtanh.pop %v892
    %v933 = vxor.u32 %v893, 2147483648
    %v934 = vmul.f32 %v933, 1.442695
    %v935 = vpow.pop %v934
    %v936 = vadd.f32 %v935, 1.0
    %v937 = vrcp.pop %v936
    %v938 = vmul.f32 %v936, %v937
    %v939 = vsub.f32 1.0, %v938
    %v940 = vmul.f32 %v937, %v939
    %v941 = vadd.f32 %v937, %v940
    %vm942 = vweird.f32 %v936
    %vm943 = vweird.f32 %v937
    %vm944 = vmor %vm942, %vm943
    %v945 = vsel %vm944, %v937, %v941
    %v946 = vand.u32 2147483647, %v936
    %vm947 = vcmp.eq.f32.partialorder %v946, 8.507059e+37
    %v948 = vand.u32 %v936, 2147483648
    %v949 = vor.u32 1.1754944e-38, %v948
    %v950 = vsel %vm947, %v949, %v945
    %v951 = vmul.f32 1.0, %v950
    %v952 = vmul.f32 %v931, %v667
    %v953 = vmul.f32 %v912, %v932
    %v954 = vadd.f32 %v952, %v953
    %v955 = vtanh.pop %v954
    %v956 = vmul.f32 %v951, %v955
    %v957 = vpack.c.bf16 %v956, %v956
    %v990 = vunpack.c.l.b16 %v634
    %v991 = vunpack.c.h.b16 %v634
    %v992 = vunpack.c.l.b16 %v635
    %v993 = vunpack.c.h.b16 %v635
    %v994 = vunpack.c.l.b16 %v636
    %v995 = vunpack.c.h.b16 %v636
    %v996 = vunpack.c.l.b16 %v637
    %v997 = vunpack.c.h.b16 %v637
    %v998 = vunpack.c.l.b16 %v638
    %v999 = vunpack.c.h.b16 %v638
    %v1000 = vunpack.c.l.b16 %v639
    %v1001 = vunpack.c.h.b16 %v639
    %v1002 = vunpack.c.l.b16 %v640
    %v1003 = vunpack.c.h.b16 %v640
    %v1004 = vunpack.c.l.b16 %v641
    %v1005 = vunpack.c.h.b16 %v641
    %v1006 = vunpack.c.l.b16 %v642
    %v1007 = vunpack.c.h.b16 %v642
    %v1008 = vunpack.c.l.b16 %v643
    %v1009 = vunpack.c.h.b16 %v643
    %v1010 = vunpack.c.l.b16 %v644
    %v1011 = vunpack.c.h.b16 %v644
    %v1012 = vunpack.c.l.b16 %v645
    %v1013 = vunpack.c.h.b16 %v645
    %v1014 = vunpack.c.l.b16 %v646
    %v1015 = vunpack.c.h.b16 %v646
    %v1016 = vunpack.c.l.b16 %v647
    %v1017 = vunpack.c.h.b16 %v647
    %v1018 = vunpack.c.l.b16 %v648
    %v1019 = vunpack.c.h.b16 %v648
    %v1020 = vunpack.c.l.b16 %v649
    %v1021 = vunpack.c.h.b16 %v649
    %v1022 = vunpack.c.l.b16 %v650
    %v1023 = vunpack.c.h.b16 %v650
    %v1024 = vunpack.c.l.b16 %v651
    %v1025 = vunpack.c.h.b16 %v651
    %v1026 = vunpack.c.l.b16 %v652
    %v1027 = vunpack.c.h.b16 %v652
    %v1028 = vunpack.c.l.b16 %v653
    %v1029 = vunpack.c.h.b16 %v653
    %v1030 = vunpack.c.l.b16 %v654
    %v1031 = vunpack.c.h.b16 %v654
    %v1032 = vunpack.c.l.b16 %v655
    %v1033 = vunpack.c.h.b16 %v655
    %v1034 = vunpack.c.l.b16 %v656
    %v1035 = vunpack.c.h.b16 %v656
    %v1036 = vunpack.c.l.b16 %v657
    %v1037 = vunpack.c.h.b16 %v657
    %v1038 = vunpack.c.l.b16 %v658
    %v1039 = vunpack.c.h.b16 %v658
    %v1040 = vunpack.c.l.b16 %v659
    %v1041 = vunpack.c.h.b16 %v659
    %v1042 = vunpack.c.l.b16 %v660
    %v1043 = vunpack.c.h.b16 %v660
    %v1044 = vunpack.c.l.b16 %v661
    %v1045 = vunpack.c.h.b16 %v661
    %v1046 = vunpack.c.l.b16 %v662
    %v1047 = vunpack.c.h.b16 %v662
    %v1048 = vunpack.c.l.b16 %v663
    %v1049 = vunpack.c.h.b16 %v663
    %v1050 = vunpack.c.l.b16 %v664
    %v1051 = vunpack.c.h.b16 %v664
    %v1052 = vunpack.c.l.b16 %v665
    %v1053 = vunpack.c.h.b16 %v665
    %v1054 = vpack.c.b16 %v994, %v990
    %v1055 = vpack.c.b16 %v995, %v991
    %v1056 = vpack.c.b16 %v996, %v992
    %v1057 = vpack.c.b16 %v997, %v993
    %v1058 = vpack.c.b16 %v1002, %v998
    %v1059 = vpack.c.b16 %v1003, %v999
    %v1060 = vpack.c.b16 %v1004, %v1000
    %v1061 = vpack.c.b16 %v1005, %v1001
    %v1062 = vpack.c.b16 %v1010, %v1006
    %v1063 = vpack.c.b16 %v1011, %v1007
    %v1064 = vpack.c.b16 %v1012, %v1008
    %v1065 = vpack.c.b16 %v1013, %v1009
    %v1066 = vpack.c.b16 %v1018, %v1014
    %v1067 = vpack.c.b16 %v1019, %v1015
    %v1068 = vpack.c.b16 %v1020, %v1016
    %v1069 = vpack.c.b16 %v1021, %v1017
    %v1070 = vpack.c.b16 %v1026, %v1022
    %v1071 = vpack.c.b16 %v1027, %v1023
    %v1072 = vpack.c.b16 %v1028, %v1024
    %v1073 = vpack.c.b16 %v1029, %v1025
    %v1074 = vpack.c.b16 %v1034, %v1030
    %v1075 = vpack.c.b16 %v1035, %v1031
    %v1076 = vpack.c.b16 %v1036, %v1032
    %v1077 = vpack.c.b16 %v1037, %v1033
    %v1078 = vpack.c.b16 %v1042, %v1038
    %v1079 = vpack.c.b16 %v1043, %v1039
    %v1080 = vpack.c.b16 %v1044, %v1040
    %v1081 = vpack.c.b16 %v1045, %v1041
    %v1082 = vpack.c.b16 %v1050, %v1046
    %v1083 = vpack.c.b16 %v1051, %v1047
    %v1084 = vpack.c.b16 %v1052, %v1048
    %v1085 = vpack.c.b16 %v1053, %v1049
    %1118 = vmatpush.bf16.msra.mxu0 %v1082
    %1119 = vmatpush.bf16.msra.mxu0 %v1078
    %1120 = vmatpush.bf16.msra.mxu0 %v1074
    %1121 = vmatpush.bf16.msra.mxu0 %v1070
    %1122 = vmatpush.bf16.msra.mxu0 %v1066
    %1123 = vmatpush.bf16.msra.mxu0 %v1062
    %1124 = vmatpush.bf16.msra.mxu0 %v1058
    %1125 = vmatpush.bf16.msra.mxu0 %v1054
    %1126 = vmatmul.bf16.gmra.mxu0 %v673
    %v1127 = vpop.f32.mrf.mxu0
    %v1128 = vadd.f32 0.0, %v1127
    %v1129 = vpop.f32.mrf.mxu0
    %1130 = vdwg.mxu0
    %1131 = vmatpush.bf16.msra.mxu0 %v1083
    %1132 = vmatpush.bf16.msra.mxu0 %v1079
    %1133 = vmatpush.bf16.msra.mxu0 %v1075
    %1134 = vmatpush.bf16.msra.mxu0 %v1071
    %1135 = vmatpush.bf16.msra.mxu0 %v1067
    %1136 = vmatpush.bf16.msra.mxu0 %v1063
    %1137 = vmatpush.bf16.msra.mxu0 %v1059
    %1138 = vmatpush.bf16.msra.mxu0 %v1055
    %1139 = vmatmul.bf16.gmra.mxu0 %v673
    %v1140 = vpop.f32.mrf.mxu0
    %v1141 = vadd.f32 0.0, %v1140
    %v1142 = vpop.f32.mrf.mxu0
    %1143 = vdwg.mxu0
    %1144 = vmatpush.bf16.msra.mxu0 %v1084
    %1145 = vmatpush.bf16.msra.mxu0 %v1080
    %1146 = vmatpush.bf16.msra.mxu0 %v1076
    %1147 = vmatpush.bf16.msra.mxu0 %v1072
    %1148 = vmatpush.bf16.msra.mxu0 %v1068
    %1149 = vmatpush.bf16.msra.mxu0 %v1064
    %1150 = vmatpush.bf16.msra.mxu0 %v1060
    %1151 = vmatpush.bf16.msra.mxu0 %v1056
    %1152 = vmatmul.bf16.gmra.mxu0 %v673
    %v1153 = vpop.f32.mrf.mxu0
    %v1154 = vadd.f32 0.0, %v1153
    %v1155 = vpop.f32.mrf.mxu0
    %1156 = vdwg.mxu0
    %1157 = vmatpush.bf16.msra.mxu0 %v1085
    %1158 = vmatpush.bf16.msra.mxu0 %v1081
    %1159 = vmatpush.bf16.msra.mxu0 %v1077
    %1160 = vmatpush.bf16.msra.mxu0 %v1073
    %1161 = vmatpush.bf16.msra.mxu0 %v1069
    %1162 = vmatpush.bf16.msra.mxu0 %v1065
    %1163 = vmatpush.bf16.msra.mxu0 %v1061
    %1164 = vmatpush.bf16.msra.mxu0 %v1057
    %1165 = vmatmul.bf16.gmra.mxu0 %v673
    %v1166 = vpop.f32.mrf.mxu0
    %v1167 = vadd.f32 0.0, %v1166
    %v1168 = vpop.f32.mrf.mxu0
    %1169 = vdwg.mxu0
    %v1202 = vunpack.c.l.b16 %v602
    %v1203 = vunpack.c.h.b16 %v602
    %v1204 = vunpack.c.l.b16 %v603
    %v1205 = vunpack.c.h.b16 %v603
    %v1206 = vunpack.c.l.b16 %v604
    %v1207 = vunpack.c.h.b16 %v604
    %v1208 = vunpack.c.l.b16 %v605
    %v1209 = vunpack.c.h.b16 %v605
    %v1210 = vunpack.c.l.b16 %v606
    %v1211 = vunpack.c.h.b16 %v606
    %v1212 = vunpack.c.l.b16 %v607
    %v1213 = vunpack.c.h.b16 %v607
    %v1214 = vunpack.c.l.b16 %v608
    %v1215 = vunpack.c.h.b16 %v608
    %v1216 = vunpack.c.l.b16 %v609
    %v1217 = vunpack.c.h.b16 %v609
    %v1218 = vunpack.c.l.b16 %v610
    %v1219 = vunpack.c.h.b16 %v610
    %v1220 = vunpack.c.l.b16 %v611
    %v1221 = vunpack.c.h.b16 %v611
    %v1222 = vunpack.c.l.b16 %v612
    %v1223 = vunpack.c.h.b16 %v612
    %v1224 = vunpack.c.l.b16 %v613
    %v1225 = vunpack.c.h.b16 %v613
    %v1226 = vunpack.c.l.b16 %v614
    %v1227 = vunpack.c.h.b16 %v614
    %v1228 = vunpack.c.l.b16 %v615
    %v1229 = vunpack.c.h.b16 %v615
    %v1230 = vunpack.c.l.b16 %v616
    %v1231 = vunpack.c.h.b16 %v616
    %v1232 = vunpack.c.l.b16 %v617
    %v1233 = vunpack.c.h.b16 %v617
    %v1234 = vunpack.c.l.b16 %v618
    %v1235 = vunpack.c.h.b16 %v618
    %v1236 = vunpack.c.l.b16 %v619
    %v1237 = vunpack.c.h.b16 %v619
    %v1238 = vunpack.c.l.b16 %v620
    %v1239 = vunpack.c.h.b16 %v620
    %v1240 = vunpack.c.l.b16 %v621
    %v1241 = vunpack.c.h.b16 %v621
    %v1242 = vunpack.c.l.b16 %v622
    %v1243 = vunpack.c.h.b16 %v622
    %v1244 = vunpack.c.l.b16 %v623
    %v1245 = vunpack.c.h.b16 %v623
    %v1246 = vunpack.c.l.b16 %v624
    %v1247 = vunpack.c.h.b16 %v624
    %v1248 = vunpack.c.l.b16 %v625
    %v1249 = vunpack.c.h.b16 %v625
    %v1250 = vunpack.c.l.b16 %v626
    %v1251 = vunpack.c.h.b16 %v626
    %v1252 = vunpack.c.l.b16 %v627
    %v1253 = vunpack.c.h.b16 %v627
    %v1254 = vunpack.c.l.b16 %v628
    %v1255 = vunpack.c.h.b16 %v628
    %v1256 = vunpack.c.l.b16 %v629
    %v1257 = vunpack.c.h.b16 %v629
    %v1258 = vunpack.c.l.b16 %v630
    %v1259 = vunpack.c.h.b16 %v630
    %v1260 = vunpack.c.l.b16 %v631
    %v1261 = vunpack.c.h.b16 %v631
    %v1262 = vunpack.c.l.b16 %v632
    %v1263 = vunpack.c.h.b16 %v632
    %v1264 = vunpack.c.l.b16 %v633
    %v1265 = vunpack.c.h.b16 %v633
    %v1266 = vpack.c.b16 %v1206, %v1202
    %v1267 = vpack.c.b16 %v1207, %v1203
    %v1268 = vpack.c.b16 %v1208, %v1204
    %v1269 = vpack.c.b16 %v1209, %v1205
    %v1270 = vpack.c.b16 %v1214, %v1210
    %v1271 = vpack.c.b16 %v1215, %v1211
    %v1272 = vpack.c.b16 %v1216, %v1212
    %v1273 = vpack.c.b16 %v1217, %v1213
    %v1274 = vpack.c.b16 %v1222, %v1218
    %v1275 = vpack.c.b16 %v1223, %v1219
    %v1276 = vpack.c.b16 %v1224, %v1220
    %v1277 = vpack.c.b16 %v1225, %v1221
    %v1278 = vpack.c.b16 %v1230, %v1226
    %v1279 = vpack.c.b16 %v1231, %v1227
    %v1280 = vpack.c.b16 %v1232, %v1228
    %v1281 = vpack.c.b16 %v1233, %v1229
    %v1282 = vpack.c.b16 %v1238, %v1234
    %v1283 = vpack.c.b16 %v1239, %v1235
    %v1284 = vpack.c.b16 %v1240, %v1236
    %v1285 = vpack.c.b16 %v1241, %v1237
    %v1286 = vpack.c.b16 %v1246, %v1242
    %v1287 = vpack.c.b16 %v1247, %v1243
    %v1288 = vpack.c.b16 %v1248, %v1244
    %v1289 = vpack.c.b16 %v1249, %v1245
    %v1290 = vpack.c.b16 %v1254, %v1250
    %v1291 = vpack.c.b16 %v1255, %v1251
    %v1292 = vpack.c.b16 %v1256, %v1252
    %v1293 = vpack.c.b16 %v1257, %v1253
    %v1294 = vpack.c.b16 %v1262, %v1258
    %v1295 = vpack.c.b16 %v1263, %v1259
    %v1296 = vpack.c.b16 %v1264, %v1260
    %v1297 = vpack.c.b16 %v1265, %v1261
    %1330 = vmatpush.bf16.msra.mxu0 %v1294
    %1331 = vmatpush.bf16.msra.mxu0 %v1290
    %1332 = vmatpush.bf16.msra.mxu0 %v1286
    %1333 = vmatpush.bf16.msra.mxu0 %v1282
    %1334 = vmatpush.bf16.msra.mxu0 %v1278
    %1335 = vmatpush.bf16.msra.mxu0 %v1274
    %1336 = vmatpush.bf16.msra.mxu0 %v1270
    %1337 = vmatpush.bf16.msra.mxu0 %v1266
    %1338 = vmatmul.bf16.gmra.mxu0 %v957
    %v1339 = vpop.f32.mrf.mxu0
    %v1340 = vadd.f32 %v1128, %v1339
    %v1341 = vpop.f32.mrf.mxu0
    %1342 = vdwg.mxu0
    %1343 = vmatpush.bf16.msra.mxu0 %v1295
    %1344 = vmatpush.bf16.msra.mxu0 %v1291
    %1345 = vmatpush.bf16.msra.mxu0 %v1287
    %1346 = vmatpush.bf16.msra.mxu0 %v1283
    %1347 = vmatpush.bf16.msra.mxu0 %v1279
    %1348 = vmatpush.bf16.msra.mxu0 %v1275
    %1349 = vmatpush.bf16.msra.mxu0 %v1271
    %1350 = vmatpush.bf16.msra.mxu0 %v1267
    %1351 = vmatmul.bf16.gmra.mxu0 %v957
    %v1352 = vpop.f32.mrf.mxu0
    %v1353 = vadd.f32 %v1141, %v1352
    %v1354 = vpop.f32.mrf.mxu0
    %1355 = vdwg.mxu0
    %1356 = vmatpush.bf16.msra.mxu0 %v1296
    %1357 = vmatpush.bf16.msra.mxu0 %v1292
    %1358 = vmatpush.bf16.msra.mxu0 %v1288
    %1359 = vmatpush.bf16.msra.mxu0 %v1284
    %1360 = vmatpush.bf16.msra.mxu0 %v1280
    %1361 = vmatpush.bf16.msra.mxu0 %v1276
    %1362 = vmatpush.bf16.msra.mxu0 %v1272
    %1363 = vmatpush.bf16.msra.mxu0 %v1268
    %1364 = vmatmul.bf16.gmra.mxu0 %v957
    %v1365 = vpop.f32.mrf.mxu0
    %v1366 = vadd.f32 %v1154, %v1365
    %v1367 = vpop.f32.mrf.mxu0
    %1368 = vdwg.mxu0
    %1369 = vmatpush.bf16.msra.mxu0 %v1297
    %1370 = vmatpush.bf16.msra.mxu0 %v1293
    %1371 = vmatpush.bf16.msra.mxu0 %v1289
    %1372 = vmatpush.bf16.msra.mxu0 %v1285
    %1373 = vmatpush.bf16.msra.mxu0 %v1281
    %1374 = vmatpush.bf16.msra.mxu0 %v1277
    %1375 = vmatpush.bf16.msra.mxu0 %v1273
    %1376 = vmatpush.bf16.msra.mxu0 %v1269
    %1377 = vmatmul.bf16.gmra.mxu0 %v957
    %v1378 = vpop.f32.mrf.mxu0
    %v1379 = vadd.f32 %v1167, %v1378
    %v1380 = vpop.f32.mrf.mxu0
    %1381 = vdwg.mxu0
    %v1382 = vadd.f32 %v1340, %v554
    %v1383 = vadd.f32 %v1353, %v555
    %v1384 = vadd.f32 %v1366, %v556
    %v1385 = vadd.f32 %v1379, %v557
    %v1386 = vxor.u32 %v1382, 2147483648
    %v1387 = vmul.f32 %v1386, 1.442695
    %v1388 = vpow.pop %v1387
    %v1389 = vadd.f32 %v1388, 1.0
    %v1390 = vrcp.pop %v1389
    %v1391 = vmul.f32 %v1389, %v1390
    %v1392 = vsub.f32 1.0, %v1391
    %v1393 = vmul.f32 %v1390, %v1392
    %v1394 = vadd.f32 %v1390, %v1393
    %vm1395 = vweird.f32 %v1389
    %vm1396 = vweird.f32 %v1390
    %vm1397 = vmor %vm1395, %vm1396
    %v1398 = vsel %vm1397, %v1390, %v1394
    %v1399 = vand.u32 2147483647, %v1389
    %vm1400 = vcmp.eq.f32.partialorder %v1399, 8.507059e+37
    %v1401 = vand.u32 %v1389, 2147483648
    %v1402 = vor.u32 1.1754944e-38, %v1401
    %v1403 = vsel %vm1400, %v1402, %v1398
    %v1404 = vmul.f32 1.0, %v1403
    %v1405 = vxor.u32 %v1383, 2147483648
    %v1406 = vmul.f32 %v1405, 1.442695
    %v1407 = vpow.pop %v1406
    %v1408 = vadd.f32 %v1407, 1.0
    %v1409 = vrcp.pop %v1408
    %v1410 = vmul.f32 %v1408, %v1409
    %v1411 = vsub.f32 1.0, %v1410
    %v1412 = vmul.f32 %v1409, %v1411
    %v1413 = vadd.f32 %v1409, %v1412
    %vm1414 = vweird.f32 %v1408
    %vm1415 = vweird.f32 %v1409
    %vm1416 = vmor %vm1414, %vm1415
    %v1417 = vsel %vm1416, %v1409, %v1413
    %v1418 = vand.u32 2147483647, %v1408
    %vm1419 = vcmp.eq.f32.partialorder %v1418, 8.507059e+37
    %v1420 = vand.u32 %v1408, 2147483648
    %v1421 = vor.u32 1.1754944e-38, %v1420
    %v1422 = vsel %vm1419, %v1421, %v1417
    %v1423 = vmul.f32 1.0, %v1422
    %v1424 = vtanh.pop %v1384
    %v1425 = vxor.u32 %v1385, 2147483648
    %v1426 = vmul.f32 %v1425, 1.442695
    %v1427 = vpow.pop %v1426
    %v1428 = vadd.f32 %v1427, 1.0
    %v1429 = vrcp.pop %v1428
    %v1430 = vmul.f32 %v1428, %v1429
    %v1431 = vsub.f32 1.0, %v1430
    %v1432 = vmul.f32 %v1429, %v1431
    %v1433 = vadd.f32 %v1429, %v1432
    %vm1434 = vweird.f32 %v1428
    %vm1435 = vweird.f32 %v1429
    %vm1436 = vmor %vm1434, %vm1435
    %v1437 = vsel %vm1436, %v1429, %v1433
    %v1438 = vand.u32 2147483647, %v1428
    %vm1439 = vcmp.eq.f32.partialorder %v1438, 8.507059e+37
    %v1440 = vand.u32 %v1428, 2147483648
    %v1441 = vor.u32 1.1754944e-38, %v1440
    %v1442 = vsel %vm1439, %v1441, %v1437
    %v1443 = vmul.f32 1.0, %v1442
    %v1444 = vmul.f32 %v1423, %v671
    %v1445 = vmul.f32 %v1404, %v1424
    %v1446 = vadd.f32 %v1444, %v1445
    %v1447 = vtanh.pop %v1446
    %v1448 = vmul.f32 %v1443, %v1447
    %v1449 = vpack.c.bf16 %v1448, %v1448
    %v1450 = vld [vmem:[#allocation2 + $0x20] sm:$0xff]
    %v1451 = vld [vmem:[#allocation2 + $0x28] sm:$0xff]
    %v1452 = vld [vmem:[#allocation2 + $0x30] sm:$0xff]
    %v1453 = vld [vmem:[#allocation2 + $0x38] sm:$0xff]
    %1454 = vmatpush.bf16.msra.mxu0 %v802
    %1455 = vmatpush.bf16.msra.mxu0 %v798
    %1456 = vmatpush.bf16.msra.mxu0 %v794
    %1457 = vmatpush.bf16.msra.mxu0 %v790
    %1458 = vmatpush.bf16.msra.mxu0 %v786
    %1459 = vmatpush.bf16.msra.mxu0 %v782
    %1460 = vmatpush.bf16.msra.mxu0 %v778
    %1461 = vmatpush.bf16.msra.mxu0 %v774
    %1462 = vmatmul.bf16.gmra.mxu0 %v957
    %v1463 = vpop.f32.mrf.mxu0
    %v1464 = vadd.f32 0.0, %v1463
    %v1465 = vpop.f32.mrf.mxu0
    %1466 = vdwg.mxu0
    %1467 = vmatpush.bf16.msra.mxu0 %v803
    %1468 = vmatpush.bf16.msra.mxu0 %v799
    %1469 = vmatpush.bf16.msra.mxu0 %v795
    %1470 = vmatpush.bf16.msra.mxu0 %v791
    %1471 = vmatpush.bf16.msra.mxu0 %v787
    %1472 = vmatpush.bf16.msra.mxu0 %v783
    %1473 = vmatpush.bf16.msra.mxu0 %v779
    %1474 = vmatpush.bf16.msra.mxu0 %v775
    %1475 = vmatmul.bf16.gmra.mxu0 %v957
    %v1476 = vpop.f32.mrf.mxu0
    %v1477 = vadd.f32 0.0, %v1476
    %v1478 = vpop.f32.mrf.mxu0
    %1479 = vdwg.mxu0
    %1480 = vmatpush.bf16.msra.mxu0 %v804
    %1481 = vmatpush.bf16.msra.mxu0 %v800
    %1482 = vmatpush.bf16.msra.mxu0 %v796
    %1483 = vmatpush.bf16.msra.mxu0 %v792
    %1484 = vmatpush.bf16.msra.mxu0 %v788
    %1485 = vmatpush.bf16.msra.mxu0 %v784
    %1486 = vmatpush.bf16.msra.mxu0 %v780
    %1487 = vmatpush.bf16.msra.mxu0 %v776
    %1488 = vmatmul.bf16.gmra.mxu0 %v957
    %v1489 = vpop.f32.mrf.mxu0
    %v1490 = vadd.f32 0.0, %v1489
    %v1491 = vpop.f32.mrf.mxu0
    %1492 = vdwg.mxu0
    %1493 = vmatpush.bf16.msra.mxu0 %v805
    %1494 = vmatpush.bf16.msra.mxu0 %v801
    %1495 = vmatpush.bf16.msra.mxu0 %v797
    %1496 = vmatpush.bf16.msra.mxu0 %v793
    %1497 = vmatpush.bf16.msra.mxu0 %v789
    %1498 = vmatpush.bf16.msra.mxu0 %v785
    %1499 = vmatpush.bf16.msra.mxu0 %v781
    %1500 = vmatpush.bf16.msra.mxu0 %v777
    %1501 = vmatmul.bf16.gmra.mxu0 %v957
    %v1502 = vpop.f32.mrf.mxu0
    %v1503 = vadd.f32 0.0, %v1502
    %v1504 = vpop.f32.mrf.mxu0
    %1505 = vdwg.mxu0
    %v1506 = vadd.f32 %v1450, %v1464
    %v1507 = vadd.f32 %v1451, %v1477
    %v1508 = vadd.f32 %v1452, %v1490
    %v1509 = vadd.f32 %v1453, %v1503
    %v1510 = vxor.u32 %v1506, 2147483648
    %v1511 = vmul.f32 %v1510, 1.442695
    %v1512 = vpow.pop %v1511
    %v1513 = vadd.f32 %v1512, 1.0
    %v1514 = vrcp.pop %v1513
    %v1515 = vmul.f32 %v1513, %v1514
    %v1516 = vsub.f32 1.0, %v1515
    %v1517 = vmul.f32 %v1514, %v1516
    %v1518 = vadd.f32 %v1514, %v1517
    %vm1519 = vweird.f32 %v1513
    %vm1520 = vweird.f32 %v1514
    %vm1521 = vmor %vm1519, %vm1520
    %v1522 = vsel %vm1521, %v1514, %v1518
    %v1523 = vand.u32 2147483647, %v1513
    %vm1524 = vcmp.eq.f32.partialorder %v1523, 8.507059e+37
    %v1525 = vand.u32 %v1513, 2147483648
    %v1526 = vor.u32 1.1754944e-38, %v1525
    %v1527 = vsel %vm1524, %v1526, %v1522
    %v1528 = vmul.f32 1.0, %v1527
    %v1529 = vxor.u32 %v1507, 2147483648
    %v1530 = vmul.f32 %v1529, 1.442695
    %v1531 = vpow.pop %v1530
    %v1532 = vadd.f32 %v1531, 1.0
    %v1533 = vrcp.pop %v1532
    %v1534 = vmul.f32 %v1532, %v1533
    %v1535 = vsub.f32 1.0, %v1534
    %v1536 = vmul.f32 %v1533, %v1535
    %v1537 = vadd.f32 %v1533, %v1536
    %vm1538 = vweird.f32 %v1532
    %vm1539 = vweird.f32 %v1533
    %vm1540 = vmor %vm1538, %vm1539
    %v1541 = vsel %vm1540, %v1533, %v1537
    %v1542 = vand.u32 2147483647, %v1532
    %vm1543 = vcmp.eq.f32.partialorder %v1542, 8.507059e+37
    %v1544 = vand.u32 %v1532, 2147483648
    %v1545 = vor.u32 1.1754944e-38, %v1544
    %v1546 = vsel %vm1543, %v1545, %v1541
    %v1547 = vmul.f32 1.0, %v1546
    %v1548 = vtanh.pop %v1508
    %v1549 = vxor.u32 %v1509, 2147483648
    %v1550 = vmul.f32 %v1549, 1.442695
    %v1551 = vpow.pop %v1550
    %v1552 = vadd.f32 %v1551, 1.0
    %v1553 = vrcp.pop %v1552
    %v1554 = vmul.f32 %v1552, %v1553
    %v1555 = vsub.f32 1.0, %v1554
    %v1556 = vmul.f32 %v1553, %v1555
    %v1557 = vadd.f32 %v1553, %v1556
    %vm1558 = vweird.f32 %v1552
    %vm1559 = vweird.f32 %v1553
    %vm1560 = vmor %vm1558, %vm1559
    %v1561 = vsel %vm1560, %v1553, %v1557
    %v1562 = vand.u32 2147483647, %v1552
    %vm1563 = vcmp.eq.f32.partialorder %v1562, 8.507059e+37
    %v1564 = vand.u32 %v1552, 2147483648
    %v1565 = vor.u32 1.1754944e-38, %v1564
    %v1566 = vsel %vm1563, %v1565, %v1561
    %v1567 = vmul.f32 1.0, %v1566
    %v1568 = vmul.f32 %v1547, %v954
    %v1569 = vmul.f32 %v1528, %v1548
    %v1570 = vadd.f32 %v1568, %v1569
    %v1571 = vtanh.pop %v1570
    %v1572 = vmul.f32 %v1567, %v1571
    %v1573 = vpack.c.bf16 %v1572, %v1572
    %1574 = vmatpush.bf16.msra.mxu0 %v1082
    %1575 = vmatpush.bf16.msra.mxu0 %v1078
    %1576 = vmatpush.bf16.msra.mxu0 %v1074
    %1577 = vmatpush.bf16.msra.mxu0 %v1070
    %1578 = vmatpush.bf16.msra.mxu0 %v1066
    %1579 = vmatpush.bf16.msra.mxu0 %v1062
    %1580 = vmatpush.bf16.msra.mxu0 %v1058
    %1581 = vmatpush.bf16.msra.mxu0 %v1054
    %1582 = vmatmul.bf16.gmra.mxu0 %v1449
    %v1583 = vpop.f32.mrf.mxu0
    %v1584 = vadd.f32 0.0, %v1583
    %v1585 = vpop.f32.mrf.mxu0
    %1586 = vdwg.mxu0
    %1587 = vmatpush.bf16.msra.mxu0 %v1083
    %1588 = vmatpush.bf16.msra.mxu0 %v1079
    %1589 = vmatpush.bf16.msra.mxu0 %v1075
    %1590 = vmatpush.bf16.msra.mxu0 %v1071
    %1591 = vmatpush.bf16.msra.mxu0 %v1067
    %1592 = vmatpush.bf16.msra.mxu0 %v1063
    %1593 = vmatpush.bf16.msra.mxu0 %v1059
    %1594 = vmatpush.bf16.msra.mxu0 %v1055
    %1595 = vmatmul.bf16.gmra.mxu0 %v1449
    %v1596 = vpop.f32.mrf.mxu0
    %v1597 = vadd.f32 0.0, %v1596
    %v1598 = vpop.f32.mrf.mxu0
    %1599 = vdwg.mxu0
    %1600 = vmatpush.bf16.msra.mxu0 %v1084
    %1601 = vmatpush.bf16.msra.mxu0 %v1080
    %1602 = vmatpush.bf16.msra.mxu0 %v1076
    %1603 = vmatpush.bf16.msra.mxu0 %v1072
    %1604 = vmatpush.bf16.msra.mxu0 %v1068
    %1605 = vmatpush.bf16.msra.mxu0 %v1064
    %1606 = vmatpush.bf16.msra.mxu0 %v1060
    %1607 = vmatpush.bf16.msra.mxu0 %v1056
    %1608 = vmatmul.bf16.gmra.mxu0 %v1449
    %v1609 = vpop.f32.mrf.mxu0
    %v1610 = vadd.f32 0.0, %v1609
    %v1611 = vpop.f32.mrf.mxu0
    %1612 = vdwg.mxu0
    %1613 = vmatpush.bf16.msra.mxu0 %v1085
    %1614 = vmatpush.bf16.msra.mxu0 %v1081
    %1615 = vmatpush.bf16.msra.mxu0 %v1077
    %1616 = vmatpush.bf16.msra.mxu0 %v1073
    %1617 = vmatpush.bf16.msra.mxu0 %v1069
    %1618 = vmatpush.bf16.msra.mxu0 %v1065
    %1619 = vmatpush.bf16.msra.mxu0 %v1061
    %1620 = vmatpush.bf16.msra.mxu0 %v1057
    %1621 = vmatmul.bf16.gmra.mxu0 %v1449
    %v1622 = vpop.f32.mrf.mxu0
    %v1623 = vadd.f32 0.0, %v1622
    %v1624 = vpop.f32.mrf.mxu0
    %1625 = vdwg.mxu0
    %1626 = vmatpush.bf16.msra.mxu0 %v1294
    %1627 = vmatpush.bf16.msra.mxu0 %v1290
    %1628 = vmatpush.bf16.msra.mxu0 %v1286
    %1629 = vmatpush.bf16.msra.mxu0 %v1282
    %1630 = vmatpush.bf16.msra.mxu0 %v1278
    %1631 = vmatpush.bf16.msra.mxu0 %v1274
    %1632 = vmatpush.bf16.msra.mxu0 %v1270
    %1633 = vmatpush.bf16.msra.mxu0 %v1266
    %1634 = vmatmul.bf16.gmra.mxu0 %v1573
    %v1635 = vpop.f32.mrf.mxu0
    %v1636 = vadd.f32 %v1584, %v1635
    %v1637 = vpop.f32.mrf.mxu0
    %1638 = vdwg.mxu0
    %1639 = vmatpush.bf16.msra.mxu0 %v1295
    %1640 = vmatpush.bf16.msra.mxu0 %v1291
    %1641 = vmatpush.bf16.msra.mxu0 %v1287
    %1642 = vmatpush.bf16.msra.mxu0 %v1283
    %1643 = vmatpush.bf16.msra.mxu0 %v1279
    %1644 = vmatpush.bf16.msra.mxu0 %v1275
    %1645 = vmatpush.bf16.msra.mxu0 %v1271
    %1646 = vmatpush.bf16.msra.mxu0 %v1267
    %1647 = vmatmul.bf16.gmra.mxu0 %v1573
    %v1648 = vpop.f32.mrf.mxu0
    %v1649 = vadd.f32 %v1597, %v1648
    %v1650 = vpop.f32.mrf.mxu0
    %1651 = vdwg.mxu0
    %1652 = vmatpush.bf16.msra.mxu0 %v1296
    %1653 = vmatpush.bf16.msra.mxu0 %v1292
    %1654 = vmatpush.bf16.msra.mxu0 %v1288
    %1655 = vmatpush.bf16.msra.mxu0 %v1284
    %1656 = vmatpush.bf16.msra.mxu0 %v1280
    %1657 = vmatpush.bf16.msra.mxu0 %v1276
    %1658 = vmatpush.bf16.msra.mxu0 %v1272
    %1659 = vmatpush.bf16.msra.mxu0 %v1268
    %1660 = vmatmul.bf16.gmra.mxu0 %v1573
    %v1661 = vpop.f32.mrf.mxu0
    %v1662 = vadd.f32 %v1610, %v1661
    %v1663 = vpop.f32.mrf.mxu0
    %1664 = vdwg.mxu0
    %1665 = vmatpush.bf16.msra.mxu0 %v1297
    %1666 = vmatpush.bf16.msra.mxu0 %v1293
    %1667 = vmatpush.bf16.msra.mxu0 %v1289
    %1668 = vmatpush.bf16.msra.mxu0 %v1285
    %1669 = vmatpush.bf16.msra.mxu0 %v1281
    %1670 = vmatpush.bf16.msra.mxu0 %v1277
    %1671 = vmatpush.bf16.msra.mxu0 %v1273
    %1672 = vmatpush.bf16.msra.mxu0 %v1269
    %1673 = vmatmul.bf16.gmra.mxu0 %v1573
    %v1674 = vpop.f32.mrf.mxu0
    %v1675 = vadd.f32 %v1623, %v1674
    %v1676 = vpop.f32.mrf.mxu0
    %1677 = vdwg.mxu0
    %v1678 = vadd.f32 %v1636, %v554
    %v1679 = vadd.f32 %v1649, %v555
    %v1680 = vadd.f32 %v1662, %v556
    %v1681 = vadd.f32 %v1675, %v557
    %v1682 = vxor.u32 %v1678, 2147483648
    %v1683 = vmul.f32 %v1682, 1.442695
    %v1684 = vpow.pop %v1683
    %v1685 = vadd.f32 %v1684, 1.0
    %v1686 = vrcp.pop %v1685
    %v1687 = vmul.f32 %v1685, %v1686
    %v1688 = vsub.f32 1.0, %v1687
    %v1689 = vmul.f32 %v1686, %v1688
    %v1690 = vadd.f32 %v1686, %v1689
    %vm1691 = vweird.f32 %v1685
    %vm1692 = vweird.f32 %v1686
    %vm1693 = vmor %vm1691, %vm1692
    %v1694 = vsel %vm1693, %v1686, %v1690
    %v1695 = vand.u32 2147483647, %v1685
    %vm1696 = vcmp.eq.f32.partialorder %v1695, 8.507059e+37
    %v1697 = vand.u32 %v1685, 2147483648
    %v1698 = vor.u32 1.1754944e-38, %v1697
    %v1699 = vsel %vm1696, %v1698, %v1694
    %v1700 = vmul.f32 1.0, %v1699
    %v1701 = vxor.u32 %v1679, 2147483648
    %v1702 = vmul.f32 %v1701, 1.442695
    %v1703 = vpow.pop %v1702
    %v1704 = vadd.f32 %v1703, 1.0
    %v1705 = vrcp.pop %v1704
    %v1706 = vmul.f32 %v1704, %v1705
    %v1707 = vsub.f32 1.0, %v1706
    %v1708 = vmul.f32 %v1705, %v1707
    %v1709 = vadd.f32 %v1705, %v1708
    %vm1710 = vweird.f32 %v1704
    %vm1711 = vweird.f32 %v1705
    %vm1712 = vmor %vm1710, %vm1711
    %v1713 = vsel %vm1712, %v1705, %v1709
    %v1714 = vand.u32 2147483647, %v1704
    %vm1715 = vcmp.eq.f32.partialorder %v1714, 8.507059e+37
    %v1716 = vand.u32 %v1704, 2147483648
    %v1717 = vor.u32 1.1754944e-38, %v1716
    %v1718 = vsel %vm1715, %v1717, %v1713
    %v1719 = vmul.f32 1.0, %v1718
    %v1720 = vtanh.pop %v1680
    %v1721 = vxor.u32 %v1681, 2147483648
    %v1722 = vmul.f32 %v1721, 1.442695
    %v1723 = vpow.pop %v1722
    %v1724 = vadd.f32 %v1723, 1.0
    %v1725 = vrcp.pop %v1724
    %v1726 = vmul.f32 %v1724, %v1725
    %v1727 = vsub.f32 1.0, %v1726
    %v1728 = vmul.f32 %v1725, %v1727
    %v1729 = vadd.f32 %v1725, %v1728
    %vm1730 = vweird.f32 %v1724
    %vm1731 = vweird.f32 %v1725
    %vm1732 = vmor %vm1730, %vm1731
    %v1733 = vsel %vm1732, %v1725, %v1729
    %v1734 = vand.u32 2147483647, %v1724
    %vm1735 = vcmp.eq.f32.partialorder %v1734, 8.507059e+37
    %v1736 = vand.u32 %v1724, 2147483648
    %v1737 = vor.u32 1.1754944e-38, %v1736
    %v1738 = vsel %vm1735, %v1737, %v1733
    %v1739 = vmul.f32 1.0, %v1738
    %v1740 = vmul.f32 %v1719, %v1446
    %v1741 = vmul.f32 %v1700, %v1720
    %v1742 = vadd.f32 %v1740, %v1741
    %v1743 = vtanh.pop %v1742
    %v1744 = vmul.f32 %v1739, %v1743
    %v1745 = vpack.c.bf16 %v1744, %v1744
    %v1746 = vld [vmem:[#allocation2 + $0x40] sm:$0xff]
    %v1747 = vld [vmem:[#allocation2 + $0x48] sm:$0xff]
    %v1748 = vld [vmem:[#allocation2 + $0x50] sm:$0xff]
    %v1749 = vld [vmem:[#allocation2 + $0x58] sm:$0xff]
    %1750 = vmatpush.bf16.msra.mxu0 %v802
    %1751 = vmatpush.bf16.msra.mxu0 %v798
    %1752 = vmatpush.bf16.msra.mxu0 %v794
    %1753 = vmatpush.bf16.msra.mxu0 %v790
    %1754 = vmatpush.bf16.msra.mxu0 %v786
    %1755 = vmatpush.bf16.msra.mxu0 %v782
    %1756 = vmatpush.bf16.msra.mxu0 %v778
    %1757 = vmatpush.bf16.msra.mxu0 %v774
    %1758 = vmatmul.bf16.gmra.mxu0 %v1573
    %v1759 = vpop.f32.mrf.mxu0
    %v1760 = vadd.f32 0.0, %v1759
    %v1761 = vpop.f32.mrf.mxu0
    %1762 = vdwg.mxu0
    %1763 = vmatpush.bf16.msra.mxu0 %v803
    %1764 = vmatpush.bf16.msra.mxu0 %v799
    %1765 = vmatpush.bf16.msra.mxu0 %v795
    %1766 = vmatpush.bf16.msra.mxu0 %v791
    %1767 = vmatpush.bf16.msra.mxu0 %v787
    %1768 = vmatpush.bf16.msra.mxu0 %v783
    %1769 = vmatpush.bf16.msra.mxu0 %v779
    %1770 = vmatpush.bf16.msra.mxu0 %v775
    %1771 = vmatmul.bf16.gmra.mxu0 %v1573
    %v1772 = vpop.f32.mrf.mxu0
    %v1773 = vadd.f32 0.0, %v1772
    %v1774 = vpop.f32.mrf.mxu0
    %1775 = vdwg.mxu0
    %1776 = vmatpush.bf16.msra.mxu0 %v804
    %1777 = vmatpush.bf16.msra.mxu0 %v800
    %1778 = vmatpush.bf16.msra.mxu0 %v796
    %1779 = vmatpush.bf16.msra.mxu0 %v792
    %1780 = vmatpush.bf16.msra.mxu0 %v788
    %1781 = vmatpush.bf16.msra.mxu0 %v784
    %1782 = vmatpush.bf16.msra.mxu0 %v780
    %1783 = vmatpush.bf16.msra.mxu0 %v776
    %1784 = vmatmul.bf16.gmra.mxu0 %v1573
    %v1785 = vpop.f32.mrf.mxu0
    %v1786 = vadd.f32 0.0, %v1785
    %v1787 = vpop.f32.mrf.mxu0
    %1788 = vdwg.mxu0
    %1789 = vmatpush.bf16.msra.mxu0 %v805
    %1790 = vmatpush.bf16.msra.mxu0 %v801
    %1791 = vmatpush.bf16.msra.mxu0 %v797
    %1792 = vmatpush.bf16.msra.mxu0 %v793
    %1793 = vmatpush.bf16.msra.mxu0 %v789
    %1794 = vmatpush.bf16.msra.mxu0 %v785
    %1795 = vmatpush.bf16.msra.mxu0 %v781
    %1796 = vmatpush.bf16.msra.mxu0 %v777
    %1797 = vmatmul.bf16.gmra.mxu0 %v1573
    %v1798 = vpop.f32.mrf.mxu0
    %v1799 = vadd.f32 0.0, %v1798
    %v1800 = vpop.f32.mrf.mxu0
    %1801 = vdwg.mxu0
    %v1802 = vadd.f32 %v1746, %v1760
    %v1803 = vadd.f32 %v1747, %v1773
    %v1804 = vadd.f32 %v1748, %v1786
    %v1805 = vadd.f32 %v1749, %v1799
    %v1806 = vxor.u32 %v1802, 2147483648
    %v1807 = vmul.f32 %v1806, 1.442695
    %v1808 = vpow.pop %v1807
    %v1809 = vadd.f32 %v1808, 1.0
    %v1810 = vrcp.pop %v1809
    %v1811 = vmul.f32 %v1809, %v1810
    %v1812 = vsub.f32 1.0, %v1811
    %v1813 = vmul.f32 %v1810, %v1812
    %v1814 = vadd.f32 %v1810, %v1813
    %vm1815 = vweird.f32 %v1809
    %vm1816 = vweird.f32 %v1810
    %vm1817 = vmor %vm1815, %vm1816
    %v1818 = vsel %vm1817, %v1810, %v1814
    %v1819 = vand.u32 2147483647, %v1809
    %vm1820 = vcmp.eq.f32.partialorder %v1819, 8.507059e+37
    %v1821 = vand.u32 %v1809, 2147483648
    %v1822 = vor.u32 1.1754944e-38, %v1821
    %v1823 = vsel %vm1820, %v1822, %v1818
    %v1824 = vmul.f32 1.0, %v1823
    %v1825 = vxor.u32 %v1803, 2147483648
    %v1826 = vmul.f32 %v1825, 1.442695
    %v1827 = vpow.pop %v1826
    %v1828 = vadd.f32 %v1827, 1.0
    %v1829 = vrcp.pop %v1828
    %v1830 = vmul.f32 %v1828, %v1829
    %v1831 = vsub.f32 1.0, %v1830
    %v1832 = vmul.f32 %v1829, %v1831
    %v1833 = vadd.f32 %v1829, %v1832
    %vm1834 = vweird.f32 %v1828
    %vm1835 = vweird.f32 %v1829
    %vm1836 = vmor %vm1834, %vm1835
    %v1837 = vsel %vm1836, %v1829, %v1833
    %v1838 = vand.u32 2147483647, %v1828
    %vm1839 = vcmp.eq.f32.partialorder %v1838, 8.507059e+37
    %v1840 = vand.u32 %v1828, 2147483648
    %v1841 = vor.u32 1.1754944e-38, %v1840
    %v1842 = vsel %vm1839, %v1841, %v1837
    %v1843 = vmul.f32 1.0, %v1842
    %v1844 = vtanh.pop %v1804
    %v1845 = vxor.u32 %v1805, 2147483648
    %v1846 = vmul.f32 %v1845, 1.442695
    %v1847 = vpow.pop %v1846
    %v1848 = vadd.f32 %v1847, 1.0
    %v1849 = vrcp.pop %v1848
    %v1850 = vmul.f32 %v1848, %v1849
    %v1851 = vsub.f32 1.0, %v1850
    %v1852 = vmul.f32 %v1849, %v1851
    %v1853 = vadd.f32 %v1849, %v1852
    %vm1854 = vweird.f32 %v1848
    %vm1855 = vweird.f32 %v1849
    %vm1856 = vmor %vm1854, %vm1855
    %v1857 = vsel %vm1856, %v1849, %v1853
    %v1858 = vand.u32 2147483647, %v1848
    %vm1859 = vcmp.eq.f32.partialorder %v1858, 8.507059e+37
    %v1860 = vand.u32 %v1848, 2147483648
    %v1861 = vor.u32 1.1754944e-38, %v1860
    %v1862 = vsel %vm1859, %v1861, %v1857
    %v1863 = vmul.f32 1.0, %v1862
    %v1864 = vmul.f32 %v1843, %v1570
    %v1865 = vmul.f32 %v1824, %v1844
    %v1866 = vadd.f32 %v1864, %v1865
    %v1867 = vtanh.pop %v1866
    %v1868 = vmul.f32 %v1863, %v1867
    %v1869 = vpack.c.bf16 %v1868, %v1868
    %1870 = vmatpush.bf16.msra.mxu0 %v1082
    %1871 = vmatpush.bf16.msra.mxu0 %v1078
    %1872 = vmatpush.bf16.msra.mxu0 %v1074
    %1873 = vmatpush.bf16.msra.mxu0 %v1070
    %1874 = vmatpush.bf16.msra.mxu0 %v1066
    %1875 = vmatpush.bf16.msra.mxu0 %v1062
    %1876 = vmatpush.bf16.msra.mxu0 %v1058
    %1877 = vmatpush.bf16.msra.mxu0 %v1054
    %1878 = vmatmul.bf16.gmra.mxu0 %v1745
    %v1879 = vpop.f32.mrf.mxu0
    %v1880 = vadd.f32 0.0, %v1879
    %v1881 = vpop.f32.mrf.mxu0
    %1882 = vdwg.mxu0
    %1883 = vmatpush.bf16.msra.mxu0 %v1083
    %1884 = vmatpush.bf16.msra.mxu0 %v1079
    %1885 = vmatpush.bf16.msra.mxu0 %v1075
    %1886 = vmatpush.bf16.msra.mxu0 %v1071
    %1887 = vmatpush.bf16.msra.mxu0 %v1067
    %1888 = vmatpush.bf16.msra.mxu0 %v1063
    %1889 = vmatpush.bf16.msra.mxu0 %v1059
    %1890 = vmatpush.bf16.msra.mxu0 %v1055
    %1891 = vmatmul.bf16.gmra.mxu0 %v1745
    %v1892 = vpop.f32.mrf.mxu0
    %v1893 = vadd.f32 0.0, %v1892
    %v1894 = vpop.f32.mrf.mxu0
    %1895 = vdwg.mxu0
    %1896 = vmatpush.bf16.msra.mxu0 %v1084
    %1897 = vmatpush.bf16.msra.mxu0 %v1080
    %1898 = vmatpush.bf16.msra.mxu0 %v1076
    %1899 = vmatpush.bf16.msra.mxu0 %v1072
    %1900 = vmatpush.bf16.msra.mxu0 %v1068
    %1901 = vmatpush.bf16.msra.mxu0 %v1064
    %1902 = vmatpush.bf16.msra.mxu0 %v1060
    %1903 = vmatpush.bf16.msra.mxu0 %v1056
    %1904 = vmatmul.bf16.gmra.mxu0 %v1745
    %v1905 = vpop.f32.mrf.mxu0
    %v1906 = vadd.f32 0.0, %v1905
    %v1907 = vpop.f32.mrf.mxu0
    %1908 = vdwg.mxu0
    %1909 = vmatpush.bf16.msra.mxu0 %v1085
    %1910 = vmatpush.bf16.msra.mxu0 %v1081
    %1911 = vmatpush.bf16.msra.mxu0 %v1077
    %1912 = vmatpush.bf16.msra.mxu0 %v1073
    %1913 = vmatpush.bf16.msra.mxu0 %v1069
    %1914 = vmatpush.bf16.msra.mxu0 %v1065
    %1915 = vmatpush.bf16.msra.mxu0 %v1061
    %1916 = vmatpush.bf16.msra.mxu0 %v1057
    %1917 = vmatmul.bf16.gmra.mxu0 %v1745
    %v1918 = vpop.f32.mrf.mxu0
    %v1919 = vadd.f32 0.0, %v1918
    %v1920 = vpop.f32.mrf.mxu0
    %1921 = vdwg.mxu0
    %1922 = vmatpush.bf16.msra.mxu0 %v1294
    %1923 = vmatpush.bf16.msra.mxu0 %v1290
    %1924 = vmatpush.bf16.msra.mxu0 %v1286
    %1925 = vmatpush.bf16.msra.mxu0 %v1282
    %1926 = vmatpush.bf16.msra.mxu0 %v1278
    %1927 = vmatpush.bf16.msra.mxu0 %v1274
    %1928 = vmatpush.bf16.msra.mxu0 %v1270
    %1929 = vmatpush.bf16.msra.mxu0 %v1266
    %1930 = vmatmul.bf16.gmra.mxu0 %v1869
    %v1931 = vpop.f32.mrf.mxu0
    %v1932 = vadd.f32 %v1880, %v1931
    %v1933 = vpop.f32.mrf.mxu0
    %1934 = vdwg.mxu0
    %1935 = vmatpush.bf16.msra.mxu0 %v1295
    %1936 = vmatpush.bf16.msra.mxu0 %v1291
    %1937 = vmatpush.bf16.msra.mxu0 %v1287
    %1938 = vmatpush.bf16.msra.mxu0 %v1283
    %1939 = vmatpush.bf16.msra.mxu0 %v1279
    %1940 = vmatpush.bf16.msra.mxu0 %v1275
    %1941 = vmatpush.bf16.msra.mxu0 %v1271
    %1942 = vmatpush.bf16.msra.mxu0 %v1267
    %1943 = vmatmul.bf16.gmra.mxu0 %v1869
    %v1944 = vpop.f32.mrf.mxu0
    %v1945 = vadd.f32 %v1893, %v1944
    %v1946 = vpop.f32.mrf.mxu0
    %1947 = vdwg.mxu0
    %1948 = vmatpush.bf16.msra.mxu0 %v1296
    %1949 = vmatpush.bf16.msra.mxu0 %v1292
    %1950 = vmatpush.bf16.msra.mxu0 %v1288
    %1951 = vmatpush.bf16.msra.mxu0 %v1284
    %1952 = vmatpush.bf16.msra.mxu0 %v1280
    %1953 = vmatpush.bf16.msra.mxu0 %v1276
    %1954 = vmatpush.bf16.msra.mxu0 %v1272
    %1955 = vmatpush.bf16.msra.mxu0 %v1268
    %1956 = vmatmul.bf16.gmra.mxu0 %v1869
    %v1957 = vpop.f32.mrf.mxu0
    %v1958 = vadd.f32 %v1906, %v1957
    %v1959 = vpop.f32.mrf.mxu0
    %1960 = vdwg.mxu0
    %1961 = vmatpush.bf16.msra.mxu0 %v1297
    %1962 = vmatpush.bf16.msra.mxu0 %v1293
    %1963 = vmatpush.bf16.msra.mxu0 %v1289
    %1964 = vmatpush.bf16.msra.mxu0 %v1285
    %1965 = vmatpush.bf16.msra.mxu0 %v1281
    %1966 = vmatpush.bf16.msra.mxu0 %v1277
    %1967 = vmatpush.bf16.msra.mxu0 %v1273
    %1968 = vmatpush.bf16.msra.mxu0 %v1269
    %1969 = vmatmul.bf16.gmra.mxu0 %v1869
    %v1970 = vpop.f32.mrf.mxu0
    %v1971 = vadd.f32 %v1919, %v1970
    %v1972 = vpop.f32.mrf.mxu0
    %1973 = vdwg.mxu0
    %v1974 = vadd.f32 %v1932, %v554
    %v1975 = vadd.f32 %v1945, %v555
    %v1976 = vadd.f32 %v1958, %v556
    %v1977 = vadd.f32 %v1971, %v557
    %v1978 = vxor.u32 %v1974, 2147483648
    %v1979 = vmul.f32 %v1978, 1.442695
    %v1980 = vpow.pop %v1979
    %v1981 = vadd.f32 %v1980, 1.0
    %v1982 = vrcp.pop %v1981
    %v1983 = vmul.f32 %v1981, %v1982
    %v1984 = vsub.f32 1.0, %v1983
    %v1985 = vmul.f32 %v1982, %v1984
    %v1986 = vadd.f32 %v1982, %v1985
    %vm1987 = vweird.f32 %v1981
    %vm1988 = vweird.f32 %v1982
    %vm1989 = vmor %vm1987, %vm1988
    %v1990 = vsel %vm1989, %v1982, %v1986
    %v1991 = vand.u32 2147483647, %v1981
    %vm1992 = vcmp.eq.f32.partialorder %v1991, 8.507059e+37
    %v1993 = vand.u32 %v1981, 2147483648
    %v1994 = vor.u32 1.1754944e-38, %v1993
    %v1995 = vsel %vm1992, %v1994, %v1990
    %v1996 = vmul.f32 1.0, %v1995
    %v1997 = vxor.u32 %v1975, 2147483648
    %v1998 = vmul.f32 %v1997, 1.442695
    %v1999 = vpow.pop %v1998
    %v2000 = vadd.f32 %v1999, 1.0
    %v2001 = vrcp.pop %v2000
    %v2002 = vmul.f32 %v2000, %v2001
    %v2003 = vsub.f32 1.0, %v2002
    %v2004 = vmul.f32 %v2001, %v2003
    %v2005 = vadd.f32 %v2001, %v2004
    %vm2006 = vweird.f32 %v2000
    %vm2007 = vweird.f32 %v2001
    %vm2008 = vmor %vm2006, %vm2007
    %v2009 = vsel %vm2008, %v2001, %v2005
    %v2010 = vand.u32 2147483647, %v2000
    %vm2011 = vcmp.eq.f32.partialorder %v2010, 8.507059e+37
    %v2012 = vand.u32 %v2000, 2147483648
    %v2013 = vor.u32 1.1754944e-38, %v2012
    %v2014 = vsel %vm2011, %v2013, %v2009
    %v2015 = vmul.f32 1.0, %v2014
    %v2016 = vtanh.pop %v1976
    %v2017 = vxor.u32 %v1977, 2147483648
    %v2018 = vmul.f32 %v2017, 1.442695
    %v2019 = vpow.pop %v2018
    %v2020 = vadd.f32 %v2019, 1.0
    %v2021 = vrcp.pop %v2020
    %v2022 = vmul.f32 %v2020, %v2021
    %v2023 = vsub.f32 1.0, %v2022
    %v2024 = vmul.f32 %v2021, %v2023
    %v2025 = vadd.f32 %v2021, %v2024
    %vm2026 = vweird.f32 %v2020
    %vm2027 = vweird.f32 %v2021
    %vm2028 = vmor %vm2026, %vm2027
    %v2029 = vsel %vm2028, %v2021, %v2025
    %v2030 = vand.u32 2147483647, %v2020
    %vm2031 = vcmp.eq.f32.partialorder %v2030, 8.507059e+37
    %v2032 = vand.u32 %v2020, 2147483648
    %v2033 = vor.u32 1.1754944e-38, %v2032
    %v2034 = vsel %vm2031, %v2033, %v2029
    %v2035 = vmul.f32 1.0, %v2034
    %v2036 = vmul.f32 %v2015, %v1742
    %v2037 = vmul.f32 %v1996, %v2016
    %v2038 = vadd.f32 %v2036, %v2037
    %v2039 = vtanh.pop %v2038
    %v2040 = vmul.f32 %v2035, %v2039
    %v2041 = vpack.c.bf16 %v2040, %v2040
    %v2042 = vld [vmem:[#allocation2 + $0x60] sm:$0xff]
    %v2043 = vld [vmem:[#allocation2 + $0x68] sm:$0xff]
    %v2044 = vld [vmem:[#allocation2 + $0x70] sm:$0xff]
    %v2045 = vld [vmem:[#allocation2 + $0x78] sm:$0xff]
    %2046 = vmatpush.bf16.msra.mxu0 %v802
    %2047 = vmatpush.bf16.msra.mxu0 %v798
    %2048 = vmatpush.bf16.msra.mxu0 %v794
    %2049 = vmatpush.bf16.msra.mxu0 %v790
    %2050 = vmatpush.bf16.msra.mxu0 %v786
    %2051 = vmatpush.bf16.msra.mxu0 %v782
    %2052 = vmatpush.bf16.msra.mxu0 %v778
    %2053 = vmatpush.bf16.msra.mxu0 %v774
    %2054 = vmatmul.bf16.gmra.mxu0 %v1869
    %v2055 = vpop.f32.mrf.mxu0
    %v2056 = vadd.f32 0.0, %v2055
    %v2057 = vpop.f32.mrf.mxu0
    %2058 = vdwg.mxu0
    %2059 = vmatpush.bf16.msra.mxu0 %v803
    %2060 = vmatpush.bf16.msra.mxu0 %v799
    %2061 = vmatpush.bf16.msra.mxu0 %v795
    %2062 = vmatpush.bf16.msra.mxu0 %v791
    %2063 = vmatpush.bf16.msra.mxu0 %v787
    %2064 = vmatpush.bf16.msra.mxu0 %v783
    %2065 = vmatpush.bf16.msra.mxu0 %v779
    %2066 = vmatpush.bf16.msra.mxu0 %v775
    %2067 = vmatmul.bf16.gmra.mxu0 %v1869
    %v2068 = vpop.f32.mrf.mxu0
    %v2069 = vadd.f32 0.0, %v2068
    %v2070 = vpop.f32.mrf.mxu0
    %2071 = vdwg.mxu0
    %2072 = vmatpush.bf16.msra.mxu0 %v804
    %2073 = vmatpush.bf16.msra.mxu0 %v800
    %2074 = vmatpush.bf16.msra.mxu0 %v796
    %2075 = vmatpush.bf16.msra.mxu0 %v792
    %2076 = vmatpush.bf16.msra.mxu0 %v788
    %2077 = vmatpush.bf16.msra.mxu0 %v784
    %2078 = vmatpush.bf16.msra.mxu0 %v780
    %2079 = vmatpush.bf16.msra.mxu0 %v776
    %2080 = vmatmul.bf16.gmra.mxu0 %v1869
    %v2081 = vpop.f32.mrf.mxu0
    %v2082 = vadd.f32 0.0, %v2081
    %v2083 = vpop.f32.mrf.mxu0
    %2084 = vdwg.mxu0
    %2085 = vmatpush.bf16.msra.mxu0 %v805
    %2086 = vmatpush.bf16.msra.mxu0 %v801
    %2087 = vmatpush.bf16.msra.mxu0 %v797
    %2088 = vmatpush.bf16.msra.mxu0 %v793
    %2089 = vmatpush.bf16.msra.mxu0 %v789
    %2090 = vmatpush.bf16.msra.mxu0 %v785
    %2091 = vmatpush.bf16.msra.mxu0 %v781
    %2092 = vmatpush.bf16.msra.mxu0 %v777
    %2093 = vmatmul.bf16.gmra.mxu0 %v1869
    %v2094 = vpop.f32.mrf.mxu0
    %v2095 = vadd.f32 0.0, %v2094
    %v2096 = vpop.f32.mrf.mxu0
    %2097 = vdwg.mxu0
    %v2098 = vadd.f32 %v2042, %v2056
    %v2099 = vadd.f32 %v2043, %v2069
    %v2100 = vadd.f32 %v2044, %v2082
    %v2101 = vadd.f32 %v2045, %v2095
    %v2102 = vxor.u32 %v2098, 2147483648
    %v2103 = vmul.f32 %v2102, 1.442695
    %v2104 = vpow.pop %v2103
    %v2105 = vadd.f32 %v2104, 1.0
    %v2106 = vrcp.pop %v2105
    %v2107 = vmul.f32 %v2105, %v2106
    %v2108 = vsub.f32 1.0, %v2107
    %v2109 = vmul.f32 %v2106, %v2108
    %v2110 = vadd.f32 %v2106, %v2109
    %vm2111 = vweird.f32 %v2105
    %vm2112 = vweird.f32 %v2106
    %vm2113 = vmor %vm2111, %vm2112
    %v2114 = vsel %vm2113, %v2106, %v2110
    %v2115 = vand.u32 2147483647, %v2105
    %vm2116 = vcmp.eq.f32.partialorder %v2115, 8.507059e+37
    %v2117 = vand.u32 %v2105, 2147483648
    %v2118 = vor.u32 1.1754944e-38, %v2117
    %v2119 = vsel %vm2116, %v2118, %v2114
    %v2120 = vmul.f32 1.0, %v2119
    %v2121 = vxor.u32 %v2099, 2147483648
    %v2122 = vmul.f32 %v2121, 1.442695
    %v2123 = vpow.pop %v2122
    %v2124 = vadd.f32 %v2123, 1.0
    %v2125 = vrcp.pop %v2124
    %v2126 = vmul.f32 %v2124, %v2125
    %v2127 = vsub.f32 1.0, %v2126
    %v2128 = vmul.f32 %v2125, %v2127
    %v2129 = vadd.f32 %v2125, %v2128
    %vm2130 = vweird.f32 %v2124
    %vm2131 = vweird.f32 %v2125
    %vm2132 = vmor %vm2130, %vm2131
    %v2133 = vsel %vm2132, %v2125, %v2129
    %v2134 = vand.u32 2147483647, %v2124
    %vm2135 = vcmp.eq.f32.partialorder %v2134, 8.507059e+37
    %v2136 = vand.u32 %v2124, 2147483648
    %v2137 = vor.u32 1.1754944e-38, %v2136
    %v2138 = vsel %vm2135, %v2137, %v2133
    %v2139 = vmul.f32 1.0, %v2138
    %v2140 = vtanh.pop %v2100
    %v2141 = vxor.u32 %v2101, 2147483648
    %v2142 = vmul.f32 %v2141, 1.442695
    %v2143 = vpow.pop %v2142
    %v2144 = vadd.f32 %v2143, 1.0
    %v2145 = vrcp.pop %v2144
    %v2146 = vmul.f32 %v2144, %v2145
    %v2147 = vsub.f32 1.0, %v2146
    %v2148 = vmul.f32 %v2145, %v2147
    %v2149 = vadd.f32 %v2145, %v2148
    %vm2150 = vweird.f32 %v2144
    %vm2151 = vweird.f32 %v2145
    %vm2152 = vmor %vm2150, %vm2151
    %v2153 = vsel %vm2152, %v2145, %v2149
    %v2154 = vand.u32 2147483647, %v2144
    %vm2155 = vcmp.eq.f32.partialorder %v2154, 8.507059e+37
    %v2156 = vand.u32 %v2144, 2147483648
    %v2157 = vor.u32 1.1754944e-38, %v2156
    %v2158 = vsel %vm2155, %v2157, %v2153
    %v2159 = vmul.f32 1.0, %v2158
    %v2160 = vmul.f32 %v2139, %v1866
    %v2161 = vmul.f32 %v2120, %v2140
    %v2162 = vadd.f32 %v2160, %v2161
    %v2163 = vtanh.pop %v2162
    %v2164 = vmul.f32 %v2159, %v2163
    %v2165 = vpack.c.bf16 %v2164, %v2164
    %2166 = vmatpush.bf16.msra.mxu0 %v1082
    %2167 = vmatpush.bf16.msra.mxu0 %v1078
    %2168 = vmatpush.bf16.msra.mxu0 %v1074
    %2169 = vmatpush.bf16.msra.mxu0 %v1070
    %2170 = vmatpush.bf16.msra.mxu0 %v1066
    %2171 = vmatpush.bf16.msra.mxu0 %v1062
    %2172 = vmatpush.bf16.msra.mxu0 %v1058
    %2173 = vmatpush.bf16.msra.mxu0 %v1054
    %2174 = vmatmul.bf16.gmra.mxu0 %v2041
    %v2175 = vpop.f32.mrf.mxu0
    %v2176 = vadd.f32 0.0, %v2175
    %v2177 = vpop.f32.mrf.mxu0
    %2178 = vdwg.mxu0
    %2179 = vmatpush.bf16.msra.mxu0 %v1083
    %2180 = vmatpush.bf16.msra.mxu0 %v1079
    %2181 = vmatpush.bf16.msra.mxu0 %v1075
    %2182 = vmatpush.bf16.msra.mxu0 %v1071
    %2183 = vmatpush.bf16.msra.mxu0 %v1067
    %2184 = vmatpush.bf16.msra.mxu0 %v1063
    %2185 = vmatpush.bf16.msra.mxu0 %v1059
    %2186 = vmatpush.bf16.msra.mxu0 %v1055
    %2187 = vmatmul.bf16.gmra.mxu0 %v2041
    %v2188 = vpop.f32.mrf.mxu0
    %v2189 = vadd.f32 0.0, %v2188
    %v2190 = vpop.f32.mrf.mxu0
    %2191 = vdwg.mxu0
    %2192 = vmatpush.bf16.msra.mxu0 %v1084
    %2193 = vmatpush.bf16.msra.mxu0 %v1080
    %2194 = vmatpush.bf16.msra.mxu0 %v1076
    %2195 = vmatpush.bf16.msra.mxu0 %v1072
    %2196 = vmatpush.bf16.msra.mxu0 %v1068
    %2197 = vmatpush.bf16.msra.mxu0 %v1064
    %2198 = vmatpush.bf16.msra.mxu0 %v1060
    %2199 = vmatpush.bf16.msra.mxu0 %v1056
    %2200 = vmatmul.bf16.gmra.mxu0 %v2041
    %v2201 = vpop.f32.mrf.mxu0
    %v2202 = vadd.f32 0.0, %v2201
    %v2203 = vpop.f32.mrf.mxu0
    %2204 = vdwg.mxu0
    %2205 = vmatpush.bf16.msra.mxu0 %v1085
    %2206 = vmatpush.bf16.msra.mxu0 %v1081
    %2207 = vmatpush.bf16.msra.mxu0 %v1077
    %2208 = vmatpush.bf16.msra.mxu0 %v1073
    %2209 = vmatpush.bf16.msra.mxu0 %v1069
    %2210 = vmatpush.bf16.msra.mxu0 %v1065
    %2211 = vmatpush.bf16.msra.mxu0 %v1061
    %2212 = vmatpush.bf16.msra.mxu0 %v1057
    %2213 = vmatmul.bf16.gmra.mxu0 %v2041
    %v2214 = vpop.f32.mrf.mxu0
    %v2215 = vadd.f32 0.0, %v2214
    %v2216 = vpop.f32.mrf.mxu0
    %2217 = vdwg.mxu0
    %2218 = vmatpush.bf16.msra.mxu0 %v1294
    %2219 = vmatpush.bf16.msra.mxu0 %v1290
    %2220 = vmatpush.bf16.msra.mxu0 %v1286
    %2221 = vmatpush.bf16.msra.mxu0 %v1282
    %2222 = vmatpush.bf16.msra.mxu0 %v1278
    %2223 = vmatpush.bf16.msra.mxu0 %v1274
    %2224 = vmatpush.bf16.msra.mxu0 %v1270
    %2225 = vmatpush.bf16.msra.mxu0 %v1266
    %2226 = vmatmul.bf16.gmra.mxu0 %v2165
    %v2227 = vpop.f32.mrf.mxu0
    %v2228 = vadd.f32 %v2176, %v2227
    %v2229 = vpop.f32.mrf.mxu0
    %2230 = vdwg.mxu0
    %2231 = vmatpush.bf16.msra.mxu0 %v1295
    %2232 = vmatpush.bf16.msra.mxu0 %v1291
    %2233 = vmatpush.bf16.msra.mxu0 %v1287
    %2234 = vmatpush.bf16.msra.mxu0 %v1283
    %2235 = vmatpush.bf16.msra.mxu0 %v1279
    %2236 = vmatpush.bf16.msra.mxu0 %v1275
    %2237 = vmatpush.bf16.msra.mxu0 %v1271
    %2238 = vmatpush.bf16.msra.mxu0 %v1267
    %2239 = vmatmul.bf16.gmra.mxu0 %v2165
    %v2240 = vpop.f32.mrf.mxu0
    %v2241 = vadd.f32 %v2189, %v2240
    %v2242 = vpop.f32.mrf.mxu0
    %2243 = vdwg.mxu0
    %2244 = vmatpush.bf16.msra.mxu0 %v1296
    %2245 = vmatpush.bf16.msra.mxu0 %v1292
    %2246 = vmatpush.bf16.msra.mxu0 %v1288
    %2247 = vmatpush.bf16.msra.mxu0 %v1284
    %2248 = vmatpush.bf16.msra.mxu0 %v1280
    %2249 = vmatpush.bf16.msra.mxu0 %v1276
    %2250 = vmatpush.bf16.msra.mxu0 %v1272
    %2251 = vmatpush.bf16.msra.mxu0 %v1268
    %2252 = vmatmul.bf16.gmra.mxu0 %v2165
    %v2253 = vpop.f32.mrf.mxu0
    %v2254 = vadd.f32 %v2202, %v2253
    %v2255 = vpop.f32.mrf.mxu0
    %2256 = vdwg.mxu0
    %2257 = vmatpush.bf16.msra.mxu0 %v1297
    %2258 = vmatpush.bf16.msra.mxu0 %v1293
    %2259 = vmatpush.bf16.msra.mxu0 %v1289
    %2260 = vmatpush.bf16.msra.mxu0 %v1285
    %2261 = vmatpush.bf16.msra.mxu0 %v1281
    %2262 = vmatpush.bf16.msra.mxu0 %v1277
    %2263 = vmatpush.bf16.msra.mxu0 %v1273
    %2264 = vmatpush.bf16.msra.mxu0 %v1269
    %2265 = vmatmul.bf16.gmra.mxu0 %v2165
    %v2266 = vpop.f32.mrf.mxu0
    %v2267 = vadd.f32 %v2215, %v2266
    %v2268 = vpop.f32.mrf.mxu0
    %2269 = vdwg.mxu0
    %v2270 = vadd.f32 %v2228, %v554
    %v2271 = vadd.f32 %v2241, %v555
    %v2272 = vadd.f32 %v2254, %v556
    %v2273 = vadd.f32 %v2267, %v557
    %v2274 = vxor.u32 %v2270, 2147483648
    %v2275 = vmul.f32 %v2274, 1.442695
    %v2276 = vpow.pop %v2275
    %v2277 = vadd.f32 %v2276, 1.0
    %v2278 = vrcp.pop %v2277
    %v2279 = vmul.f32 %v2277, %v2278
    %v2280 = vsub.f32 1.0, %v2279
    %v2281 = vmul.f32 %v2278, %v2280
    %v2282 = vadd.f32 %v2278, %v2281
    %vm2283 = vweird.f32 %v2277
    %vm2284 = vweird.f32 %v2278
    %vm2285 = vmor %vm2283, %vm2284
    %v2286 = vsel %vm2285, %v2278, %v2282
    %v2287 = vand.u32 2147483647, %v2277
    %vm2288 = vcmp.eq.f32.partialorder %v2287, 8.507059e+37
    %v2289 = vand.u32 %v2277, 2147483648
    %v2290 = vor.u32 1.1754944e-38, %v2289
    %v2291 = vsel %vm2288, %v2290, %v2286
    %v2292 = vmul.f32 1.0, %v2291
    %v2293 = vxor.u32 %v2271, 2147483648
    %v2294 = vmul.f32 %v2293, 1.442695
    %v2295 = vpow.pop %v2294
    %v2296 = vadd.f32 %v2295, 1.0
    %v2297 = vrcp.pop %v2296
    %v2298 = vmul.f32 %v2296, %v2297
    %v2299 = vsub.f32 1.0, %v2298
    %v2300 = vmul.f32 %v2297, %v2299
    %v2301 = vadd.f32 %v2297, %v2300
    %vm2302 = vweird.f32 %v2296
    %vm2303 = vweird.f32 %v2297
    %vm2304 = vmor %vm2302, %vm2303
    %v2305 = vsel %vm2304, %v2297, %v2301
    %v2306 = vand.u32 2147483647, %v2296
    %vm2307 = vcmp.eq.f32.partialorder %v2306, 8.507059e+37
    %v2308 = vand.u32 %v2296, 2147483648
    %v2309 = vor.u32 1.1754944e-38, %v2308
    %v2310 = vsel %vm2307, %v2309, %v2305
    %v2311 = vmul.f32 1.0, %v2310
    %v2312 = vtanh.pop %v2272
    %v2313 = vxor.u32 %v2273, 2147483648
    %v2314 = vmul.f32 %v2313, 1.442695
    %v2315 = vpow.pop %v2314
    %v2316 = vadd.f32 %v2315, 1.0
    %v2317 = vrcp.pop %v2316
    %v2318 = vmul.f32 %v2316, %v2317
    %v2319 = vsub.f32 1.0, %v2318
    %v2320 = vmul.f32 %v2317, %v2319
    %v2321 = vadd.f32 %v2317, %v2320
    %vm2322 = vweird.f32 %v2316
    %vm2323 = vweird.f32 %v2317
    %vm2324 = vmor %vm2322, %vm2323
    %v2325 = vsel %vm2324, %v2317, %v2321
    %v2326 = vand.u32 2147483647, %v2316
    %vm2327 = vcmp.eq.f32.partialorder %v2326, 8.507059e+37
    %v2328 = vand.u32 %v2316, 2147483648
    %v2329 = vor.u32 1.1754944e-38, %v2328
    %v2330 = vsel %vm2327, %v2329, %v2325
    %v2331 = vmul.f32 1.0, %v2330
    %v2332 = vmul.f32 %v2311, %v2038
    %v2333 = vmul.f32 %v2292, %v2312
    %v2334 = vadd.f32 %v2332, %v2333
    %v2335 = vtanh.pop %v2334
    %v2336 = vmul.f32 %v2331, %v2335
    %v2337 = vpack.c.bf16 %v2336, %v2336
    %v2338 = vld [vmem:[#allocation2 + $0x80] sm:$0xff]
    %v2339 = vld [vmem:[#allocation2 + $0x88] sm:$0xff]
    %v2340 = vld [vmem:[#allocation2 + $0x90] sm:$0xff]
    %v2341 = vld [vmem:[#allocation2 + $0x98] sm:$0xff]
    %2342 = vmatpush.bf16.msra.mxu0 %v802
    %2343 = vmatpush.bf16.msra.mxu0 %v798
    %2344 = vmatpush.bf16.msra.mxu0 %v794
    %2345 = vmatpush.bf16.msra.mxu0 %v790
    %2346 = vmatpush.bf16.msra.mxu0 %v786
    %2347 = vmatpush.bf16.msra.mxu0 %v782
    %2348 = vmatpush.bf16.msra.mxu0 %v778
    %2349 = vmatpush.bf16.msra.mxu0 %v774
    %2350 = vmatmul.bf16.gmra.mxu0 %v2165
    %v2351 = vpop.f32.mrf.mxu0
    %v2352 = vadd.f32 0.0, %v2351
    %v2353 = vpop.f32.mrf.mxu0
    %2354 = vdwg.mxu0
    %2355 = vmatpush.bf16.msra.mxu0 %v803
    %2356 = vmatpush.bf16.msra.mxu0 %v799
    %2357 = vmatpush.bf16.msra.mxu0 %v795
    %2358 = vmatpush.bf16.msra.mxu0 %v791
    %2359 = vmatpush.bf16.msra.mxu0 %v787
    %2360 = vmatpush.bf16.msra.mxu0 %v783
    %2361 = vmatpush.bf16.msra.mxu0 %v779
    %2362 = vmatpush.bf16.msra.mxu0 %v775
    %2363 = vmatmul.bf16.gmra.mxu0 %v2165
    %v2364 = vpop.f32.mrf.mxu0
    %v2365 = vadd.f32 0.0, %v2364
    %v2366 = vpop.f32.mrf.mxu0
    %2367 = vdwg.mxu0
    %2368 = vmatpush.bf16.msra.mxu0 %v804
    %2369 = vmatpush.bf16.msra.mxu0 %v800
    %2370 = vmatpush.bf16.msra.mxu0 %v796
    %2371 = vmatpush.bf16.msra.mxu0 %v792
    %2372 = vmatpush.bf16.msra.mxu0 %v788
    %2373 = vmatpush.bf16.msra.mxu0 %v784
    %2374 = vmatpush.bf16.msra.mxu0 %v780
    %2375 = vmatpush.bf16.msra.mxu0 %v776
    %2376 = vmatmul.bf16.gmra.mxu0 %v2165
    %v2377 = vpop.f32.mrf.mxu0
    %v2378 = vadd.f32 0.0, %v2377
    %v2379 = vpop.f32.mrf.mxu0
    %2380 = vdwg.mxu0
    %2381 = vmatpush.bf16.msra.mxu0 %v805
    %2382 = vmatpush.bf16.msra.mxu0 %v801
    %2383 = vmatpush.bf16.msra.mxu0 %v797
    %2384 = vmatpush.bf16.msra.mxu0 %v793
    %2385 = vmatpush.bf16.msra.mxu0 %v789
    %2386 = vmatpush.bf16.msra.mxu0 %v785
    %2387 = vmatpush.bf16.msra.mxu0 %v781
    %2388 = vmatpush.bf16.msra.mxu0 %v777
    %2389 = vmatmul.bf16.gmra.mxu0 %v2165
    %v2390 = vpop.f32.mrf.mxu0
    %v2391 = vadd.f32 0.0, %v2390
    %v2392 = vpop.f32.mrf.mxu0
    %2393 = vdwg.mxu0
    %v2394 = vadd.f32 %v2338, %v2352
    %v2395 = vadd.f32 %v2339, %v2365
    %v2396 = vadd.f32 %v2340, %v2378
    %v2397 = vadd.f32 %v2341, %v2391
    %v2398 = vxor.u32 %v2394, 2147483648
    %v2399 = vmul.f32 %v2398, 1.442695
    %v2400 = vpow.pop %v2399
    %v2401 = vadd.f32 %v2400, 1.0
    %v2402 = vrcp.pop %v2401
    %v2403 = vmul.f32 %v2401, %v2402
    %v2404 = vsub.f32 1.0, %v2403
    %v2405 = vmul.f32 %v2402, %v2404
    %v2406 = vadd.f32 %v2402, %v2405
    %vm2407 = vweird.f32 %v2401
    %vm2408 = vweird.f32 %v2402
    %vm2409 = vmor %vm2407, %vm2408
    %v2410 = vsel %vm2409, %v2402, %v2406
    %v2411 = vand.u32 2147483647, %v2401
    %vm2412 = vcmp.eq.f32.partialorder %v2411, 8.507059e+37
    %v2413 = vand.u32 %v2401, 2147483648
    %v2414 = vor.u32 1.1754944e-38, %v2413
    %v2415 = vsel %vm2412, %v2414, %v2410
    %v2416 = vmul.f32 1.0, %v2415
    %v2417 = vxor.u32 %v2395, 2147483648
    %v2418 = vmul.f32 %v2417, 1.442695
    %v2419 = vpow.pop %v2418
    %v2420 = vadd.f32 %v2419, 1.0
    %v2421 = vrcp.pop %v2420
    %v2422 = vmul.f32 %v2420, %v2421
    %v2423 = vsub.f32 1.0, %v2422
    %v2424 = vmul.f32 %v2421, %v2423
    %v2425 = vadd.f32 %v2421, %v2424
    %vm2426 = vweird.f32 %v2420
    %vm2427 = vweird.f32 %v2421
    %vm2428 = vmor %vm2426, %vm2427
    %v2429 = vsel %vm2428, %v2421, %v2425
    %v2430 = vand.u32 2147483647, %v2420
    %vm2431 = vcmp.eq.f32.partialorder %v2430, 8.507059e+37
    %v2432 = vand.u32 %v2420, 2147483648
    %v2433 = vor.u32 1.1754944e-38, %v2432
    %v2434 = vsel %vm2431, %v2433, %v2429
    %v2435 = vmul.f32 1.0, %v2434
    %v2436 = vtanh.pop %v2396
    %v2437 = vxor.u32 %v2397, 2147483648
    %v2438 = vmul.f32 %v2437, 1.442695
    %v2439 = vpow.pop %v2438
    %v2440 = vadd.f32 %v2439, 1.0
    %v2441 = vrcp.pop %v2440
    %v2442 = vmul.f32 %v2440, %v2441
    %v2443 = vsub.f32 1.0, %v2442
    %v2444 = vmul.f32 %v2441, %v2443
    %v2445 = vadd.f32 %v2441, %v2444
    %vm2446 = vweird.f32 %v2440
    %vm2447 = vweird.f32 %v2441
    %vm2448 = vmor %vm2446, %vm2447
    %v2449 = vsel %vm2448, %v2441, %v2445
    %v2450 = vand.u32 2147483647, %v2440
    %vm2451 = vcmp.eq.f32.partialorder %v2450, 8.507059e+37
    %v2452 = vand.u32 %v2440, 2147483648
    %v2453 = vor.u32 1.1754944e-38, %v2452
    %v2454 = vsel %vm2451, %v2453, %v2449
    %v2455 = vmul.f32 1.0, %v2454
    %v2456 = vmul.f32 %v2435, %v2162
    %v2457 = vmul.f32 %v2416, %v2436
    %v2458 = vadd.f32 %v2456, %v2457
    %v2459 = vtanh.pop %v2458
    %v2460 = vmul.f32 %v2455, %v2459
    %v2461 = vpack.c.bf16 %v2460, %v2460
    %2462 = vmatpush.bf16.msra.mxu0 %v1082
    %2463 = vmatpush.bf16.msra.mxu0 %v1078
    %2464 = vmatpush.bf16.msra.mxu0 %v1074
    %2465 = vmatpush.bf16.msra.mxu0 %v1070
    %2466 = vmatpush.bf16.msra.mxu0 %v1066
    %2467 = vmatpush.bf16.msra.mxu0 %v1062
    %2468 = vmatpush.bf16.msra.mxu0 %v1058
    %2469 = vmatpush.bf16.msra.mxu0 %v1054
    %2470 = vmatmul.bf16.gmra.mxu0 %v2337
    %v2471 = vpop.f32.mrf.mxu0
    %v2472 = vadd.f32 0.0, %v2471
    %v2473 = vpop.f32.mrf.mxu0
    %2474 = vdwg.mxu0
    %2475 = vmatpush.bf16.msra.mxu0 %v1083
    %2476 = vmatpush.bf16.msra.mxu0 %v1079
    %2477 = vmatpush.bf16.msra.mxu0 %v1075
    %2478 = vmatpush.bf16.msra.mxu0 %v1071
    %2479 = vmatpush.bf16.msra.mxu0 %v1067
    %2480 = vmatpush.bf16.msra.mxu0 %v1063
    %2481 = vmatpush.bf16.msra.mxu0 %v1059
    %2482 = vmatpush.bf16.msra.mxu0 %v1055
    %2483 = vmatmul.bf16.gmra.mxu0 %v2337
    %v2484 = vpop.f32.mrf.mxu0
    %v2485 = vadd.f32 0.0, %v2484
    %v2486 = vpop.f32.mrf.mxu0
    %2487 = vdwg.mxu0
    %2488 = vmatpush.bf16.msra.mxu0 %v1084
    %2489 = vmatpush.bf16.msra.mxu0 %v1080
    %2490 = vmatpush.bf16.msra.mxu0 %v1076
    %2491 = vmatpush.bf16.msra.mxu0 %v1072
    %2492 = vmatpush.bf16.msra.mxu0 %v1068
    %2493 = vmatpush.bf16.msra.mxu0 %v1064
    %2494 = vmatpush.bf16.msra.mxu0 %v1060
    %2495 = vmatpush.bf16.msra.mxu0 %v1056
    %2496 = vmatmul.bf16.gmra.mxu0 %v2337
    %v2497 = vpop.f32.mrf.mxu0
    %v2498 = vadd.f32 0.0, %v2497
    %v2499 = vpop.f32.mrf.mxu0
    %2500 = vdwg.mxu0
    %2501 = vmatpush.bf16.msra.mxu0 %v1085
    %2502 = vmatpush.bf16.msra.mxu0 %v1081
    %2503 = vmatpush.bf16.msra.mxu0 %v1077
    %2504 = vmatpush.bf16.msra.mxu0 %v1073
    %2505 = vmatpush.bf16.msra.mxu0 %v1069
    %2506 = vmatpush.bf16.msra.mxu0 %v1065
    %2507 = vmatpush.bf16.msra.mxu0 %v1061
    %2508 = vmatpush.bf16.msra.mxu0 %v1057
    %2509 = vmatmul.bf16.gmra.mxu0 %v2337
    %v2510 = vpop.f32.mrf.mxu0
    %v2511 = vadd.f32 0.0, %v2510
    %v2512 = vpop.f32.mrf.mxu0
    %2513 = vdwg.mxu0
    %2514 = vmatpush.bf16.msra.mxu0 %v1294
    %2515 = vmatpush.bf16.msra.mxu0 %v1290
    %2516 = vmatpush.bf16.msra.mxu0 %v1286
    %2517 = vmatpush.bf16.msra.mxu0 %v1282
    %2518 = vmatpush.bf16.msra.mxu0 %v1278
    %2519 = vmatpush.bf16.msra.mxu0 %v1274
    %2520 = vmatpush.bf16.msra.mxu0 %v1270
    %2521 = vmatpush.bf16.msra.mxu0 %v1266
    %2522 = vmatmul.bf16.gmra.mxu0 %v2461
    %v2523 = vpop.f32.mrf.mxu0
    %v2524 = vadd.f32 %v2472, %v2523
    %v2525 = vpop.f32.mrf.mxu0
    %2526 = vdwg.mxu0
    %2527 = vmatpush.bf16.msra.mxu0 %v1295
    %2528 = vmatpush.bf16.msra.mxu0 %v1291
    %2529 = vmatpush.bf16.msra.mxu0 %v1287
    %2530 = vmatpush.bf16.msra.mxu0 %v1283
    %2531 = vmatpush.bf16.msra.mxu0 %v1279
    %2532 = vmatpush.bf16.msra.mxu0 %v1275
    %2533 = vmatpush.bf16.msra.mxu0 %v1271
    %2534 = vmatpush.bf16.msra.mxu0 %v1267
    %2535 = vmatmul.bf16.gmra.mxu0 %v2461
    %v2536 = vpop.f32.mrf.mxu0
    %v2537 = vadd.f32 %v2485, %v2536
    %v2538 = vpop.f32.mrf.mxu0
    %2539 = vdwg.mxu0
    %2540 = vmatpush.bf16.msra.mxu0 %v1296
    %2541 = vmatpush.bf16.msra.mxu0 %v1292
    %2542 = vmatpush.bf16.msra.mxu0 %v1288
    %2543 = vmatpush.bf16.msra.mxu0 %v1284
    %2544 = vmatpush.bf16.msra.mxu0 %v1280
    %2545 = vmatpush.bf16.msra.mxu0 %v1276
    %2546 = vmatpush.bf16.msra.mxu0 %v1272
    %2547 = vmatpush.bf16.msra.mxu0 %v1268
    %2548 = vmatmul.bf16.gmra.mxu0 %v2461
    %v2549 = vpop.f32.mrf.mxu0
    %v2550 = vadd.f32 %v2498, %v2549
    %v2551 = vpop.f32.mrf.mxu0
    %2552 = vdwg.mxu0
    %2553 = vmatpush.bf16.msra.mxu0 %v1297
    %2554 = vmatpush.bf16.msra.mxu0 %v1293
    %2555 = vmatpush.bf16.msra.mxu0 %v1289
    %2556 = vmatpush.bf16.msra.mxu0 %v1285
    %2557 = vmatpush.bf16.msra.mxu0 %v1281
    %2558 = vmatpush.bf16.msra.mxu0 %v1277
    %2559 = vmatpush.bf16.msra.mxu0 %v1273
    %2560 = vmatpush.bf16.msra.mxu0 %v1269
    %2561 = vmatmul.bf16.gmra.mxu0 %v2461
    %v2562 = vpop.f32.mrf.mxu0
    %v2563 = vadd.f32 %v2511, %v2562
    %v2564 = vpop.f32.mrf.mxu0
    %2565 = vdwg.mxu0
    %v2566 = vadd.f32 %v2524, %v554
    %v2567 = vadd.f32 %v2537, %v555
    %v2568 = vadd.f32 %v2550, %v556
    %v2569 = vadd.f32 %v2563, %v557
    %v2570 = vxor.u32 %v2566, 2147483648
    %v2571 = vmul.f32 %v2570, 1.442695
    %v2572 = vpow.pop %v2571
    %v2573 = vadd.f32 %v2572, 1.0
    %v2574 = vrcp.pop %v2573
    %v2575 = vmul.f32 %v2573, %v2574
    %v2576 = vsub.f32 1.0, %v2575
    %v2577 = vmul.f32 %v2574, %v2576
    %v2578 = vadd.f32 %v2574, %v2577
    %vm2579 = vweird.f32 %v2573
    %vm2580 = vweird.f32 %v2574
    %vm2581 = vmor %vm2579, %vm2580
    %v2582 = vsel %vm2581, %v2574, %v2578
    %v2583 = vand.u32 2147483647, %v2573
    %vm2584 = vcmp.eq.f32.partialorder %v2583, 8.507059e+37
    %v2585 = vand.u32 %v2573, 2147483648
    %v2586 = vor.u32 1.1754944e-38, %v2585
    %v2587 = vsel %vm2584, %v2586, %v2582
    %v2588 = vmul.f32 1.0, %v2587
    %v2589 = vxor.u32 %v2567, 2147483648
    %v2590 = vmul.f32 %v2589, 1.442695
    %v2591 = vpow.pop %v2590
    %v2592 = vadd.f32 %v2591, 1.0
    %v2593 = vrcp.pop %v2592
    %v2594 = vmul.f32 %v2592, %v2593
    %v2595 = vsub.f32 1.0, %v2594
    %v2596 = vmul.f32 %v2593, %v2595
    %v2597 = vadd.f32 %v2593, %v2596
    %vm2598 = vweird.f32 %v2592
    %vm2599 = vweird.f32 %v2593
    %vm2600 = vmor %vm2598, %vm2599
    %v2601 = vsel %vm2600, %v2593, %v2597
    %v2602 = vand.u32 2147483647, %v2592
    %vm2603 = vcmp.eq.f32.partialorder %v2602, 8.507059e+37
    %v2604 = vand.u32 %v2592, 2147483648
    %v2605 = vor.u32 1.1754944e-38, %v2604
    %v2606 = vsel %vm2603, %v2605, %v2601
    %v2607 = vmul.f32 1.0, %v2606
    %v2608 = vtanh.pop %v2568
    %v2609 = vxor.u32 %v2569, 2147483648
    %v2610 = vmul.f32 %v2609, 1.442695
    %v2611 = vpow.pop %v2610
    %v2612 = vadd.f32 %v2611, 1.0
    %v2613 = vrcp.pop %v2612
    %v2614 = vmul.f32 %v2612, %v2613
    %v2615 = vsub.f32 1.0, %v2614
    %v2616 = vmul.f32 %v2613, %v2615
    %v2617 = vadd.f32 %v2613, %v2616
    %vm2618 = vweird.f32 %v2612
    %vm2619 = vweird.f32 %v2613
    %vm2620 = vmor %vm2618, %vm2619
    %v2621 = vsel %vm2620, %v2613, %v2617
    %v2622 = vand.u32 2147483647, %v2612
    %vm2623 = vcmp.eq.f32.partialorder %v2622, 8.507059e+37
    %v2624 = vand.u32 %v2612, 2147483648
    %v2625 = vor.u32 1.1754944e-38, %v2624
    %v2626 = vsel %vm2623, %v2625, %v2621
    %v2627 = vmul.f32 1.0, %v2626
    %v2628 = vmul.f32 %v2607, %v2334
    %v2629 = vmul.f32 %v2588, %v2608
    %v2630 = vadd.f32 %v2628, %v2629
    %v2631 = vtanh.pop %v2630
    %v2632 = vmul.f32 %v2627, %v2631
    %v2633 = vpack.c.bf16 %v2632, %v2632
    %v2634 = vld [vmem:[#allocation2 + $0xa0] sm:$0xff]
    %v2635 = vld [vmem:[#allocation2 + $0xa8] sm:$0xff]
    %v2636 = vld [vmem:[#allocation2 + $0xb0] sm:$0xff]
    %v2637 = vld [vmem:[#allocation2 + $0xb8] sm:$0xff]
    %2638 = vmatpush.bf16.msra.mxu0 %v802
    %2639 = vmatpush.bf16.msra.mxu0 %v798
    %2640 = vmatpush.bf16.msra.mxu0 %v794
    %2641 = vmatpush.bf16.msra.mxu0 %v790
    %2642 = vmatpush.bf16.msra.mxu0 %v786
    %2643 = vmatpush.bf16.msra.mxu0 %v782
    %2644 = vmatpush.bf16.msra.mxu0 %v778
    %2645 = vmatpush.bf16.msra.mxu0 %v774
    %2646 = vmatmul.bf16.gmra.mxu0 %v2461
    %v2647 = vpop.f32.mrf.mxu0
    %v2648 = vadd.f32 0.0, %v2647
    %v2649 = vpop.f32.mrf.mxu0
    %2650 = vdwg.mxu0
    %2651 = vmatpush.bf16.msra.mxu0 %v803
    %2652 = vmatpush.bf16.msra.mxu0 %v799
    %2653 = vmatpush.bf16.msra.mxu0 %v795
    %2654 = vmatpush.bf16.msra.mxu0 %v791
    %2655 = vmatpush.bf16.msra.mxu0 %v787
    %2656 = vmatpush.bf16.msra.mxu0 %v783
    %2657 = vmatpush.bf16.msra.mxu0 %v779
    %2658 = vmatpush.bf16.msra.mxu0 %v775
    %2659 = vmatmul.bf16.gmra.mxu0 %v2461
    %v2660 = vpop.f32.mrf.mxu0
    %v2661 = vadd.f32 0.0, %v2660
    %v2662 = vpop.f32.mrf.mxu0
    %2663 = vdwg.mxu0
    %2664 = vmatpush.bf16.msra.mxu0 %v804
    %2665 = vmatpush.bf16.msra.mxu0 %v800
    %2666 = vmatpush.bf16.msra.mxu0 %v796
    %2667 = vmatpush.bf16.msra.mxu0 %v792
    %2668 = vmatpush.bf16.msra.mxu0 %v788
    %2669 = vmatpush.bf16.msra.mxu0 %v784
    %2670 = vmatpush.bf16.msra.mxu0 %v780
    %2671 = vmatpush.bf16.msra.mxu0 %v776
    %2672 = vmatmul.bf16.gmra.mxu0 %v2461
    %v2673 = vpop.f32.mrf.mxu0
    %v2674 = vadd.f32 0.0, %v2673
    %v2675 = vpop.f32.mrf.mxu0
    %2676 = vdwg.mxu0
    %2677 = vmatpush.bf16.msra.mxu0 %v805
    %2678 = vmatpush.bf16.msra.mxu0 %v801
    %2679 = vmatpush.bf16.msra.mxu0 %v797
    %2680 = vmatpush.bf16.msra.mxu0 %v793
    %2681 = vmatpush.bf16.msra.mxu0 %v789
    %2682 = vmatpush.bf16.msra.mxu0 %v785
    %2683 = vmatpush.bf16.msra.mxu0 %v781
    %2684 = vmatpush.bf16.msra.mxu0 %v777
    %2685 = vmatmul.bf16.gmra.mxu0 %v2461
    %v2686 = vpop.f32.mrf.mxu0
    %v2687 = vadd.f32 0.0, %v2686
    %v2688 = vpop.f32.mrf.mxu0
    %2689 = vdwg.mxu0
    %v2690 = vadd.f32 %v2634, %v2648
    %v2691 = vadd.f32 %v2635, %v2661
    %v2692 = vadd.f32 %v2636, %v2674
    %v2693 = vadd.f32 %v2637, %v2687
    %v2694 = vxor.u32 %v2690, 2147483648
    %v2695 = vmul.f32 %v2694, 1.442695
    %v2696 = vpow.pop %v2695
    %v2697 = vadd.f32 %v2696, 1.0
    %v2698 = vrcp.pop %v2697
    %v2699 = vmul.f32 %v2697, %v2698
    %v2700 = vsub.f32 1.0, %v2699
    %v2701 = vmul.f32 %v2698, %v2700
    %v2702 = vadd.f32 %v2698, %v2701
    %vm2703 = vweird.f32 %v2697
    %vm2704 = vweird.f32 %v2698
    %vm2705 = vmor %vm2703, %vm2704
    %v2706 = vsel %vm2705, %v2698, %v2702
    %v2707 = vand.u32 2147483647, %v2697
    %vm2708 = vcmp.eq.f32.partialorder %v2707, 8.507059e+37
    %v2709 = vand.u32 %v2697, 2147483648
    %v2710 = vor.u32 1.1754944e-38, %v2709
    %v2711 = vsel %vm2708, %v2710, %v2706
    %v2712 = vmul.f32 1.0, %v2711
    %v2713 = vxor.u32 %v2691, 2147483648
    %v2714 = vmul.f32 %v2713, 1.442695
    %v2715 = vpow.pop %v2714
    %v2716 = vadd.f32 %v2715, 1.0
    %v2717 = vrcp.pop %v2716
    %v2718 = vmul.f32 %v2716, %v2717
    %v2719 = vsub.f32 1.0, %v2718
    %v2720 = vmul.f32 %v2717, %v2719
    %v2721 = vadd.f32 %v2717, %v2720
    %vm2722 = vweird.f32 %v2716
    %vm2723 = vweird.f32 %v2717
    %vm2724 = vmor %vm2722, %vm2723
    %v2725 = vsel %vm2724, %v2717, %v2721
    %v2726 = vand.u32 2147483647, %v2716
    %vm2727 = vcmp.eq.f32.partialorder %v2726, 8.507059e+37
    %v2728 = vand.u32 %v2716, 2147483648
    %v2729 = vor.u32 1.1754944e-38, %v2728
    %v2730 = vsel %vm2727, %v2729, %v2725
    %v2731 = vmul.f32 1.0, %v2730
    %v2732 = vtanh.pop %v2692
    %v2733 = vxor.u32 %v2693, 2147483648
    %v2734 = vmul.f32 %v2733, 1.442695
    %v2735 = vpow.pop %v2734
    %v2736 = vadd.f32 %v2735, 1.0
    %v2737 = vrcp.pop %v2736
    %v2738 = vmul.f32 %v2736, %v2737
    %v2739 = vsub.f32 1.0, %v2738
    %v2740 = vmul.f32 %v2737, %v2739
    %v2741 = vadd.f32 %v2737, %v2740
    %vm2742 = vweird.f32 %v2736
    %vm2743 = vweird.f32 %v2737
    %vm2744 = vmor %vm2742, %vm2743
    %v2745 = vsel %vm2744, %v2737, %v2741
    %v2746 = vand.u32 2147483647, %v2736
    %vm2747 = vcmp.eq.f32.partialorder %v2746, 8.507059e+37
    %v2748 = vand.u32 %v2736, 2147483648
    %v2749 = vor.u32 1.1754944e-38, %v2748
    %v2750 = vsel %vm2747, %v2749, %v2745
    %v2751 = vmul.f32 1.0, %v2750
    %v2752 = vmul.f32 %v2731, %v2458
    %v2753 = vmul.f32 %v2712, %v2732
    %v2754 = vadd.f32 %v2752, %v2753
    %v2755 = vtanh.pop %v2754
    %v2756 = vmul.f32 %v2751, %v2755
    %v2757 = vpack.c.bf16 %v2756, %v2756
    %2758 = vmatpush.bf16.msra.mxu0 %v1082
    %2759 = vmatpush.bf16.msra.mxu0 %v1078
    %2760 = vmatpush.bf16.msra.mxu0 %v1074
    %2761 = vmatpush.bf16.msra.mxu0 %v1070
    %2762 = vmatpush.bf16.msra.mxu0 %v1066
    %2763 = vmatpush.bf16.msra.mxu0 %v1062
    %2764 = vmatpush.bf16.msra.mxu0 %v1058
    %2765 = vmatpush.bf16.msra.mxu0 %v1054
    %2766 = vmatmul.bf16.gmra.mxu0 %v2633
    %v2767 = vpop.f32.mrf.mxu0
    %v2768 = vadd.f32 0.0, %v2767
    %v2769 = vpop.f32.mrf.mxu0
    %2770 = vdwg.mxu0
    %2771 = vmatpush.bf16.msra.mxu0 %v1083
    %2772 = vmatpush.bf16.msra.mxu0 %v1079
    %2773 = vmatpush.bf16.msra.mxu0 %v1075
    %2774 = vmatpush.bf16.msra.mxu0 %v1071
    %2775 = vmatpush.bf16.msra.mxu0 %v1067
    %2776 = vmatpush.bf16.msra.mxu0 %v1063
    %2777 = vmatpush.bf16.msra.mxu0 %v1059
    %2778 = vmatpush.bf16.msra.mxu0 %v1055
    %2779 = vmatmul.bf16.gmra.mxu0 %v2633
    %v2780 = vpop.f32.mrf.mxu0
    %v2781 = vadd.f32 0.0, %v2780
    %v2782 = vpop.f32.mrf.mxu0
    %2783 = vdwg.mxu0
    %2784 = vmatpush.bf16.msra.mxu0 %v1084
    %2785 = vmatpush.bf16.msra.mxu0 %v1080
    %2786 = vmatpush.bf16.msra.mxu0 %v1076
    %2787 = vmatpush.bf16.msra.mxu0 %v1072
    %2788 = vmatpush.bf16.msra.mxu0 %v1068
    %2789 = vmatpush.bf16.msra.mxu0 %v1064
    %2790 = vmatpush.bf16.msra.mxu0 %v1060
    %2791 = vmatpush.bf16.msra.mxu0 %v1056
    %2792 = vmatmul.bf16.gmra.mxu0 %v2633
    %v2793 = vpop.f32.mrf.mxu0
    %v2794 = vadd.f32 0.0, %v2793
    %v2795 = vpop.f32.mrf.mxu0
    %2796 = vdwg.mxu0
    %2797 = vmatpush.bf16.msra.mxu0 %v1085
    %2798 = vmatpush.bf16.msra.mxu0 %v1081
    %2799 = vmatpush.bf16.msra.mxu0 %v1077
    %2800 = vmatpush.bf16.msra.mxu0 %v1073
    %2801 = vmatpush.bf16.msra.mxu0 %v1069
    %2802 = vmatpush.bf16.msra.mxu0 %v1065
    %2803 = vmatpush.bf16.msra.mxu0 %v1061
    %2804 = vmatpush.bf16.msra.mxu0 %v1057
    %2805 = vmatmul.bf16.gmra.mxu0 %v2633
    %v2806 = vpop.f32.mrf.mxu0
    %v2807 = vadd.f32 0.0, %v2806
    %v2808 = vpop.f32.mrf.mxu0
    %2809 = vdwg.mxu0
    %2810 = vmatpush.bf16.msra.mxu0 %v1294
    %2811 = vmatpush.bf16.msra.mxu0 %v1290
    %2812 = vmatpush.bf16.msra.mxu0 %v1286
    %2813 = vmatpush.bf16.msra.mxu0 %v1282
    %2814 = vmatpush.bf16.msra.mxu0 %v1278
    %2815 = vmatpush.bf16.msra.mxu0 %v1274
    %2816 = vmatpush.bf16.msra.mxu0 %v1270
    %2817 = vmatpush.bf16.msra.mxu0 %v1266
    %2818 = vmatmul.bf16.gmra.mxu0 %v2757
    %v2819 = vpop.f32.mrf.mxu0
    %v2820 = vadd.f32 %v2768, %v2819
    %v2821 = vpop.f32.mrf.mxu0
    %2822 = vdwg.mxu0
    %2823 = vmatpush.bf16.msra.mxu0 %v1295
    %2824 = vmatpush.bf16.msra.mxu0 %v1291
    %2825 = vmatpush.bf16.msra.mxu0 %v1287
    %2826 = vmatpush.bf16.msra.mxu0 %v1283
    %2827 = vmatpush.bf16.msra.mxu0 %v1279
    %2828 = vmatpush.bf16.msra.mxu0 %v1275
    %2829 = vmatpush.bf16.msra.mxu0 %v1271
    %2830 = vmatpush.bf16.msra.mxu0 %v1267
    %2831 = vmatmul.bf16.gmra.mxu0 %v2757
    %v2832 = vpop.f32.mrf.mxu0
    %v2833 = vadd.f32 %v2781, %v2832
    %v2834 = vpop.f32.mrf.mxu0
    %2835 = vdwg.mxu0
    %2836 = vmatpush.bf16.msra.mxu0 %v1296
    %2837 = vmatpush.bf16.msra.mxu0 %v1292
    %2838 = vmatpush.bf16.msra.mxu0 %v1288
    %2839 = vmatpush.bf16.msra.mxu0 %v1284
    %2840 = vmatpush.bf16.msra.mxu0 %v1280
    %2841 = vmatpush.bf16.msra.mxu0 %v1276
    %2842 = vmatpush.bf16.msra.mxu0 %v1272
    %2843 = vmatpush.bf16.msra.mxu0 %v1268
    %2844 = vmatmul.bf16.gmra.mxu0 %v2757
    %v2845 = vpop.f32.mrf.mxu0
    %v2846 = vadd.f32 %v2794, %v2845
    %v2847 = vpop.f32.mrf.mxu0
    %2848 = vdwg.mxu0
    %2849 = vmatpush.bf16.msra.mxu0 %v1297
    %2850 = vmatpush.bf16.msra.mxu0 %v1293
    %2851 = vmatpush.bf16.msra.mxu0 %v1289
    %2852 = vmatpush.bf16.msra.mxu0 %v1285
    %2853 = vmatpush.bf16.msra.mxu0 %v1281
    %2854 = vmatpush.bf16.msra.mxu0 %v1277
    %2855 = vmatpush.bf16.msra.mxu0 %v1273
    %2856 = vmatpush.bf16.msra.mxu0 %v1269
    %2857 = vmatmul.bf16.gmra.mxu0 %v2757
    %v2858 = vpop.f32.mrf.mxu0
    %v2859 = vadd.f32 %v2807, %v2858
    %v2860 = vpop.f32.mrf.mxu0
    %2861 = vdwg.mxu0
    %v2862 = vadd.f32 %v2820, %v554
    %v2863 = vadd.f32 %v2833, %v555
    %v2864 = vadd.f32 %v2846, %v556
    %v2865 = vadd.f32 %v2859, %v557
    %v2866 = vxor.u32 %v2862, 2147483648
    %v2867 = vmul.f32 %v2866, 1.442695
    %v2868 = vpow.pop %v2867
    %v2869 = vadd.f32 %v2868, 1.0
    %v2870 = vrcp.pop %v2869
    %v2871 = vmul.f32 %v2869, %v2870
    %v2872 = vsub.f32 1.0, %v2871
    %v2873 = vmul.f32 %v2870, %v2872
    %v2874 = vadd.f32 %v2870, %v2873
    %vm2875 = vweird.f32 %v2869
    %vm2876 = vweird.f32 %v2870
    %vm2877 = vmor %vm2875, %vm2876
    %v2878 = vsel %vm2877, %v2870, %v2874
    %v2879 = vand.u32 2147483647, %v2869
    %vm2880 = vcmp.eq.f32.partialorder %v2879, 8.507059e+37
    %v2881 = vand.u32 %v2869, 2147483648
    %v2882 = vor.u32 1.1754944e-38, %v2881
    %v2883 = vsel %vm2880, %v2882, %v2878
    %v2884 = vmul.f32 1.0, %v2883
    %v2885 = vxor.u32 %v2863, 2147483648
    %v2886 = vmul.f32 %v2885, 1.442695
    %v2887 = vpow.pop %v2886
    %v2888 = vadd.f32 %v2887, 1.0
    %v2889 = vrcp.pop %v2888
    %v2890 = vmul.f32 %v2888, %v2889
    %v2891 = vsub.f32 1.0, %v2890
    %v2892 = vmul.f32 %v2889, %v2891
    %v2893 = vadd.f32 %v2889, %v2892
    %vm2894 = vweird.f32 %v2888
    %vm2895 = vweird.f32 %v2889
    %vm2896 = vmor %vm2894, %vm2895
    %v2897 = vsel %vm2896, %v2889, %v2893
    %v2898 = vand.u32 2147483647, %v2888
    %vm2899 = vcmp.eq.f32.partialorder %v2898, 8.507059e+37
    %v2900 = vand.u32 %v2888, 2147483648
    %v2901 = vor.u32 1.1754944e-38, %v2900
    %v2902 = vsel %vm2899, %v2901, %v2897
    %v2903 = vmul.f32 1.0, %v2902
    %v2904 = vtanh.pop %v2864
    %v2905 = vxor.u32 %v2865, 2147483648
    %v2906 = vmul.f32 %v2905, 1.442695
    %v2907 = vpow.pop %v2906
    %v2908 = vadd.f32 %v2907, 1.0
    %v2909 = vrcp.pop %v2908
    %v2910 = vmul.f32 %v2908, %v2909
    %v2911 = vsub.f32 1.0, %v2910
    %v2912 = vmul.f32 %v2909, %v2911
    %v2913 = vadd.f32 %v2909, %v2912
    %vm2914 = vweird.f32 %v2908
    %vm2915 = vweird.f32 %v2909
    %vm2916 = vmor %vm2914, %vm2915
    %v2917 = vsel %vm2916, %v2909, %v2913
    %v2918 = vand.u32 2147483647, %v2908
    %vm2919 = vcmp.eq.f32.partialorder %v2918, 8.507059e+37
    %v2920 = vand.u32 %v2908, 2147483648
    %v2921 = vor.u32 1.1754944e-38, %v2920
    %v2922 = vsel %vm2919, %v2921, %v2917
    %v2923 = vmul.f32 1.0, %v2922
    %v2924 = vmul.f32 %v2903, %v2630
    %v2925 = vmul.f32 %v2884, %v2904
    %v2926 = vadd.f32 %v2924, %v2925
    %v2927 = vtanh.pop %v2926
    %v2928 = vmul.f32 %v2923, %v2927
    %v2929 = vpack.c.bf16 %v2928, %v2928
    %v2930 = vld [vmem:[#allocation2 + $0xc0] sm:$0xff]
    %v2931 = vld [vmem:[#allocation2 + $0xc8] sm:$0xff]
    %v2932 = vld [vmem:[#allocation2 + $0xd0] sm:$0xff]
    %v2933 = vld [vmem:[#allocation2 + $0xd8] sm:$0xff]
    %2934 = vmatpush.bf16.msra.mxu0 %v802
    %2935 = vmatpush.bf16.msra.mxu0 %v798
    %2936 = vmatpush.bf16.msra.mxu0 %v794
    %2937 = vmatpush.bf16.msra.mxu0 %v790
    %2938 = vmatpush.bf16.msra.mxu0 %v786
    %2939 = vmatpush.bf16.msra.mxu0 %v782
    %2940 = vmatpush.bf16.msra.mxu0 %v778
    %2941 = vmatpush.bf16.msra.mxu0 %v774
    %2942 = vmatmul.bf16.gmra.mxu0 %v2757
    %v2943 = vpop.f32.mrf.mxu0
    %v2944 = vadd.f32 0.0, %v2943
    %v2945 = vpop.f32.mrf.mxu0
    %2946 = vdwg.mxu0
    %2947 = vmatpush.bf16.msra.mxu0 %v803
    %2948 = vmatpush.bf16.msra.mxu0 %v799
    %2949 = vmatpush.bf16.msra.mxu0 %v795
    %2950 = vmatpush.bf16.msra.mxu0 %v791
    %2951 = vmatpush.bf16.msra.mxu0 %v787
    %2952 = vmatpush.bf16.msra.mxu0 %v783
    %2953 = vmatpush.bf16.msra.mxu0 %v779
    %2954 = vmatpush.bf16.msra.mxu0 %v775
    %2955 = vmatmul.bf16.gmra.mxu0 %v2757
    %v2956 = vpop.f32.mrf.mxu0
    %v2957 = vadd.f32 0.0, %v2956
    %v2958 = vpop.f32.mrf.mxu0
    %2959 = vdwg.mxu0
    %2960 = vmatpush.bf16.msra.mxu0 %v804
    %2961 = vmatpush.bf16.msra.mxu0 %v800
    %2962 = vmatpush.bf16.msra.mxu0 %v796
    %2963 = vmatpush.bf16.msra.mxu0 %v792
    %2964 = vmatpush.bf16.msra.mxu0 %v788
    %2965 = vmatpush.bf16.msra.mxu0 %v784
    %2966 = vmatpush.bf16.msra.mxu0 %v780
    %2967 = vmatpush.bf16.msra.mxu0 %v776
    %2968 = vmatmul.bf16.gmra.mxu0 %v2757
    %v2969 = vpop.f32.mrf.mxu0
    %v2970 = vadd.f32 0.0, %v2969
    %v2971 = vpop.f32.mrf.mxu0
    %2972 = vdwg.mxu0
    %2973 = vmatpush.bf16.msra.mxu0 %v805
    %2974 = vmatpush.bf16.msra.mxu0 %v801
    %2975 = vmatpush.bf16.msra.mxu0 %v797
    %2976 = vmatpush.bf16.msra.mxu0 %v793
    %2977 = vmatpush.bf16.msra.mxu0 %v789
    %2978 = vmatpush.bf16.msra.mxu0 %v785
    %2979 = vmatpush.bf16.msra.mxu0 %v781
    %2980 = vmatpush.bf16.msra.mxu0 %v777
    %2981 = vmatmul.bf16.gmra.mxu0 %v2757
    %v2982 = vpop.f32.mrf.mxu0
    %v2983 = vadd.f32 0.0, %v2982
    %v2984 = vpop.f32.mrf.mxu0
    %2985 = vdwg.mxu0
    %v2986 = vadd.f32 %v2930, %v2944
    %v2987 = vadd.f32 %v2931, %v2957
    %v2988 = vadd.f32 %v2932, %v2970
    %v2989 = vadd.f32 %v2933, %v2983
    %v2990 = vxor.u32 %v2986, 2147483648
    %v2991 = vmul.f32 %v2990, 1.442695
    %v2992 = vpow.pop %v2991
    %v2993 = vadd.f32 %v2992, 1.0
    %v2994 = vrcp.pop %v2993
    %v2995 = vmul.f32 %v2993, %v2994
    %v2996 = vsub.f32 1.0, %v2995
    %v2997 = vmul.f32 %v2994, %v2996
    %v2998 = vadd.f32 %v2994, %v2997
    %vm2999 = vweird.f32 %v2993
    %vm3000 = vweird.f32 %v2994
    %vm3001 = vmor %vm2999, %vm3000
    %v3002 = vsel %vm3001, %v2994, %v2998
    %v3003 = vand.u32 2147483647, %v2993
    %vm3004 = vcmp.eq.f32.partialorder %v3003, 8.507059e+37
    %v3005 = vand.u32 %v2993, 2147483648
    %v3006 = vor.u32 1.1754944e-38, %v3005
    %v3007 = vsel %vm3004, %v3006, %v3002
    %v3008 = vmul.f32 1.0, %v3007
    %v3009 = vxor.u32 %v2987, 2147483648
    %v3010 = vmul.f32 %v3009, 1.442695
    %v3011 = vpow.pop %v3010
    %v3012 = vadd.f32 %v3011, 1.0
    %v3013 = vrcp.pop %v3012
    %v3014 = vmul.f32 %v3012, %v3013
    %v3015 = vsub.f32 1.0, %v3014
    %v3016 = vmul.f32 %v3013, %v3015
    %v3017 = vadd.f32 %v3013, %v3016
    %vm3018 = vweird.f32 %v3012
    %vm3019 = vweird.f32 %v3013
    %vm3020 = vmor %vm3018, %vm3019
    %v3021 = vsel %vm3020, %v3013, %v3017
    %v3022 = vand.u32 2147483647, %v3012
    %vm3023 = vcmp.eq.f32.partialorder %v3022, 8.507059e+37
    %v3024 = vand.u32 %v3012, 2147483648
    %v3025 = vor.u32 1.1754944e-38, %v3024
    %v3026 = vsel %vm3023, %v3025, %v3021
    %v3027 = vmul.f32 1.0, %v3026
    %v3028 = vtanh.pop %v2988
    %v3029 = vxor.u32 %v2989, 2147483648
    %v3030 = vmul.f32 %v3029, 1.442695
    %v3031 = vpow.pop %v3030
    %v3032 = vadd.f32 %v3031, 1.0
    %v3033 = vrcp.pop %v3032
    %v3034 = vmul.f32 %v3032, %v3033
    %v3035 = vsub.f32 1.0, %v3034
    %v3036 = vmul.f32 %v3033, %v3035
    %v3037 = vadd.f32 %v3033, %v3036
    %vm3038 = vweird.f32 %v3032
    %vm3039 = vweird.f32 %v3033
    %vm3040 = vmor %vm3038, %vm3039
    %v3041 = vsel %vm3040, %v3033, %v3037
    %v3042 = vand.u32 2147483647, %v3032
    %vm3043 = vcmp.eq.f32.partialorder %v3042, 8.507059e+37
    %v3044 = vand.u32 %v3032, 2147483648
    %v3045 = vor.u32 1.1754944e-38, %v3044
    %v3046 = vsel %vm3043, %v3045, %v3041
    %v3047 = vmul.f32 1.0, %v3046
    %v3048 = vmul.f32 %v3027, %v2754
    %v3049 = vmul.f32 %v3008, %v3028
    %v3050 = vadd.f32 %v3048, %v3049
    %v3051 = vtanh.pop %v3050
    %v3052 = vmul.f32 %v3047, %v3051
    %v3053 = vpack.c.bf16 %v3052, %v3052
    %3054 = vmatpush.bf16.msra.mxu0 %v1082
    %3055 = vmatpush.bf16.msra.mxu0 %v1078
    %3056 = vmatpush.bf16.msra.mxu0 %v1074
    %3057 = vmatpush.bf16.msra.mxu0 %v1070
    %3058 = vmatpush.bf16.msra.mxu0 %v1066
    %3059 = vmatpush.bf16.msra.mxu0 %v1062
    %3060 = vmatpush.bf16.msra.mxu0 %v1058
    %3061 = vmatpush.bf16.msra.mxu0 %v1054
    %3062 = vmatmul.bf16.gmra.mxu0 %v2929
    %v3063 = vpop.f32.mrf.mxu0
    %v3064 = vadd.f32 0.0, %v3063
    %v3065 = vpop.f32.mrf.mxu0
    %3066 = vdwg.mxu0
    %3067 = vmatpush.bf16.msra.mxu0 %v1083
    %3068 = vmatpush.bf16.msra.mxu0 %v1079
    %3069 = vmatpush.bf16.msra.mxu0 %v1075
    %3070 = vmatpush.bf16.msra.mxu0 %v1071
    %3071 = vmatpush.bf16.msra.mxu0 %v1067
    %3072 = vmatpush.bf16.msra.mxu0 %v1063
    %3073 = vmatpush.bf16.msra.mxu0 %v1059
    %3074 = vmatpush.bf16.msra.mxu0 %v1055
    %3075 = vmatmul.bf16.gmra.mxu0 %v2929
    %v3076 = vpop.f32.mrf.mxu0
    %v3077 = vadd.f32 0.0, %v3076
    %v3078 = vpop.f32.mrf.mxu0
    %3079 = vdwg.mxu0
    %3080 = vmatpush.bf16.msra.mxu0 %v1084
    %3081 = vmatpush.bf16.msra.mxu0 %v1080
    %3082 = vmatpush.bf16.msra.mxu0 %v1076
    %3083 = vmatpush.bf16.msra.mxu0 %v1072
    %3084 = vmatpush.bf16.msra.mxu0 %v1068
    %3085 = vmatpush.bf16.msra.mxu0 %v1064
    %3086 = vmatpush.bf16.msra.mxu0 %v1060
    %3087 = vmatpush.bf16.msra.mxu0 %v1056
    %3088 = vmatmul.bf16.gmra.mxu0 %v2929
    %v3089 = vpop.f32.mrf.mxu0
    %v3090 = vadd.f32 0.0, %v3089
    %v3091 = vpop.f32.mrf.mxu0
    %3092 = vdwg.mxu0
    %3093 = vmatpush.bf16.msra.mxu0 %v1085
    %3094 = vmatpush.bf16.msra.mxu0 %v1081
    %3095 = vmatpush.bf16.msra.mxu0 %v1077
    %3096 = vmatpush.bf16.msra.mxu0 %v1073
    %3097 = vmatpush.bf16.msra.mxu0 %v1069
    %3098 = vmatpush.bf16.msra.mxu0 %v1065
    %3099 = vmatpush.bf16.msra.mxu0 %v1061
    %3100 = vmatpush.bf16.msra.mxu0 %v1057
    %3101 = vmatmul.bf16.gmra.mxu0 %v2929
    %v3102 = vpop.f32.mrf.mxu0
    %v3103 = vadd.f32 0.0, %v3102
    %v3104 = vpop.f32.mrf.mxu0
    %3105 = vdwg.mxu0
    %3106 = vmatpush.bf16.msra.mxu0 %v1294
    %3107 = vmatpush.bf16.msra.mxu0 %v1290
    %3108 = vmatpush.bf16.msra.mxu0 %v1286
    %3109 = vmatpush.bf16.msra.mxu0 %v1282
    %3110 = vmatpush.bf16.msra.mxu0 %v1278
    %3111 = vmatpush.bf16.msra.mxu0 %v1274
    %3112 = vmatpush.bf16.msra.mxu0 %v1270
    %3113 = vmatpush.bf16.msra.mxu0 %v1266
    %3114 = vmatmul.bf16.gmra.mxu0 %v3053
    %v3115 = vpop.f32.mrf.mxu0
    %v3116 = vadd.f32 %v3064, %v3115
    %v3117 = vpop.f32.mrf.mxu0
    %3118 = vdwg.mxu0
    %3119 = vmatpush.bf16.msra.mxu0 %v1295
    %3120 = vmatpush.bf16.msra.mxu0 %v1291
    %3121 = vmatpush.bf16.msra.mxu0 %v1287
    %3122 = vmatpush.bf16.msra.mxu0 %v1283
    %3123 = vmatpush.bf16.msra.mxu0 %v1279
    %3124 = vmatpush.bf16.msra.mxu0 %v1275
    %3125 = vmatpush.bf16.msra.mxu0 %v1271
    %3126 = vmatpush.bf16.msra.mxu0 %v1267
    %3127 = vmatmul.bf16.gmra.mxu0 %v3053
    %v3128 = vpop.f32.mrf.mxu0
    %v3129 = vadd.f32 %v3077, %v3128
    %v3130 = vpop.f32.mrf.mxu0
    %3131 = vdwg.mxu0
    %3132 = vmatpush.bf16.msra.mxu0 %v1296
    %3133 = vmatpush.bf16.msra.mxu0 %v1292
    %3134 = vmatpush.bf16.msra.mxu0 %v1288
    %3135 = vmatpush.bf16.msra.mxu0 %v1284
    %3136 = vmatpush.bf16.msra.mxu0 %v1280
    %3137 = vmatpush.bf16.msra.mxu0 %v1276
    %3138 = vmatpush.bf16.msra.mxu0 %v1272
    %3139 = vmatpush.bf16.msra.mxu0 %v1268
    %3140 = vmatmul.bf16.gmra.mxu0 %v3053
    %v3141 = vpop.f32.mrf.mxu0
    %v3142 = vadd.f32 %v3090, %v3141
    %v3143 = vpop.f32.mrf.mxu0
    %3144 = vdwg.mxu0
    %3145 = vmatpush.bf16.msra.mxu0 %v1297
    %3146 = vmatpush.bf16.msra.mxu0 %v1293
    %3147 = vmatpush.bf16.msra.mxu0 %v1289
    %3148 = vmatpush.bf16.msra.mxu0 %v1285
    %3149 = vmatpush.bf16.msra.mxu0 %v1281
    %3150 = vmatpush.bf16.msra.mxu0 %v1277
    %3151 = vmatpush.bf16.msra.mxu0 %v1273
    %3152 = vmatpush.bf16.msra.mxu0 %v1269
    %3153 = vmatmul.bf16.gmra.mxu0 %v3053
    %v3154 = vpop.f32.mrf.mxu0
    %v3155 = vadd.f32 %v3103, %v3154
    %v3156 = vpop.f32.mrf.mxu0
    %3157 = vdwg.mxu0
    %v3158 = vadd.f32 %v3116, %v554
    %v3159 = vadd.f32 %v3129, %v555
    %v3160 = vadd.f32 %v3142, %v556
    %v3161 = vadd.f32 %v3155, %v557
    %v3162 = vxor.u32 %v3158, 2147483648
    %v3163 = vmul.f32 %v3162, 1.442695
    %v3164 = vpow.pop %v3163
    %v3165 = vadd.f32 %v3164, 1.0
    %v3166 = vrcp.pop %v3165
    %v3167 = vmul.f32 %v3165, %v3166
    %v3168 = vsub.f32 1.0, %v3167
    %v3169 = vmul.f32 %v3166, %v3168
    %v3170 = vadd.f32 %v3166, %v3169
    %vm3171 = vweird.f32 %v3165
    %vm3172 = vweird.f32 %v3166
    %vm3173 = vmor %vm3171, %vm3172
    %v3174 = vsel %vm3173, %v3166, %v3170
    %v3175 = vand.u32 2147483647, %v3165
    %vm3176 = vcmp.eq.f32.partialorder %v3175, 8.507059e+37
    %v3177 = vand.u32 %v3165, 2147483648
    %v3178 = vor.u32 1.1754944e-38, %v3177
    %v3179 = vsel %vm3176, %v3178, %v3174
    %v3180 = vmul.f32 1.0, %v3179
    %v3181 = vxor.u32 %v3159, 2147483648
    %v3182 = vmul.f32 %v3181, 1.442695
    %v3183 = vpow.pop %v3182
    %v3184 = vadd.f32 %v3183, 1.0
    %v3185 = vrcp.pop %v3184
    %v3186 = vmul.f32 %v3184, %v3185
    %v3187 = vsub.f32 1.0, %v3186
    %v3188 = vmul.f32 %v3185, %v3187
    %v3189 = vadd.f32 %v3185, %v3188
    %vm3190 = vweird.f32 %v3184
    %vm3191 = vweird.f32 %v3185
    %vm3192 = vmor %vm3190, %vm3191
    %v3193 = vsel %vm3192, %v3185, %v3189
    %v3194 = vand.u32 2147483647, %v3184
    %vm3195 = vcmp.eq.f32.partialorder %v3194, 8.507059e+37
    %v3196 = vand.u32 %v3184, 2147483648
    %v3197 = vor.u32 1.1754944e-38, %v3196
    %v3198 = vsel %vm3195, %v3197, %v3193
    %v3199 = vmul.f32 1.0, %v3198
    %v3200 = vtanh.pop %v3160
    %v3201 = vxor.u32 %v3161, 2147483648
    %v3202 = vmul.f32 %v3201, 1.442695
    %v3203 = vpow.pop %v3202
    %v3204 = vadd.f32 %v3203, 1.0
    %v3205 = vrcp.pop %v3204
    %v3206 = vmul.f32 %v3204, %v3205
    %v3207 = vsub.f32 1.0, %v3206
    %v3208 = vmul.f32 %v3205, %v3207
    %v3209 = vadd.f32 %v3205, %v3208
    %vm3210 = vweird.f32 %v3204
    %vm3211 = vweird.f32 %v3205
    %vm3212 = vmor %vm3210, %vm3211
    %v3213 = vsel %vm3212, %v3205, %v3209
    %v3214 = vand.u32 2147483647, %v3204
    %vm3215 = vcmp.eq.f32.partialorder %v3214, 8.507059e+37
    %v3216 = vand.u32 %v3204, 2147483648
    %v3217 = vor.u32 1.1754944e-38, %v3216
    %v3218 = vsel %vm3215, %v3217, %v3213
    %v3219 = vmul.f32 1.0, %v3218
    %v3220 = vmul.f32 %v3199, %v2926
    %v3221 = vmul.f32 %v3180, %v3200
    %v3222 = vadd.f32 %v3220, %v3221
    %v3223 = vtanh.pop %v3222
    %v3224 = vmul.f32 %v3219, %v3223
    %v3225 = vpack.c.bf16 %v3224, %v3224
    %v3226 = vld [vmem:[#allocation2 + $0xe0] sm:$0xff]
    %v3227 = vld [vmem:[#allocation2 + $0xe8] sm:$0xff]
    %v3228 = vld [vmem:[#allocation2 + $0xf0] sm:$0xff]
    %v3229 = vld [vmem:[#allocation2 + $0xf8] sm:$0xff]
    %3230 = vmatpush.bf16.msra.mxu0 %v802
    %3231 = vmatpush.bf16.msra.mxu0 %v798
    %3232 = vmatpush.bf16.msra.mxu0 %v794
    %3233 = vmatpush.bf16.msra.mxu0 %v790
    %3234 = vmatpush.bf16.msra.mxu0 %v786
    %3235 = vmatpush.bf16.msra.mxu0 %v782
    %3236 = vmatpush.bf16.msra.mxu0 %v778
    %3237 = vmatpush.bf16.msra.mxu0 %v774
    %3238 = vmatmul.bf16.gmra.mxu0 %v3053
    %v3239 = vpop.f32.mrf.mxu0
    %v3240 = vadd.f32 0.0, %v3239
    %v3241 = vpop.f32.mrf.mxu0
    %3242 = vdwg.mxu0
    %3243 = vmatpush.bf16.msra.mxu0 %v803
    %3244 = vmatpush.bf16.msra.mxu0 %v799
    %3245 = vmatpush.bf16.msra.mxu0 %v795
    %3246 = vmatpush.bf16.msra.mxu0 %v791
    %3247 = vmatpush.bf16.msra.mxu0 %v787
    %3248 = vmatpush.bf16.msra.mxu0 %v783
    %3249 = vmatpush.bf16.msra.mxu0 %v779
    %3250 = vmatpush.bf16.msra.mxu0 %v775
    %3251 = vmatmul.bf16.gmra.mxu0 %v3053
    %v3252 = vpop.f32.mrf.mxu0
    %v3253 = vadd.f32 0.0, %v3252
    %v3254 = vpop.f32.mrf.mxu0
    %3255 = vdwg.mxu0
    %3256 = vmatpush.bf16.msra.mxu0 %v804
    %3257 = vmatpush.bf16.msra.mxu0 %v800
    %3258 = vmatpush.bf16.msra.mxu0 %v796
    %3259 = vmatpush.bf16.msra.mxu0 %v792
    %3260 = vmatpush.bf16.msra.mxu0 %v788
    %3261 = vmatpush.bf16.msra.mxu0 %v784
    %3262 = vmatpush.bf16.msra.mxu0 %v780
    %3263 = vmatpush.bf16.msra.mxu0 %v776
    %3264 = vmatmul.bf16.gmra.mxu0 %v3053
    %v3265 = vpop.f32.mrf.mxu0
    %v3266 = vadd.f32 0.0, %v3265
    %v3267 = vpop.f32.mrf.mxu0
    %3268 = vdwg.mxu0
    %3269 = vmatpush.bf16.msra.mxu0 %v805
    %3270 = vmatpush.bf16.msra.mxu0 %v801
    %3271 = vmatpush.bf16.msra.mxu0 %v797
    %3272 = vmatpush.bf16.msra.mxu0 %v793
    %3273 = vmatpush.bf16.msra.mxu0 %v789
    %3274 = vmatpush.bf16.msra.mxu0 %v785
    %3275 = vmatpush.bf16.msra.mxu0 %v781
    %3276 = vmatpush.bf16.msra.mxu0 %v777
    %3277 = vmatmul.bf16.gmra.mxu0 %v3053
    %v3278 = vpop.f32.mrf.mxu0
    %v3279 = vadd.f32 0.0, %v3278
    %v3280 = vpop.f32.mrf.mxu0
    %3281 = vdwg.mxu0
    %v3282 = vadd.f32 %v3226, %v3240
    %v3283 = vadd.f32 %v3227, %v3253
    %v3284 = vadd.f32 %v3228, %v3266
    %v3285 = vadd.f32 %v3229, %v3279
    %v3286 = vxor.u32 %v3282, 2147483648
    %v3287 = vmul.f32 %v3286, 1.442695
    %v3288 = vpow.pop %v3287
    %v3289 = vadd.f32 %v3288, 1.0
    %v3290 = vrcp.pop %v3289
    %v3291 = vmul.f32 %v3289, %v3290
    %v3292 = vsub.f32 1.0, %v3291
    %v3293 = vmul.f32 %v3290, %v3292
    %v3294 = vadd.f32 %v3290, %v3293
    %vm3295 = vweird.f32 %v3289
    %vm3296 = vweird.f32 %v3290
    %vm3297 = vmor %vm3295, %vm3296
    %v3298 = vsel %vm3297, %v3290, %v3294
    %v3299 = vand.u32 2147483647, %v3289
    %vm3300 = vcmp.eq.f32.partialorder %v3299, 8.507059e+37
    %v3301 = vand.u32 %v3289, 2147483648
    %v3302 = vor.u32 1.1754944e-38, %v3301
    %v3303 = vsel %vm3300, %v3302, %v3298
    %v3304 = vmul.f32 1.0, %v3303
    %v3305 = vxor.u32 %v3283, 2147483648
    %v3306 = vmul.f32 %v3305, 1.442695
    %v3307 = vpow.pop %v3306
    %v3308 = vadd.f32 %v3307, 1.0
    %v3309 = vrcp.pop %v3308
    %v3310 = vmul.f32 %v3308, %v3309
    %v3311 = vsub.f32 1.0, %v3310
    %v3312 = vmul.f32 %v3309, %v3311
    %v3313 = vadd.f32 %v3309, %v3312
    %vm3314 = vweird.f32 %v3308
    %vm3315 = vweird.f32 %v3309
    %vm3316 = vmor %vm3314, %vm3315
    %v3317 = vsel %vm3316, %v3309, %v3313
    %v3318 = vand.u32 2147483647, %v3308
    %vm3319 = vcmp.eq.f32.partialorder %v3318, 8.507059e+37
    %v3320 = vand.u32 %v3308, 2147483648
    %v3321 = vor.u32 1.1754944e-38, %v3320
    %v3322 = vsel %vm3319, %v3321, %v3317
    %v3323 = vmul.f32 1.0, %v3322
    %v3324 = vtanh.pop %v3284
    %v3325 = vxor.u32 %v3285, 2147483648
    %v3326 = vmul.f32 %v3325, 1.442695
    %v3327 = vpow.pop %v3326
    %v3328 = vadd.f32 %v3327, 1.0
    %v3329 = vrcp.pop %v3328
    %v3330 = vmul.f32 %v3328, %v3329
    %v3331 = vsub.f32 1.0, %v3330
    %v3332 = vmul.f32 %v3329, %v3331
    %v3333 = vadd.f32 %v3329, %v3332
    %vm3334 = vweird.f32 %v3328
    %vm3335 = vweird.f32 %v3329
    %vm3336 = vmor %vm3334, %vm3335
    %v3337 = vsel %vm3336, %v3329, %v3333
    %v3338 = vand.u32 2147483647, %v3328
    %vm3339 = vcmp.eq.f32.partialorder %v3338, 8.507059e+37
    %v3340 = vand.u32 %v3328, 2147483648
    %v3341 = vor.u32 1.1754944e-38, %v3340
    %v3342 = vsel %vm3339, %v3341, %v3337
    %v3343 = vmul.f32 1.0, %v3342
    %v3344 = vmul.f32 %v3323, %v3050
    %v3345 = vmul.f32 %v3304, %v3324
    %v3346 = vadd.f32 %v3344, %v3345
    %v3347 = vtanh.pop %v3346
    %v3348 = vmul.f32 %v3343, %v3347
    %v3349 = vpack.c.bf16 %v3348, %v3348
    %3350 = vmatpush.bf16.msra.mxu0 %v1082
    %3351 = vmatpush.bf16.msra.mxu0 %v1078
    %3352 = vmatpush.bf16.msra.mxu0 %v1074
    %3353 = vmatpush.bf16.msra.mxu0 %v1070
    %3354 = vmatpush.bf16.msra.mxu0 %v1066
    %3355 = vmatpush.bf16.msra.mxu0 %v1062
    %3356 = vmatpush.bf16.msra.mxu0 %v1058
    %3357 = vmatpush.bf16.msra.mxu0 %v1054
    %3358 = vmatmul.bf16.gmra.mxu0 %v3225
    %v3359 = vpop.f32.mrf.mxu0
    %v3360 = vadd.f32 0.0, %v3359
    %v3361 = vpop.f32.mrf.mxu0
    %3362 = vdwg.mxu0
    %3363 = vmatpush.bf16.msra.mxu0 %v1083
    %3364 = vmatpush.bf16.msra.mxu0 %v1079
    %3365 = vmatpush.bf16.msra.mxu0 %v1075
    %3366 = vmatpush.bf16.msra.mxu0 %v1071
    %3367 = vmatpush.bf16.msra.mxu0 %v1067
    %3368 = vmatpush.bf16.msra.mxu0 %v1063
    %3369 = vmatpush.bf16.msra.mxu0 %v1059
    %3370 = vmatpush.bf16.msra.mxu0 %v1055
    %3371 = vmatmul.bf16.gmra.mxu0 %v3225
    %v3372 = vpop.f32.mrf.mxu0
    %v3373 = vadd.f32 0.0, %v3372
    %v3374 = vpop.f32.mrf.mxu0
    %3375 = vdwg.mxu0
    %3376 = vmatpush.bf16.msra.mxu0 %v1084
    %3377 = vmatpush.bf16.msra.mxu0 %v1080
    %3378 = vmatpush.bf16.msra.mxu0 %v1076
    %3379 = vmatpush.bf16.msra.mxu0 %v1072
    %3380 = vmatpush.bf16.msra.mxu0 %v1068
    %3381 = vmatpush.bf16.msra.mxu0 %v1064
    %3382 = vmatpush.bf16.msra.mxu0 %v1060
    %3383 = vmatpush.bf16.msra.mxu0 %v1056
    %3384 = vmatmul.bf16.gmra.mxu0 %v3225
    %v3385 = vpop.f32.mrf.mxu0
    %v3386 = vadd.f32 0.0, %v3385
    %v3387 = vpop.f32.mrf.mxu0
    %3388 = vdwg.mxu0
    %3389 = vmatpush.bf16.msra.mxu0 %v1085
    %3390 = vmatpush.bf16.msra.mxu0 %v1081
    %3391 = vmatpush.bf16.msra.mxu0 %v1077
    %3392 = vmatpush.bf16.msra.mxu0 %v1073
    %3393 = vmatpush.bf16.msra.mxu0 %v1069
    %3394 = vmatpush.bf16.msra.mxu0 %v1065
    %3395 = vmatpush.bf16.msra.mxu0 %v1061
    %3396 = vmatpush.bf16.msra.mxu0 %v1057
    %3397 = vmatmul.bf16.gmra.mxu0 %v3225
    %v3398 = vpop.f32.mrf.mxu0
    %v3399 = vadd.f32 0.0, %v3398
    %v3400 = vpop.f32.mrf.mxu0
    %3401 = vdwg.mxu0
    %3402 = vmatpush.bf16.msra.mxu0 %v1294
    %3403 = vmatpush.bf16.msra.mxu0 %v1290
    %3404 = vmatpush.bf16.msra.mxu0 %v1286
    %3405 = vmatpush.bf16.msra.mxu0 %v1282
    %3406 = vmatpush.bf16.msra.mxu0 %v1278
    %3407 = vmatpush.bf16.msra.mxu0 %v1274
    %3408 = vmatpush.bf16.msra.mxu0 %v1270
    %3409 = vmatpush.bf16.msra.mxu0 %v1266
    %3410 = vmatmul.bf16.gmra.mxu0 %v3349
    %v3411 = vpop.f32.mrf.mxu0
    %v3412 = vadd.f32 %v3360, %v3411
    %v3413 = vpop.f32.mrf.mxu0
    %3414 = vdwg.mxu0
    %3415 = vmatpush.bf16.msra.mxu0 %v1295
    %3416 = vmatpush.bf16.msra.mxu0 %v1291
    %3417 = vmatpush.bf16.msra.mxu0 %v1287
    %3418 = vmatpush.bf16.msra.mxu0 %v1283
    %3419 = vmatpush.bf16.msra.mxu0 %v1279
    %3420 = vmatpush.bf16.msra.mxu0 %v1275
    %3421 = vmatpush.bf16.msra.mxu0 %v1271
    %3422 = vmatpush.bf16.msra.mxu0 %v1267
    %3423 = vmatmul.bf16.gmra.mxu0 %v3349
    %v3424 = vpop.f32.mrf.mxu0
    %v3425 = vadd.f32 %v3373, %v3424
    %v3426 = vpop.f32.mrf.mxu0
    %3427 = vdwg.mxu0
    %3428 = vmatpush.bf16.msra.mxu0 %v1296
    %3429 = vmatpush.bf16.msra.mxu0 %v1292
    %3430 = vmatpush.bf16.msra.mxu0 %v1288
    %3431 = vmatpush.bf16.msra.mxu0 %v1284
    %3432 = vmatpush.bf16.msra.mxu0 %v1280
    %3433 = vmatpush.bf16.msra.mxu0 %v1276
    %3434 = vmatpush.bf16.msra.mxu0 %v1272
    %3435 = vmatpush.bf16.msra.mxu0 %v1268
    %3436 = vmatmul.bf16.gmra.mxu0 %v3349
    %v3437 = vpop.f32.mrf.mxu0
    %v3438 = vadd.f32 %v3386, %v3437
    %v3439 = vpop.f32.mrf.mxu0
    %3440 = vdwg.mxu0
    %3441 = vmatpush.bf16.msra.mxu0 %v1297
    %3442 = vmatpush.bf16.msra.mxu0 %v1293
    %3443 = vmatpush.bf16.msra.mxu0 %v1289
    %3444 = vmatpush.bf16.msra.mxu0 %v1285
    %3445 = vmatpush.bf16.msra.mxu0 %v1281
    %3446 = vmatpush.bf16.msra.mxu0 %v1277
    %3447 = vmatpush.bf16.msra.mxu0 %v1273
    %3448 = vmatpush.bf16.msra.mxu0 %v1269
    %3449 = vmatmul.bf16.gmra.mxu0 %v3349
    %v3450 = vpop.f32.mrf.mxu0
    %v3451 = vadd.f32 %v3399, %v3450
    %v3452 = vpop.f32.mrf.mxu0
    %3453 = vdwg.mxu0
    %v3454 = vadd.f32 %v3412, %v554
    %v3455 = vadd.f32 %v3425, %v555
    %v3456 = vadd.f32 %v3438, %v556
    %v3457 = vadd.f32 %v3451, %v557
    %v3458 = vxor.u32 %v3454, 2147483648
    %v3459 = vmul.f32 %v3458, 1.442695
    %v3460 = vpow.pop %v3459
    %v3461 = vadd.f32 %v3460, 1.0
    %v3462 = vrcp.pop %v3461
    %v3463 = vmul.f32 %v3461, %v3462
    %v3464 = vsub.f32 1.0, %v3463
    %v3465 = vmul.f32 %v3462, %v3464
    %v3466 = vadd.f32 %v3462, %v3465
    %vm3467 = vweird.f32 %v3461
    %vm3468 = vweird.f32 %v3462
    %vm3469 = vmor %vm3467, %vm3468
    %v3470 = vsel %vm3469, %v3462, %v3466
    %v3471 = vand.u32 2147483647, %v3461
    %vm3472 = vcmp.eq.f32.partialorder %v3471, 8.507059e+37
    %v3473 = vand.u32 %v3461, 2147483648
    %v3474 = vor.u32 1.1754944e-38, %v3473
    %v3475 = vsel %vm3472, %v3474, %v3470
    %v3476 = vmul.f32 1.0, %v3475
    %v3477 = vxor.u32 %v3455, 2147483648
    %v3478 = vmul.f32 %v3477, 1.442695
    %v3479 = vpow.pop %v3478
    %v3480 = vadd.f32 %v3479, 1.0
    %v3481 = vrcp.pop %v3480
    %v3482 = vmul.f32 %v3480, %v3481
    %v3483 = vsub.f32 1.0, %v3482
    %v3484 = vmul.f32 %v3481, %v3483
    %v3485 = vadd.f32 %v3481, %v3484
    %vm3486 = vweird.f32 %v3480
    %vm3487 = vweird.f32 %v3481
    %vm3488 = vmor %vm3486, %vm3487
    %v3489 = vsel %vm3488, %v3481, %v3485
    %v3490 = vand.u32 2147483647, %v3480
    %vm3491 = vcmp.eq.f32.partialorder %v3490, 8.507059e+37
    %v3492 = vand.u32 %v3480, 2147483648
    %v3493 = vor.u32 1.1754944e-38, %v3492
    %v3494 = vsel %vm3491, %v3493, %v3489
    %v3495 = vmul.f32 1.0, %v3494
    %v3496 = vtanh.pop %v3456
    %v3497 = vxor.u32 %v3457, 2147483648
    %v3498 = vmul.f32 %v3497, 1.442695
    %v3499 = vpow.pop %v3498
    %v3500 = vadd.f32 %v3499, 1.0
    %v3501 = vrcp.pop %v3500
    %v3502 = vmul.f32 %v3500, %v3501
    %v3503 = vsub.f32 1.0, %v3502
    %v3504 = vmul.f32 %v3501, %v3503
    %v3505 = vadd.f32 %v3501, %v3504
    %vm3506 = vweird.f32 %v3500
    %vm3507 = vweird.f32 %v3501
    %vm3508 = vmor %vm3506, %vm3507
    %v3509 = vsel %vm3508, %v3501, %v3505
    %v3510 = vand.u32 2147483647, %v3500
    %vm3511 = vcmp.eq.f32.partialorder %v3510, 8.507059e+37
    %v3512 = vand.u32 %v3500, 2147483648
    %v3513 = vor.u32 1.1754944e-38, %v3512
    %v3514 = vsel %vm3511, %v3513, %v3509
    %v3515 = vmul.f32 1.0, %v3514
    %v3516 = vmul.f32 %v3495, %v3222
    %v3517 = vmul.f32 %v3476, %v3496
    %v3518 = vadd.f32 %v3516, %v3517
    %v3519 = vtanh.pop %v3518
    %v3520 = vmul.f32 %v3515, %v3519
    %v3521 = vld [vmem:[#allocation16] sm:$0xff]
    %v3522 = vld [vmem:[#allocation16 + $0x8] sm:$0xff]
    %v3523 = vld [vmem:[#allocation16 + $0x10] sm:$0xff]
    %v3524 = vld [vmem:[#allocation16 + $0x18] sm:$0xff]
    %v3525 = vld [vmem:[#allocation16 + $0x20] sm:$0xff]
    %v3526 = vld [vmem:[#allocation16 + $0x28] sm:$0xff]
    %v3527 = vld [vmem:[#allocation16 + $0x30] sm:$0xff]
    %v3528 = vld [vmem:[#allocation16 + $0x38] sm:$0xff]
    %v3529 = vld [vmem:[#allocation16 + $0x40] sm:$0xff]
    %v3530 = vld [vmem:[#allocation16 + $0x48] sm:$0xff]
    %v3531 = vld [vmem:[#allocation16 + $0x50] sm:$0xff]
    %v3532 = vld [vmem:[#allocation16 + $0x58] sm:$0xff]
    %v3533 = vld [vmem:[#allocation16 + $0x60] sm:$0xff]
    %v3534 = vld [vmem:[#allocation16 + $0x68] sm:$0xff]
    %v3535 = vld [vmem:[#allocation16 + $0x70] sm:$0xff]
    %v3536 = vld [vmem:[#allocation16 + $0x78] sm:$0xff]
    %v3537 = vld [vmem:[%s10] sm:$0x1]
    %v3539 = vperm.slane %v3537, 0
    %3541 = vmatpush.msra.mxu0 %v3536
    %3542 = vmatpush.msra.mxu0 %v3535
    %3543 = vmatpush.msra.mxu0 %v3534
    %3544 = vmatpush.msra.mxu0 %v3533
    %3545 = vmatpush.msra.mxu0 %v3532
    %3546 = vmatpush.msra.mxu0 %v3531
    %3547 = vmatpush.msra.mxu0 %v3530
    %3548 = vmatpush.msra.mxu0 %v3529
    %3549 = vmatpush.msra.mxu0 %v3528
    %3550 = vmatpush.msra.mxu0 %v3527
    %3551 = vmatpush.msra.mxu0 %v3526
    %3552 = vmatpush.msra.mxu0 %v3525
    %3553 = vmatpush.msra.mxu0 %v3524
    %3554 = vmatpush.msra.mxu0 %v3523
    %3555 = vmatpush.msra.mxu0 %v3522
    %3556 = vmatpush.msra.mxu0 %v3521
    %3557 = vmatmul.f32.gmra.mxu0 %v3520
    %v3558 = vpop.f32.mrf.mxu0
    %v3559 = vadd.f32 %v3539, %v3558
    %3560 = vdwg.mxu0
    %v3561 = vxor.u32 %v3559, 2147483648
    %v3562 = vmul.f32 %v3561, 1.442695
    %v3563 = vpow.pop %v3562
    %v3564 = vadd.f32 %v3563, 1.0
    %v3565 = vrcp.pop %v3564
    %v3566 = vmul.f32 %v3564, %v3565
    %v3567 = vsub.f32 1.0, %v3566
    %v3568 = vmul.f32 %v3565, %v3567
    %v3569 = vadd.f32 %v3565, %v3568
    %vm3570 = vweird.f32 %v3564
    %vm3571 = vweird.f32 %v3565
    %vm3572 = vmor %vm3570, %vm3571
    %v3573 = vsel %vm3572, %v3565, %v3569
    %v3574 = vand.u32 2147483647, %v3564
    %vm3575 = vcmp.eq.f32.partialorder %v3574, 8.507059e+37
    %v3576 = vand.u32 %v3564, 2147483648
    %v3577 = vor.u32 1.1754944e-38, %v3576
    %v3578 = vsel %vm3575, %v3577, %v3573
    %v3579 = vmul.f32 1.0, %v3578
    %3580 = vst [vmem:[#allocation18] sm:$0xff] %v3579
    %3581 = vst [vmem:[#allocation19] sm:$0xff] %v3348
    %s3582 = scalar_lea.vmem [#allocation19], 8
    %3583 = vst [vmem:[%s3582] sm:$0xff] %v3520
    %3584 = vst [vmem:[#allocation21] sm:$0xff] %v3346
    %s3585 = scalar_lea.vmem [#allocation21], 8
    %3586 = vst [vmem:[%s3585] sm:$0xff] %v3518
    // Predicated region
    $region70: #{tpu_custom_call.1} parent=1 // pred_check
      _
    $region71: #{tpu_custom_call.1} parent=1 // pred_check_branch
      %3588 = sbr.rel (0) target = $region73
    $region72: #{tpu_custom_call.1} parent=1 // pred_region
      %3590 = vsyncadd [#allocation9], 0
      %s3592 = sshll.u32 [#allocation18], 4
      %s3593 = int_to_ptr.vmem [resolvable:$true] %s3592
      %s3594 = sshll.u32 %s11, 4
      %s3595 = int_to_ptr.hbm [resolvable:$true] %s3594
      %3597 = dma.vmem_to_hbm [thread:$0]  %s3593, 128, %s3595, [#allocation9]
    $region73: #{tpu_custom_call.1} parent=1 // pred_fallthru
      _
    // Predicated region
    $region74: #{tpu_custom_call.1} parent=1 // pred_check
      _
    $region75: #{tpu_custom_call.1} parent=1 // pred_check_branch
      %3599 = sbr.rel (0) target = $region77
    $region76: #{tpu_custom_call.1} parent=1 // pred_region
      %3601 = vsyncadd [#allocation20], 0
      %s3602 = sshll.u32 [#allocation19], 4
      %s3603 = int_to_ptr.vmem [resolvable:$true] %s3602
      %s3604 = sshll.u32 %s12, 4
      %s3605 = int_to_ptr.hbm [resolvable:$true] %s3604
      %3610 = dma.vmem_to_hbm [thread:$0]  %s3603, 256, %s3605, [#allocation20], 128, 128, 8
    $region77: #{tpu_custom_call.1} parent=1 // pred_fallthru
      _
    // Predicated region
    $region78: #{tpu_custom_call.1} parent=1 // pred_check
      _
    $region79: #{tpu_custom_call.1} parent=1 // pred_check_branch
      %3612 = sbr.rel (0) target = $region81
    $region80: #{tpu_custom_call.1} parent=1 // pred_region
      %3614 = vsyncadd [#allocation20], 0
      %s3615 = sshll.u32 [#allocation21], 4
      %s3616 = int_to_ptr.vmem [resolvable:$true] %s3615
      %s3617 = sshll.u32 %s13, 4
      %s3618 = int_to_ptr.hbm [resolvable:$true] %s3617
      %3623 = dma.vmem_to_hbm [thread:$0]  %s3616, 256, %s3618, [#allocation20], 128, 128, 8
    $region81: #{tpu_custom_call.1} parent=1 // pred_fallthru
      _
    // Predicated region
    $region82: #{tpu_custom_call.1} parent=1 // pred_check
      _
    $region83: #{tpu_custom_call.1} parent=1 // pred_check_branch
      %3625 = sbr.rel (0) target = $region85
    $region84: #{tpu_custom_call.1} parent=1 // pred_region
      %3627 = dma.done [#allocation9], 128
    $region85: #{tpu_custom_call.1} parent=1 // pred_fallthru
      _
    // Predicated region
    $region86: #{tpu_custom_call.1} parent=1 // pred_check
      _
    $region87: #{tpu_custom_call.1} parent=1 // pred_check_branch
      %3629 = sbr.rel (0) target = $region89
    $region88: #{tpu_custom_call.1} parent=1 // pred_region
      %3631 = dma.done [#allocation20], 256
    $region89: #{tpu_custom_call.1} parent=1 // pred_fallthru
      _
    // Predicated region
    $region90: #{tpu_custom_call.1} parent=1 // pred_check
      _
    $region91: #{tpu_custom_call.1} parent=1 // pred_check_branch
      %3633 = sbr.rel (0) target = $region93
    $region92: #{tpu_custom_call.1} parent=1 // pred_region
      %3635 = dma.done [#allocation20], 256
    $region93: #{tpu_custom_call.1} parent=1 // pred_fallthru
      _
    %3636 = vsyncpa [#allocation8], 1
    %3637 = vsyncpa [#allocation11], 1
    %3638 = vsyncpa [#allocation14], 1
    %3639 = vsyncpa [#allocation17], 1
    %3640 = vsyncpa [#allocation9], 1
    %3641 = vsyncpa [#allocation20], 1
  %3642 = vsyncmov [#allocation6]
  %s3643 = vpop.sfrf %3642
  %p3644 = scmp.eq.s32.totalorder %s3643, 0
  %p3645 = pneg %p3644
  %3647 = shalt.err (%p3645)
  %s3648 = scalar_lea.sflag [#allocation6], 1
  %3649 = vsyncmov %s3648
  %s3650 = vpop.sfrf %3649
  %p3651 = scmp.eq.s32.totalorder %s3650, 0
  %p3652 = pneg %p3651
  %3654 = shalt.err (%p3652)
  %s3655 = scalar_lea.sflag [#allocation6], 2
  %3656 = vsyncmov %s3655
  %s3657 = vpop.sfrf %3656
  %p3658 = scmp.eq.s32.totalorder %s3657, 0
  %p3659 = pneg %p3658
  %3661 = shalt.err (%p3659)

</llo_original>
